<compile_context>
chip_gen: v5e
topology: v5e:2x2
jax: 0.10.0
libtpu: 0.0.40
codegen_flags: <defaults>
</compile_context>

<pallas_src>
import jax
import jax.numpy as jnp
from jax.experimental import pallas as pl
from jax.experimental.pallas import tpu as pltpu

H = 3                      # input_size == hidden_size
L = 5                      # stacked LSTM layers
G = 4 * H                  # fused gate width, kernel gate order [i, f, o, g]
GATE_PERM = (0, 1, 3, 2)   # PyTorch order [i, f, g, o] -> [i, f, o, g]


def _vpu_matmul(x, w, rows, cols):
    """x @ w as K broadcast multiply-adds on the VPU (exact f32, no MXU).

    x: (rows, K) value, w: (K, cols) value.  With K == 3 this is 3 madds over
    a couple of vregs -- cheaper than paying MXU fill/drain for a 3-wide
    contraction, and bit-exact f32 independent of matmul-precision defaults.
    """
    k_dim = x.shape[1]
    acc = x[:, 0:1] * jnp.broadcast_to(w[0:1, :], (rows, cols))
    for k in range(1, k_dim):
        acc = acc + x[:, k:k + 1] * jnp.broadcast_to(w[k:k + 1, :], (rows, cols))
    return acc


def net_kernel(x_ref, w_x_ref, w_h_ref, b_ref, w_lin_ref, b_lin_ref,
               out_ref, seq_ref):
    """Whole forward pass in one kernel invocation (everything stays in VMEM).

    x_ref    : (T*B, H)   time-major flattened input (rows t*B .. t*B+B-1 = step t)
    w_x_ref  : (L, H, G)  fused input-side weights (H_in, 4*H_out), gates [i,f,o,g]
    w_h_ref  : (L, H, G)  fused recurrent weights, same layout
    b_ref    : (L, 1, G)  combined bias b_ih + b_hh, same gate order
    w_lin_ref: (H, H)     linear weight, pre-transposed (H_in, H_out)
    b_lin_ref: (1, H)
    out_ref  : (B, H)
    seq_ref  : (T*B, H)   VMEM scratch: the current layer's input sequence
    """
    TB = x_ref.shape[0]
    B = out_ref.shape[0]
    T = TB // B

    # Seed scratch with the input sequence; each layer overwrites it in place.
    seq_ref[...] = x_ref[...]

    h = None
    for l in range(L):                           # static unroll over layers
        # Hoisted input-side projection over the whole sequence (off the
        # serial chain), combined bias folded in: (T*B, G).
        xg = _vpu_matmul(seq_ref[...], w_x_ref[l], TB, G) + b_ref[l]

        # Pre-broadcast recurrent weight rows to (B, G) tiles, once per layer
        # (broadcast_in_dim is not CSE'd -> keep it out of the time loop).
        w_h = w_h_ref[l]
        w_h_rows = [jnp.broadcast_to(w_h[k:k + 1, :], (B, G)) for k in range(H)]

        h = jnp.zeros((B, H), jnp.float32)
        c = jnp.zeros((B, H), jnp.float32)
        write_seq = l < L - 1                    # top layer: only final h used

        for t in range(T):                       # static unroll over time
            # Recurrent projection on the VPU: (B,H) @ (H,G) as H madds.
            gh = h[:, 0:1] * w_h_rows[0]
            for k in range(1, H):
                gh = gh + h[:, k:k + 1] * w_h_rows[k]
            gates = xg[t * B:(t + 1) * B, :] + gh            # (B, G)
            sig = jax.nn.sigmoid(gates[:, 0:3 * H])          # [ i | f | o ]
            g = jnp.tanh(gates[:, 3 * H:4 * H])              # [ g ]
            i = sig[:, 0:H]
            f = sig[:, H:2 * H]
            o = sig[:, 2 * H:3 * H]
            c = f * c + i * g
            h = o * jnp.tanh(c)
            if write_seq:
                seq_ref[t * B:(t + 1) * B, :] = h

    # Last timestep of the top LSTM layer comes straight from the carry.
    lin = _vpu_matmul(h, w_lin_ref[...], B, H) + b_lin_ref[...]
    x_last = x_ref[(T - 1) * B:T * B, :]                     # input at t = -1
    out_ref[...] = jnp.maximum((1.0 + lin) * x_last, 0.0)    # Block.forward


def _full_spec(shape):
    return pl.BlockSpec(shape, lambda: (0,) * len(shape))


def net_forward(x_input, params):
    """x_input: (B, T, H) float32, batch_first like the PyTorch module."""
    w_ih, w_hh, b_ih, b_hh, w_lin, b_lin = params
    B, T, _ = x_input.shape
    perm = jnp.asarray(GATE_PERM)

    # time-major, flattened to (T*B, H) so the kernel never reshapes
    x2d = jnp.transpose(x_input, (1, 0, 2)).reshape(T * B, H).astype(jnp.float32)

    def fuse(w):
        # (L, 4H, H_in) -> (L, H_in, 4H_out) with gate order [i, f, o, g]
        w4 = w.reshape(L, 4, H, H)[:, perm]                  # (L, 4, H_out, H_in)
        return jnp.transpose(w4, (0, 3, 1, 2)).reshape(L, H, G)

    w_x = fuse(w_ih.astype(jnp.float32))
    w_h = fuse(w_hh.astype(jnp.float32))
    b = (b_ih + b_hh).astype(jnp.float32).reshape(L, 4, H)[:, perm].reshape(L, 1, G)
    w_lin_t = w_lin.astype(jnp.float32).T                    # (H_in, H_out)
    b_lin_r = b_lin.astype(jnp.float32).reshape(1, H)

    operands = (x2d, w_x, w_h, b, w_lin_t, b_lin_r)

    return pl.pallas_call(
        net_kernel,
        out_shape=jax.ShapeDtypeStruct((B, H), jnp.float32),
        in_specs=[_full_spec(a.shape) for a in operands],
        out_specs=_full_spec((B, H)),
        scratch_shapes=[pltpu.VMEM((T * B, H), jnp.float32)],
    )(*operands)


def net_reference(x, params):
    """Pure-JAX reference replicating the (intended) PyTorch forward."""
    w_ih, w_hh, b_ih, b_hh, w_lin, b_lin = params
    B, T, _ = x.shape
    hp = jax.lax.Precision.HIGHEST
    dot = lambda a, b: jnp.dot(a, b, precision=hp)
    seq = x
    for l in range(L):
        h = jnp.zeros((B, H), jnp.float32)
        c = jnp.zeros((B, H), jnp.float32)
        outs = []
        for t in range(T):
            gates = (dot(seq[:, t, :], w_ih[l].T) + b_ih[l]
                     + dot(h, w_hh[l].T) + b_hh[l])
            i, f, g, o = jnp.split(gates, 4, axis=-1)
            i, f, o = jax.nn.sigmoid(i), jax.nn.sigmoid(f), jax.nn.sigmoid(o)
            g = jnp.tanh(g)
            c = f * c + i * g
            h = o * jnp.tanh(c)
            outs.append(h)
        seq = jnp.stack(outs, axis=1)
    lin = dot(seq[:, -1, :], w_lin.T) + b_lin
    return jnp.maximum((1.0 + lin) * x[:, -1, :], 0.0)


def init_params(key):
    k = 1.0 / jnp.sqrt(jnp.float32(H))
    ks = jax.random.split(key, 6)
    w_ih = jax.random.uniform(ks[0], (L, 4 * H, H), jnp.float32, -k, k)
    w_hh = jax.random.uniform(ks[1], (L, 4 * H, H), jnp.float32, -k, k)
    b_ih = jax.random.uniform(ks[2], (L, 4 * H), jnp.float32, -k, k)
    b_hh = jax.random.uniform(ks[3], (L, 4 * H), jnp.float32, -k, k)
    w_lin = jax.random.uniform(ks[4], (H, H), jnp.float32, -k, k)
    b_lin = jax.random.uniform(ks[5], (H,), jnp.float32, -k, k)
    return (w_ih, w_hh, b_ih, b_hh, w_lin, b_lin)


if __name__ == "__main__":
    key = jax.random.PRNGKey(0)
    pkey, xkey = jax.random.split(key)
    params = init_params(pkey)

    B, T = 2, 8
    x = jax.random.normal(xkey, (B, T, H), dtype=jnp.float32)

    y = jax.block_until_ready(net_forward(x, params))
    y_ref = net_reference(x, params)

    assert y.shape == (B, H)
    assert jnp.allclose(y, y_ref, atol=1e-4, rtol=1e-4), (y, y_ref)
    print("KERNEL_OK")
</pallas_src>

<mosaic_0001>
module attributes {stable_mosaic.version = 11 : i64} {
  func.func @net_kernel(%arg0: memref<16x3xf32, #tpu.memory_space<vmem>>, %arg1: memref<5x3x12xf32, #tpu.memory_space<vmem>>, %arg2: memref<5x3x12xf32, #tpu.memory_space<vmem>>, %arg3: memref<5x1x12xf32, #tpu.memory_space<vmem>>, %arg4: memref<3x3xf32, #tpu.memory_space<vmem>>, %arg5: memref<1x3xf32, #tpu.memory_space<vmem>>, %arg6: memref<2x3xf32, #tpu.memory_space<vmem>>, %arg7: memref<16x3xf32, #tpu.memory_space<vmem>>) attributes {dimension_semantics = [], scalar_prefetch = 0 : i64, scratch_operands = 1 : i64, tpu.core_type = #tpu.core_type<tc>} {
    %c0 = arith.constant 0 : index
    %c0_0 = arith.constant 0 : index
    %0 = vector.load %arg0[%c0, %c0_0] : memref<16x3xf32, #tpu.memory_space<vmem>>, vector<16x3xf32>
    %c0_1 = arith.constant 0 : index
    %c0_2 = arith.constant 0 : index
    %1 = vector.load %arg7[%c0_1, %c0_2] : memref<16x3xf32, #tpu.memory_space<vmem>>, vector<16x3xf32>
    tpu.vector_store %arg7[%c0_1, %c0_2], %0 {strides = array<i32>} : memref<16x3xf32, #tpu.memory_space<vmem>>, vector<16x3xf32>,
    %c0_3 = arith.constant 0 : index
    %c0_4 = arith.constant 0 : index
    %2 = vector.load %arg7[%c0_3, %c0_4] : memref<16x3xf32, #tpu.memory_space<vmem>>, vector<16x3xf32>
    %c0_5 = arith.constant 0 : index
    %c0_6 = arith.constant 0 : index
    %c0_7 = arith.constant 0 : index
    %3 = vector.load %arg1[%c0_5, %c0_6, %c0_7] : memref<5x3x12xf32, #tpu.memory_space<vmem>>, vector<1x3x12xf32>
    %4 = vector.shape_cast %3 : vector<1x3x12xf32> to vector<3x12xf32>
    %5 = vector.extract_strided_slice %2 {offsets = [0, 0], sizes = [16, 1], strides = [1, 1]} : vector<16x3xf32> to vector<16x1xf32>
    %6 = vector.extract_strided_slice %4 {offsets = [0, 0], sizes = [1, 12], strides = [1, 1]} : vector<3x12xf32> to vector<1x12xf32>
    %7 = vector.shape_cast %6 : vector<1x12xf32> to vector<1x12xf32>
    %8 = vector.broadcast %7 : vector<1x12xf32> to vector<16x12xf32>
    %9 = vector.broadcast %5 : vector<16x1xf32> to vector<16x12xf32>
    %10 = arith.mulf %9, %8 : vector<16x12xf32>
    %11 = vector.extract_strided_slice %2 {offsets = [0, 1], sizes = [16, 1], strides = [1, 1]} : vector<16x3xf32> to vector<16x1xf32>
    %12 = vector.extract_strided_slice %4 {offsets = [1, 0], sizes = [1, 12], strides = [1, 1]} : vector<3x12xf32> to vector<1x12xf32>
    %13 = vector.shape_cast %12 : vector<1x12xf32> to vector<1x12xf32>
    %14 = vector.broadcast %13 : vector<1x12xf32> to vector<16x12xf32>
    %15 = vector.broadcast %11 : vector<16x1xf32> to vector<16x12xf32>
    %16 = arith.mulf %15, %14 : vector<16x12xf32>
    %17 = arith.addf %10, %16 : vector<16x12xf32>
    %18 = vector.extract_strided_slice %2 {offsets = [0, 2], sizes = [16, 1], strides = [1, 1]} : vector<16x3xf32> to vector<16x1xf32>
    %19 = vector.extract_strided_slice %4 {offsets = [2, 0], sizes = [1, 12], strides = [1, 1]} : vector<3x12xf32> to vector<1x12xf32>
    %20 = vector.shape_cast %19 : vector<1x12xf32> to vector<1x12xf32>
    %21 = vector.broadcast %20 : vector<1x12xf32> to vector<16x12xf32>
    %22 = vector.broadcast %18 : vector<16x1xf32> to vector<16x12xf32>
    %23 = arith.mulf %22, %21 : vector<16x12xf32>
    %24 = arith.addf %17, %23 : vector<16x12xf32>
    %c0_8 = arith.constant 0 : index
    %c0_9 = arith.constant 0 : index
    %c0_10 = arith.constant 0 : index
    %25 = vector.load %arg3[%c0_8, %c0_9, %c0_10] : memref<5x1x12xf32, #tpu.memory_space<vmem>>, vector<1x1x12xf32>
    %26 = vector.shape_cast %25 : vector<1x1x12xf32> to vector<1x12xf32>
    %27 = vector.broadcast %26 : vector<1x12xf32> to vector<16x12xf32>
    %28 = arith.addf %24, %27 : vector<16x12xf32>
    %c0_11 = arith.constant 0 : index
    %c0_12 = arith.constant 0 : index
    %c0_13 = arith.constant 0 : index
    %29 = vector.load %arg2[%c0_11, %c0_12, %c0_13] : memref<5x3x12xf32, #tpu.memory_space<vmem>>, vector<1x3x12xf32>
    %30 = vector.shape_cast %29 : vector<1x3x12xf32> to vector<3x12xf32>
    %31 = vector.extract_strided_slice %30 {offsets = [0, 0], sizes = [1, 12], strides = [1, 1]} : vector<3x12xf32> to vector<1x12xf32>
    %32 = vector.shape_cast %31 : vector<1x12xf32> to vector<1x12xf32>
    %33 = vector.broadcast %32 : vector<1x12xf32> to vector<2x12xf32>
    %34 = vector.extract_strided_slice %30 {offsets = [1, 0], sizes = [1, 12], strides = [1, 1]} : vector<3x12xf32> to vector<1x12xf32>
    %35 = vector.shape_cast %34 : vector<1x12xf32> to vector<1x12xf32>
    %36 = vector.broadcast %35 : vector<1x12xf32> to vector<2x12xf32>
    %37 = vector.extract_strided_slice %30 {offsets = [2, 0], sizes = [1, 12], strides = [1, 1]} : vector<3x12xf32> to vector<1x12xf32>
    %38 = vector.shape_cast %37 : vector<1x12xf32> to vector<1x12xf32>
    %39 = vector.broadcast %38 : vector<1x12xf32> to vector<2x12xf32>
    %cst = arith.constant 0.000000e+00 : f32
    %40 = vector.broadcast %cst : f32 to vector<2x3xf32>
    %cst_14 = arith.constant 0.000000e+00 : f32
    %41 = vector.broadcast %cst_14 : f32 to vector<2x3xf32>
    %42 = vector.extract_strided_slice %40 {offsets = [0, 0], sizes = [2, 1], strides = [1, 1]} : vector<2x3xf32> to vector<2x1xf32>
    %43 = vector.broadcast %42 : vector<2x1xf32> to vector<2x12xf32>
    %44 = arith.mulf %43, %33 : vector<2x12xf32>
    %45 = vector.extract_strided_slice %40 {offsets = [0, 1], sizes = [2, 1], strides = [1, 1]} : vector<2x3xf32> to vector<2x1xf32>
    %46 = vector.broadcast %45 : vector<2x1xf32> to vector<2x12xf32>
    %47 = arith.mulf %46, %36 : vector<2x12xf32>
    %48 = arith.addf %44, %47 : vector<2x12xf32>
    %49 = vector.extract_strided_slice %40 {offsets = [0, 2], sizes = [2, 1], strides = [1, 1]} : vector<2x3xf32> to vector<2x1xf32>
    %50 = vector.broadcast %49 : vector<2x1xf32> to vector<2x12xf32>
    %51 = arith.mulf %50, %39 : vector<2x12xf32>
    %52 = arith.addf %48, %51 : vector<2x12xf32>
    %53 = vector.extract_strided_slice %28 {offsets = [0, 0], sizes = [2, 12], strides = [1, 1]} : vector<16x12xf32> to vector<2x12xf32>
    %54 = arith.addf %53, %52 : vector<2x12xf32>
    %55 = vector.extract_strided_slice %54 {offsets = [0, 0], sizes = [2, 9], strides = [1, 1]} : vector<2x12xf32> to vector<2x9xf32>
    %56 = arith.negf %55 : vector<2x9xf32>
    %57 = math.exp %56 : vector<2x9xf32>
    %cst_15 = arith.constant 1.000000e+00 : f32
    %58 = vector.broadcast %cst_15 : f32 to vector<2x9xf32>
    %59 = arith.addf %58, %57 : vector<2x9xf32>
    %60 = arith.divf %58, %59 : vector<2x9xf32>
    %61 = vector.extract_strided_slice %54 {offsets = [0, 9], sizes = [2, 3], strides = [1, 1]} : vector<2x12xf32> to vector<2x3xf32>
    %62 = math.tanh %61 : vector<2x3xf32>
    %63 = vector.extract_strided_slice %60 {offsets = [0, 0], sizes = [2, 3], strides = [1, 1]} : vector<2x9xf32> to vector<2x3xf32>
    %64 = vector.extract_strided_slice %60 {offsets = [0, 3], sizes = [2, 3], strides = [1, 1]} : vector<2x9xf32> to vector<2x3xf32>
    %65 = vector.extract_strided_slice %60 {offsets = [0, 6], sizes = [2, 3], strides = [1, 1]} : vector<2x9xf32> to vector<2x3xf32>
    %66 = arith.mulf %64, %41 : vector<2x3xf32>
    %67 = arith.mulf %63, %62 : vector<2x3xf32>
    %68 = arith.addf %66, %67 : vector<2x3xf32>
    %69 = math.tanh %68 : vector<2x3xf32>
    %70 = arith.mulf %65, %69 : vector<2x3xf32>
    %c0_16 = arith.constant 0 : index
    %c0_17 = arith.constant 0 : index
    %71 = vector.load %arg7[%c0_16, %c0_17] : memref<16x3xf32, #tpu.memory_space<vmem>>, vector<2x3xf32>
    tpu.vector_store %arg7[%c0_16, %c0_17], %70 {strides = array<i32>} : memref<16x3xf32, #tpu.memory_space<vmem>>, vector<2x3xf32>,
    %72 = vector.extract_strided_slice %70 {offsets = [0, 0], sizes = [2, 1], strides = [1, 1]} : vector<2x3xf32> to vector<2x1xf32>
    %73 = vector.broadcast %72 : vector<2x1xf32> to vector<2x12xf32>
    %74 = arith.mulf %73, %33 : vector<2x12xf32>
    %75 = vector.extract_strided_slice %70 {offsets = [0, 1], sizes = [2, 1], strides = [1, 1]} : vector<2x3xf32> to vector<2x1xf32>
    %76 = vector.broadcast %75 : vector<2x1xf32> to vector<2x12xf32>
    %77 = arith.mulf %76, %36 : vector<2x12xf32>
    %78 = arith.addf %74, %77 : vector<2x12xf32>
    %79 = vector.extract_strided_slice %70 {offsets = [0, 2], sizes = [2, 1], strides = [1, 1]} : vector<2x3xf32> to vector<2x1xf32>
    %80 = vector.broadcast %79 : vector<2x1xf32> to vector<2x12xf32>
    %81 = arith.mulf %80, %39 : vector<2x12xf32>
    %82 = arith.addf %78, %81 : vector<2x12xf32>
    %83 = vector.extract_strided_slice %28 {offsets = [2, 0], sizes = [2, 12], strides = [1, 1]} : vector<16x12xf32> to vector<2x12xf32>
    %84 = arith.addf %83, %82 : vector<2x12xf32>
    %85 = vector.extract_strided_slice %84 {offsets = [0, 0], sizes = [2, 9], strides = [1, 1]} : vector<2x12xf32> to vector<2x9xf32>
    %86 = arith.negf %85 : vector<2x9xf32>
    %87 = math.exp %86 : vector<2x9xf32>
    %cst_18 = arith.constant 1.000000e+00 : f32
    %88 = vector.broadcast %cst_18 : f32 to vector<2x9xf32>
    %89 = arith.addf %88, %87 : vector<2x9xf32>
    %90 = arith.divf %88, %89 : vector<2x9xf32>
    %91 = vector.extract_strided_slice %84 {offsets = [0, 9], sizes = [2, 3], strides = [1, 1]} : vector<2x12xf32> to vector<2x3xf32>
    %92 = math.tanh %91 : vector<2x3xf32>
    %93 = vector.extract_strided_slice %90 {offsets = [0, 0], sizes = [2, 3], strides = [1, 1]} : vector<2x9xf32> to vector<2x3xf32>
    %94 = vector.extract_strided_slice %90 {offsets = [0, 3], sizes = [2, 3], strides = [1, 1]} : vector<2x9xf32> to vector<2x3xf32>
    %95 = vector.extract_strided_slice %90 {offsets = [0, 6], sizes = [2, 3], strides = [1, 1]} : vector<2x9xf32> to vector<2x3xf32>
    %96 = arith.mulf %94, %68 : vector<2x3xf32>
    %97 = arith.mulf %93, %92 : vector<2x3xf32>
    %98 = arith.addf %96, %97 : vector<2x3xf32>
    %99 = math.tanh %98 : vector<2x3xf32>
    %100 = arith.mulf %95, %99 : vector<2x3xf32>
    %c2 = arith.constant 2 : index
    %c0_19 = arith.constant 0 : index
    %101 = vector.load %arg7[%c2, %c0_19] : memref<16x3xf32, #tpu.memory_space<vmem>>, vector<2x3xf32>
    tpu.vector_store %arg7[%c2, %c0_19], %100 {strides = array<i32>} : memref<16x3xf32, #tpu.memory_space<vmem>>, vector<2x3xf32>,
    %102 = vector.extract_strided_slice %100 {offsets = [0, 0], sizes = [2, 1], strides = [1, 1]} : vector<2x3xf32> to vector<2x1xf32>
    %103 = vector.broadcast %102 : vector<2x1xf32> to vector<2x12xf32>
    %104 = arith.mulf %103, %33 : vector<2x12xf32>
    %105 = vector.extract_strided_slice %100 {offsets = [0, 1], sizes = [2, 1], strides = [1, 1]} : vector<2x3xf32> to vector<2x1xf32>
    %106 = vector.broadcast %105 : vector<2x1xf32> to vector<2x12xf32>
    %107 = arith.mulf %106, %36 : vector<2x12xf32>
    %108 = arith.addf %104, %107 : vector<2x12xf32>
    %109 = vector.extract_strided_slice %100 {offsets = [0, 2], sizes = [2, 1], strides = [1, 1]} : vector<2x3xf32> to vector<2x1xf32>
    %110 = vector.broadcast %109 : vector<2x1xf32> to vector<2x12xf32>
    %111 = arith.mulf %110, %39 : vector<2x12xf32>
    %112 = arith.addf %108, %111 : vector<2x12xf32>
    %113 = vector.extract_strided_slice %28 {offsets = [4, 0], sizes = [2, 12], strides = [1, 1]} : vector<16x12xf32> to vector<2x12xf32>
    %114 = arith.addf %113, %112 : vector<2x12xf32>
    %115 = vector.extract_strided_slice %114 {offsets = [0, 0], sizes = [2, 9], strides = [1, 1]} : vector<2x12xf32> to vector<2x9xf32>
    %116 = arith.negf %115 : vector<2x9xf32>
    %117 = math.exp %116 : vector<2x9xf32>
    %cst_20 = arith.constant 1.000000e+00 : f32
    %118 = vector.broadcast %cst_20 : f32 to vector<2x9xf32>
    %119 = arith.addf %118, %117 : vector<2x9xf32>
    %120 = arith.divf %118, %119 : vector<2x9xf32>
    %121 = vector.extract_strided_slice %114 {offsets = [0, 9], sizes = [2, 3], strides = [1, 1]} : vector<2x12xf32> to vector<2x3xf32>
    %122 = math.tanh %121 : vector<2x3xf32>
    %123 = vector.extract_strided_slice %120 {offsets = [0, 0], sizes = [2, 3], strides = [1, 1]} : vector<2x9xf32> to vector<2x3xf32>
    %124 = vector.extract_strided_slice %120 {offsets = [0, 3], sizes = [2, 3], strides = [1, 1]} : vector<2x9xf32> to vector<2x3xf32>
    %125 = vector.extract_strided_slice %120 {offsets = [0, 6], sizes = [2, 3], strides = [1, 1]} : vector<2x9xf32> to vector<2x3xf32>
    %126 = arith.mulf %124, %98 : vector<2x3xf32>
    %127 = arith.mulf %123, %122 : vector<2x3xf32>
    %128 = arith.addf %126, %127 : vector<2x3xf32>
    %129 = math.tanh %128 : vector<2x3xf32>
    %130 = arith.mulf %125, %129 : vector<2x3xf32>
    %c4 = arith.constant 4 : index
    %c0_21 = arith.constant 0 : index
    %131 = vector.load %arg7[%c4, %c0_21] : memref<16x3xf32, #tpu.memory_space<vmem>>, vector<2x3xf32>
    tpu.vector_store %arg7[%c4, %c0_21], %130 {strides = array<i32>} : memref<16x3xf32, #tpu.memory_space<vmem>>, vector<2x3xf32>,
    %132 = vector.extract_strided_slice %130 {offsets = [0, 0], sizes = [2, 1], strides = [1, 1]} : vector<2x3xf32> to vector<2x1xf32>
    %133 = vector.broadcast %132 : vector<2x1xf32> to vector<2x12xf32>
    %134 = arith.mulf %133, %33 : vector<2x12xf32>
    %135 = vector.extract_strided_slice %130 {offsets = [0, 1], sizes = [2, 1], strides = [1, 1]} : vector<2x3xf32> to vector<2x1xf32>
    %136 = vector.broadcast %135 : vector<2x1xf32> to vector<2x12xf32>
    %137 = arith.mulf %136, %36 : vector<2x12xf32>
    %138 = arith.addf %134, %137 : vector<2x12xf32>
    %139 = vector.extract_strided_slice %130 {offsets = [0, 2], sizes = [2, 1], strides = [1, 1]} : vector<2x3xf32> to vector<2x1xf32>
    %140 = vector.broadcast %139 : vector<2x1xf32> to vector<2x12xf32>
    %141 = arith.mulf %140, %39 : vector<2x12xf32>
    %142 = arith.addf %138, %141 : vector<2x12xf32>
    %143 = vector.extract_strided_slice %28 {offsets = [6, 0], sizes = [2, 12], strides = [1, 1]} : vector<16x12xf32> to vector<2x12xf32>
    %144 = arith.addf %143, %142 : vector<2x12xf32>
    %145 = vector.extract_strided_slice %144 {offsets = [0, 0], sizes = [2, 9], strides = [1, 1]} : vector<2x12xf32> to vector<2x9xf32>
    %146 = arith.negf %145 : vector<2x9xf32>
    %147 = math.exp %146 : vector<2x9xf32>
    %cst_22 = arith.constant 1.000000e+00 : f32
    %148 = vector.broadcast %cst_22 : f32 to vector<2x9xf32>
    %149 = arith.addf %148, %147 : vector<2x9xf32>
    %150 = arith.divf %148, %149 : vector<2x9xf32>
    %151 = vector.extract_strided_slice %144 {offsets = [0, 9], sizes = [2, 3], strides = [1, 1]} : vector<2x12xf32> to vector<2x3xf32>
    %152 = math.tanh %151 : vector<2x3xf32>
    %153 = vector.extract_strided_slice %150 {offsets = [0, 0], sizes = [2, 3], strides = [1, 1]} : vector<2x9xf32> to vector<2x3xf32>
    %154 = vector.extract_strided_slice %150 {offsets = [0, 3], sizes = [2, 3], strides = [1, 1]} : vector<2x9xf32> to vector<2x3xf32>
    %155 = vector.extract_strided_slice %150 {offsets = [0, 6], sizes = [2, 3], strides = [1, 1]} : vector<2x9xf32> to vector<2x3xf32>
    %156 = arith.mulf %154, %128 : vector<2x3xf32>
    %157 = arith.mulf %153, %152 : vector<2x3xf32>
    %158 = arith.addf %156, %157 : vector<2x3xf32>
    %159 = math.tanh %158 : vector<2x3xf32>
    %160 = arith.mulf %155, %159 : vector<2x3xf32>
    %c6 = arith.constant 6 : index
    %c0_23 = arith.constant 0 : index
    %161 = vector.load %arg7[%c6, %c0_23] : memref<16x3xf32, #tpu.memory_space<vmem>>, vector<2x3xf32>
    tpu.vector_store %arg7[%c6, %c0_23], %160 {strides = array<i32>} : memref<16x3xf32, #tpu.memory_space<vmem>>, vector<2x3xf32>,
    %162 = vector.extract_strided_slice %160 {offsets = [0, 0], sizes = [2, 1], strides = [1, 1]} : vector<2x3xf32> to vector<2x1xf32>
    %163 = vector.broadcast %162 : vector<2x1xf32> to vector<2x12xf32>
    %164 = arith.mulf %163, %33 : vector<2x12xf32>
    %165 = vector.extract_strided_slice %160 {offsets = [0, 1], sizes = [2, 1], strides = [1, 1]} : vector<2x3xf32> to vector<2x1xf32>
    %166 = vector.broadcast %165 : vector<2x1xf32> to vector<2x12xf32>
    %167 = arith.mulf %166, %36 : vector<2x12xf32>
    %168 = arith.addf %164, %167 : vector<2x12xf32>
    %169 = vector.extract_strided_slice %160 {offsets = [0, 2], sizes = [2, 1], strides = [1, 1]} : vector<2x3xf32> to vector<2x1xf32>
    %170 = vector.broadcast %169 : vector<2x1xf32> to vector<2x12xf32>
    %171 = arith.mulf %170, %39 : vector<2x12xf32>
    %172 = arith.addf %168, %171 : vector<2x12xf32>
    %173 = vector.extract_strided_slice %28 {offsets = [8, 0], sizes = [2, 12], strides = [1, 1]} : vector<16x12xf32> to vector<2x12xf32>
    %174 = arith.addf %173, %172 : vector<2x12xf32>
    %175 = vector.extract_strided_slice %174 {offsets = [0, 0], sizes = [2, 9], strides = [1, 1]} : vector<2x12xf32> to vector<2x9xf32>
    %176 = arith.negf %175 : vector<2x9xf32>
    %177 = math.exp %176 : vector<2x9xf32>
    %cst_24 = arith.constant 1.000000e+00 : f32
    %178 = vector.broadcast %cst_24 : f32 to vector<2x9xf32>
    %179 = arith.addf %178, %177 : vector<2x9xf32>
    %180 = arith.divf %178, %179 : vector<2x9xf32>
    %181 = vector.extract_strided_slice %174 {offsets = [0, 9], sizes = [2, 3], strides = [1, 1]} : vector<2x12xf32> to vector<2x3xf32>
    %182 = math.tanh %181 : vector<2x3xf32>
    %183 = vector.extract_strided_slice %180 {offsets = [0, 0], sizes = [2, 3], strides = [1, 1]} : vector<2x9xf32> to vector<2x3xf32>
    %184 = vector.extract_strided_slice %180 {offsets = [0, 3], sizes = [2, 3], strides = [1, 1]} : vector<2x9xf32> to vector<2x3xf32>
    %185 = vector.extract_strided_slice %180 {offsets = [0, 6], sizes = [2, 3], strides = [1, 1]} : vector<2x9xf32> to vector<2x3xf32>
    %186 = arith.mulf %184, %158 : vector<2x3xf32>
    %187 = arith.mulf %183, %182 : vector<2x3xf32>
    %188 = arith.addf %186, %187 : vector<2x3xf32>
    %189 = math.tanh %188 : vector<2x3xf32>
    %190 = arith.mulf %185, %189 : vector<2x3xf32>
    %c8 = arith.constant 8 : index
    %c0_25 = arith.constant 0 : index
    %191 = vector.load %arg7[%c8, %c0_25] : memref<16x3xf32, #tpu.memory_space<vmem>>, vector<2x3xf32>
    tpu.vector_store %arg7[%c8, %c0_25], %190 {strides = array<i32>} : memref<16x3xf32, #tpu.memory_space<vmem>>, vector<2x3xf32>,
    %192 = vector.extract_strided_slice %190 {offsets = [0, 0], sizes = [2, 1], strides = [1, 1]} : vector<2x3xf32> to vector<2x1xf32>
    %193 = vector.broadcast %192 : vector<2x1xf32> to vector<2x12xf32>
    %194 = arith.mulf %193, %33 : vector<2x12xf32>
    %195 = vector.extract_strided_slice %190 {offsets = [0, 1], sizes = [2, 1], strides = [1, 1]} : vector<2x3xf32> to vector<2x1xf32>
    %196 = vector.broadcast %195 : vector<2x1xf32> to vector<2x12xf32>
    %197 = arith.mulf %196, %36 : vector<2x12xf32>
    %198 = arith.addf %194, %197 : vector<2x12xf32>
    %199 = vector.extract_strided_slice %190 {offsets = [0, 2], sizes = [2, 1], strides = [1, 1]} : vector<2x3xf32> to vector<2x1xf32>
    %200 = vector.broadcast %199 : vector<2x1xf32> to vector<2x12xf32>
    %201 = arith.mulf %200, %39 : vector<2x12xf32>
    %202 = arith.addf %198, %201 : vector<2x12xf32>
    %203 = vector.extract_strided_slice %28 {offsets = [10, 0], sizes = [2, 12], strides = [1, 1]} : vector<16x12xf32> to vector<2x12xf32>
    %204 = arith.addf %203, %202 : vector<2x12xf32>
    %205 = vector.extract_strided_slice %204 {offsets = [0, 0], sizes = [2, 9], strides = [1, 1]} : vector<2x12xf32> to vector<2x9xf32>
    %206 = arith.negf %205 : vector<2x9xf32>
    %207 = math.exp %206 : vector<2x9xf32>
    %cst_26 = arith.constant 1.000000e+00 : f32
    %208 = vector.broadcast %cst_26 : f32 to vector<2x9xf32>
    %209 = arith.addf %208, %207 : vector<2x9xf32>
    %210 = arith.divf %208, %209 : vector<2x9xf32>
    %211 = vector.extract_strided_slice %204 {offsets = [0, 9], sizes = [2, 3], strides = [1, 1]} : vector<2x12xf32> to vector<2x3xf32>
    %212 = math.tanh %211 : vector<2x3xf32>
    %213 = vector.extract_strided_slice %210 {offsets = [0, 0], sizes = [2, 3], strides = [1, 1]} : vector<2x9xf32> to vector<2x3xf32>
    %214 = vector.extract_strided_slice %210 {offsets = [0, 3], sizes = [2, 3], strides = [1, 1]} : vector<2x9xf32> to vector<2x3xf32>
    %215 = vector.extract_strided_slice %210 {offsets = [0, 6], sizes = [2, 3], strides = [1, 1]} : vector<2x9xf32> to vector<2x3xf32>
    %216 = arith.mulf %214, %188 : vector<2x3xf32>
    %217 = arith.mulf %213, %212 : vector<2x3xf32>
    %218 = arith.addf %216, %217 : vector<2x3xf32>
    %219 = math.tanh %218 : vector<2x3xf32>
    %220 = arith.mulf %215, %219 : vector<2x3xf32>
    %c10 = arith.constant 10 : index
    %c0_27 = arith.constant 0 : index
    %221 = vector.load %arg7[%c10, %c0_27] : memref<16x3xf32, #tpu.memory_space<vmem>>, vector<2x3xf32>
    tpu.vector_store %arg7[%c10, %c0_27], %220 {strides = array<i32>} : memref<16x3xf32, #tpu.memory_space<vmem>>, vector<2x3xf32>,
    %222 = vector.extract_strided_slice %220 {offsets = [0, 0], sizes = [2, 1], strides = [1, 1]} : vector<2x3xf32> to vector<2x1xf32>
    %223 = vector.broadcast %222 : vector<2x1xf32> to vector<2x12xf32>
    %224 = arith.mulf %223, %33 : vector<2x12xf32>
    %225 = vector.extract_strided_slice %220 {offsets = [0, 1], sizes = [2, 1], strides = [1, 1]} : vector<2x3xf32> to vector<2x1xf32>
    %226 = vector.broadcast %225 : vector<2x1xf32> to vector<2x12xf32>
    %227 = arith.mulf %226, %36 : vector<2x12xf32>
    %228 = arith.addf %224, %227 : vector<2x12xf32>
    %229 = vector.extract_strided_slice %220 {offsets = [0, 2], sizes = [2, 1], strides = [1, 1]} : vector<2x3xf32> to vector<2x1xf32>
    %230 = vector.broadcast %229 : vector<2x1xf32> to vector<2x12xf32>
    %231 = arith.mulf %230, %39 : vector<2x12xf32>
    %232 = arith.addf %228, %231 : vector<2x12xf32>
    %233 = vector.extract_strided_slice %28 {offsets = [12, 0], sizes = [2, 12], strides = [1, 1]} : vector<16x12xf32> to vector<2x12xf32>
    %234 = arith.addf %233, %232 : vector<2x12xf32>
    %235 = vector.extract_strided_slice %234 {offsets = [0, 0], sizes = [2, 9], strides = [1, 1]} : vector<2x12xf32> to vector<2x9xf32>
    %236 = arith.negf %235 : vector<2x9xf32>
    %237 = math.exp %236 : vector<2x9xf32>
    %cst_28 = arith.constant 1.000000e+00 : f32
    %238 = vector.broadcast %cst_28 : f32 to vector<2x9xf32>
    %239 = arith.addf %238, %237 : vector<2x9xf32>
    %240 = arith.divf %238, %239 : vector<2x9xf32>
    %241 = vector.extract_strided_slice %234 {offsets = [0, 9], sizes = [2, 3], strides = [1, 1]} : vector<2x12xf32> to vector<2x3xf32>
    %242 = math.tanh %241 : vector<2x3xf32>
    %243 = vector.extract_strided_slice %240 {offsets = [0, 0], sizes = [2, 3], strides = [1, 1]} : vector<2x9xf32> to vector<2x3xf32>
    %244 = vector.extract_strided_slice %240 {offsets = [0, 3], sizes = [2, 3], strides = [1, 1]} : vector<2x9xf32> to vector<2x3xf32>
    %245 = vector.extract_strided_slice %240 {offsets = [0, 6], sizes = [2, 3], strides = [1, 1]} : vector<2x9xf32> to vector<2x3xf32>
    %246 = arith.mulf %244, %218 : vector<2x3xf32>
    %247 = arith.mulf %243, %242 : vector<2x3xf32>
    %248 = arith.addf %246, %247 : vector<2x3xf32>
    %249 = math.tanh %248 : vector<2x3xf32>
    %250 = arith.mulf %245, %249 : vector<2x3xf32>
    %c12 = arith.constant 12 : index
    %c0_29 = arith.constant 0 : index
    %251 = vector.load %arg7[%c12, %c0_29] : memref<16x3xf32, #tpu.memory_space<vmem>>, vector<2x3xf32>
    tpu.vector_store %arg7[%c12, %c0_29], %250 {strides = array<i32>} : memref<16x3xf32, #tpu.memory_space<vmem>>, vector<2x3xf32>,
    %252 = vector.extract_strided_slice %250 {offsets = [0, 0], sizes = [2, 1], strides = [1, 1]} : vector<2x3xf32> to vector<2x1xf32>
    %253 = vector.broadcast %252 : vector<2x1xf32> to vector<2x12xf32>
    %254 = arith.mulf %253, %33 : vector<2x12xf32>
    %255 = vector.extract_strided_slice %250 {offsets = [0, 1], sizes = [2, 1], strides = [1, 1]} : vector<2x3xf32> to vector<2x1xf32>
    %256 = vector.broadcast %255 : vector<2x1xf32> to vector<2x12xf32>
    %257 = arith.mulf %256, %36 : vector<2x12xf32>
    %258 = arith.addf %254, %257 : vector<2x12xf32>
    %259 = vector.extract_strided_slice %250 {offsets = [0, 2], sizes = [2, 1], strides = [1, 1]} : vector<2x3xf32> to vector<2x1xf32>
    %260 = vector.broadcast %259 : vector<2x1xf32> to vector<2x12xf32>
    %261 = arith.mulf %260, %39 : vector<2x12xf32>
    %262 = arith.addf %258, %261 : vector<2x12xf32>
    %263 = vector.extract_strided_slice %28 {offsets = [14, 0], sizes = [2, 12], strides = [1, 1]} : vector<16x12xf32> to vector<2x12xf32>
    %264 = arith.addf %263, %262 : vector<2x12xf32>
    %265 = vector.extract_strided_slice %264 {offsets = [0, 0], sizes = [2, 9], strides = [1, 1]} : vector<2x12xf32> to vector<2x9xf32>
    %266 = arith.negf %265 : vector<2x9xf32>
    %267 = math.exp %266 : vector<2x9xf32>
    %cst_30 = arith.constant 1.000000e+00 : f32
    %268 = vector.broadcast %cst_30 : f32 to vector<2x9xf32>
    %269 = arith.addf %268, %267 : vector<2x9xf32>
    %270 = arith.divf %268, %269 : vector<2x9xf32>
    %271 = vector.extract_strided_slice %264 {offsets = [0, 9], sizes = [2, 3], strides = [1, 1]} : vector<2x12xf32> to vector<2x3xf32>
    %272 = math.tanh %271 : vector<2x3xf32>
    %273 = vector.extract_strided_slice %270 {offsets = [0, 0], sizes = [2, 3], strides = [1, 1]} : vector<2x9xf32> to vector<2x3xf32>
    %274 = vector.extract_strided_slice %270 {offsets = [0, 3], sizes = [2, 3], strides = [1, 1]} : vector<2x9xf32> to vector<2x3xf32>
    %275 = vector.extract_strided_slice %270 {offsets = [0, 6], sizes = [2, 3], strides = [1, 1]} : vector<2x9xf32> to vector<2x3xf32>
    %276 = arith.mulf %274, %248 : vector<2x3xf32>
    %277 = arith.mulf %273, %272 : vector<2x3xf32>
    %278 = arith.addf %276, %277 : vector<2x3xf32>
    %279 = math.tanh %278 : vector<2x3xf32>
    %280 = arith.mulf %275, %279 : vector<2x3xf32>
    %c14 = arith.constant 14 : index
    %c0_31 = arith.constant 0 : index
    %281 = vector.load %arg7[%c14, %c0_31] : memref<16x3xf32, #tpu.memory_space<vmem>>, vector<2x3xf32>
    tpu.vector_store %arg7[%c14, %c0_31], %280 {strides = array<i32>} : memref<16x3xf32, #tpu.memory_space<vmem>>, vector<2x3xf32>,
    %c0_32 = arith.constant 0 : index
    %c0_33 = arith.constant 0 : index
    %282 = vector.load %arg7[%c0_32, %c0_33] : memref<16x3xf32, #tpu.memory_space<vmem>>, vector<16x3xf32>
    %c1 = arith.constant 1 : index
    %c0_34 = arith.constant 0 : index
    %c0_35 = arith.constant 0 : index
    %283 = vector.load %arg1[%c1, %c0_34, %c0_35] : memref<5x3x12xf32, #tpu.memory_space<vmem>>, vector<1x3x12xf32>
    %284 = vector.shape_cast %283 : vector<1x3x12xf32> to vector<3x12xf32>
    %285 = vector.extract_strided_slice %282 {offsets = [0, 0], sizes = [16, 1], strides = [1, 1]} : vector<16x3xf32> to vector<16x1xf32>
    %286 = vector.extract_strided_slice %284 {offsets = [0, 0], sizes = [1, 12], strides = [1, 1]} : vector<3x12xf32> to vector<1x12xf32>
    %287 = vector.shape_cast %286 : vector<1x12xf32> to vector<1x12xf32>
    %288 = vector.broadcast %287 : vector<1x12xf32> to vector<16x12xf32>
    %289 = vector.broadcast %285 : vector<16x1xf32> to vector<16x12xf32>
    %290 = arith.mulf %289, %288 : vector<16x12xf32>
    %291 = vector.extract_strided_slice %282 {offsets = [0, 1], sizes = [16, 1], strides = [1, 1]} : vector<16x3xf32> to vector<16x1xf32>
    %292 = vector.extract_strided_slice %284 {offsets = [1, 0], sizes = [1, 12], strides = [1, 1]} : vector<3x12xf32> to vector<1x12xf32>
    %293 = vector.shape_cast %292 : vector<1x12xf32> to vector<1x12xf32>
    %294 = vector.broadcast %293 : vector<1x12xf32> to vector<16x12xf32>
    %295 = vector.broadcast %291 : vector<16x1xf32> to vector<16x12xf32>
    %296 = arith.mulf %295, %294 : vector<16x12xf32>
    %297 = arith.addf %290, %296 : vector<16x12xf32>
    %298 = vector.extract_strided_slice %282 {offsets = [0, 2], sizes = [16, 1], strides = [1, 1]} : vector<16x3xf32> to vector<16x1xf32>
    %299 = vector.extract_strided_slice %284 {offsets = [2, 0], sizes = [1, 12], strides = [1, 1]} : vector<3x12xf32> to vector<1x12xf32>
    %300 = vector.shape_cast %299 : vector<1x12xf32> to vector<1x12xf32>
    %301 = vector.broadcast %300 : vector<1x12xf32> to vector<16x12xf32>
    %302 = vector.broadcast %298 : vector<16x1xf32> to vector<16x12xf32>
    %303 = arith.mulf %302, %301 : vector<16x12xf32>
    %304 = arith.addf %297, %303 : vector<16x12xf32>
    %c1_36 = arith.constant 1 : index
    %c0_37 = arith.constant 0 : index
    %c0_38 = arith.constant 0 : index
    %305 = vector.load %arg3[%c1_36, %c0_37, %c0_38] : memref<5x1x12xf32, #tpu.memory_space<vmem>>, vector<1x1x12xf32>
    %306 = vector.shape_cast %305 : vector<1x1x12xf32> to vector<1x12xf32>
    %307 = vector.broadcast %306 : vector<1x12xf32> to vector<16x12xf32>
    %308 = arith.addf %304, %307 : vector<16x12xf32>
    %c1_39 = arith.constant 1 : index
    %c0_40 = arith.constant 0 : index
    %c0_41 = arith.constant 0 : index
    %309 = vector.load %arg2[%c1_39, %c0_40, %c0_41] : memref<5x3x12xf32, #tpu.memory_space<vmem>>, vector<1x3x12xf32>
    %310 = vector.shape_cast %309 : vector<1x3x12xf32> to vector<3x12xf32>
    %311 = vector.extract_strided_slice %310 {offsets = [0, 0], sizes = [1, 12], strides = [1, 1]} : vector<3x12xf32> to vector<1x12xf32>
    %312 = vector.shape_cast %311 : vector<1x12xf32> to vector<1x12xf32>
    %313 = vector.broadcast %312 : vector<1x12xf32> to vector<2x12xf32>
    %314 = vector.extract_strided_slice %310 {offsets = [1, 0], sizes = [1, 12], strides = [1, 1]} : vector<3x12xf32> to vector<1x12xf32>
    %315 = vector.shape_cast %314 : vector<1x12xf32> to vector<1x12xf32>
    %316 = vector.broadcast %315 : vector<1x12xf32> to vector<2x12xf32>
    %317 = vector.extract_strided_slice %310 {offsets = [2, 0], sizes = [1, 12], strides = [1, 1]} : vector<3x12xf32> to vector<1x12xf32>
    %318 = vector.shape_cast %317 : vector<1x12xf32> to vector<1x12xf32>
    %319 = vector.broadcast %318 : vector<1x12xf32> to vector<2x12xf32>
    %cst_42 = arith.constant 0.000000e+00 : f32
    %320 = vector.broadcast %cst_42 : f32 to vector<2x3xf32>
    %cst_43 = arith.constant 0.000000e+00 : f32
    %321 = vector.broadcast %cst_43 : f32 to vector<2x3xf32>
    %322 = vector.extract_strided_slice %320 {offsets = [0, 0], sizes = [2, 1], strides = [1, 1]} : vector<2x3xf32> to vector<2x1xf32>
    %323 = vector.broadcast %322 : vector<2x1xf32> to vector<2x12xf32>
    %324 = arith.mulf %323, %313 : vector<2x12xf32>
    %325 = vector.extract_strided_slice %320 {offsets = [0, 1], sizes = [2, 1], strides = [1, 1]} : vector<2x3xf32> to vector<2x1xf32>
    %326 = vector.broadcast %325 : vector<2x1xf32> to vector<2x12xf32>
    %327 = arith.mulf %326, %316 : vector<2x12xf32>
    %328 = arith.addf %324, %327 : vector<2x12xf32>
    %329 = vector.extract_strided_slice %320 {offsets = [0, 2], sizes = [2, 1], strides = [1, 1]} : vector<2x3xf32> to vector<2x1xf32>
    %330 = vector.broadcast %329 : vector<2x1xf32> to vector<2x12xf32>
    %331 = arith.mulf %330, %319 : vector<2x12xf32>
    %332 = arith.addf %328, %331 : vector<2x12xf32>
    %333 = vector.extract_strided_slice %308 {offsets = [0, 0], sizes = [2, 12], strides = [1, 1]} : vector<16x12xf32> to vector<2x12xf32>
    %334 = arith.addf %333, %332 : vector<2x12xf32>
    %335 = vector.extract_strided_slice %334 {offsets = [0, 0], sizes = [2, 9], strides = [1, 1]} : vector<2x12xf32> to vector<2x9xf32>
    %336 = arith.negf %335 : vector<2x9xf32>
    %337 = math.exp %336 : vector<2x9xf32>
    %cst_44 = arith.constant 1.000000e+00 : f32
    %338 = vector.broadcast %cst_44 : f32 to vector<2x9xf32>
    %339 = arith.addf %338, %337 : vector<2x9xf32>
    %340 = arith.divf %338, %339 : vector<2x9xf32>
    %341 = vector.extract_strided_slice %334 {offsets = [0, 9], sizes = [2, 3], strides = [1, 1]} : vector<2x12xf32> to vector<2x3xf32>
    %342 = math.tanh %341 : vector<2x3xf32>
    %343 = vector.extract_strided_slice %340 {offsets = [0, 0], sizes = [2, 3], strides = [1, 1]} : vector<2x9xf32> to vector<2x3xf32>
    %344 = vector.extract_strided_slice %340 {offsets = [0, 3], sizes = [2, 3], strides = [1, 1]} : vector<2x9xf32> to vector<2x3xf32>
    %345 = vector.extract_strided_slice %340 {offsets = [0, 6], sizes = [2, 3], strides = [1, 1]} : vector<2x9xf32> to vector<2x3xf32>
    %346 = arith.mulf %344, %321 : vector<2x3xf32>
    %347 = arith.mulf %343, %342 : vector<2x3xf32>
    %348 = arith.addf %346, %347 : vector<2x3xf32>
    %349 = math.tanh %348 : vector<2x3xf32>
    %350 = arith.mulf %345, %349 : vector<2x3xf32>
    %c0_45 = arith.constant 0 : index
    %c0_46 = arith.constant 0 : index
    %351 = vector.load %arg7[%c0_45, %c0_46] : memref<16x3xf32, #tpu.memory_space<vmem>>, vector<2x3xf32>
    tpu.vector_store %arg7[%c0_45, %c0_46], %350 {strides = array<i32>} : memref<16x3xf32, #tpu.memory_space<vmem>>, vector<2x3xf32>,
    %352 = vector.extract_strided_slice %350 {offsets = [0, 0], sizes = [2, 1], strides = [1, 1]} : vector<2x3xf32> to vector<2x1xf32>
    %353 = vector.broadcast %352 : vector<2x1xf32> to vector<2x12xf32>
    %354 = arith.mulf %353, %313 : vector<2x12xf32>
    %355 = vector.extract_strided_slice %350 {offsets = [0, 1], sizes = [2, 1], strides = [1, 1]} : vector<2x3xf32> to vector<2x1xf32>
    %356 = vector.broadcast %355 : vector<2x1xf32> to vector<2x12xf32>
    %357 = arith.mulf %356, %316 : vector<2x12xf32>
    %358 = arith.addf %354, %357 : vector<2x12xf32>
    %359 = vector.extract_strided_slice %350 {offsets = [0, 2], sizes = [2, 1], strides = [1, 1]} : vector<2x3xf32> to vector<2x1xf32>
    %360 = vector.broadcast %359 : vector<2x1xf32> to vector<2x12xf32>
    %361 = arith.mulf %360, %319 : vector<2x12xf32>
    %362 = arith.addf %358, %361 : vector<2x12xf32>
    %363 = vector.extract_strided_slice %308 {offsets = [2, 0], sizes = [2, 12], strides = [1, 1]} : vector<16x12xf32> to vector<2x12xf32>
    %364 = arith.addf %363, %362 : vector<2x12xf32>
    %365 = vector.extract_strided_slice %364 {offsets = [0, 0], sizes = [2, 9], strides = [1, 1]} : vector<2x12xf32> to vector<2x9xf32>
    %366 = arith.negf %365 : vector<2x9xf32>
    %367 = math.exp %366 : vector<2x9xf32>
    %cst_47 = arith.constant 1.000000e+00 : f32
    %368 = vector.broadcast %cst_47 : f32 to vector<2x9xf32>
    %369 = arith.addf %368, %367 : vector<2x9xf32>
    %370 = arith.divf %368, %369 : vector<2x9xf32>
    %371 = vector.extract_strided_slice %364 {offsets = [0, 9], sizes = [2, 3], strides = [1, 1]} : vector<2x12xf32> to vector<2x3xf32>
    %372 = math.tanh %371 : vector<2x3xf32>
    %373 = vector.extract_strided_slice %370 {offsets = [0, 0], sizes = [2, 3], strides = [1, 1]} : vector<2x9xf32> to vector<2x3xf32>
    %374 = vector.extract_strided_slice %370 {offsets = [0, 3], sizes = [2, 3], strides = [1, 1]} : vector<2x9xf32> to vector<2x3xf32>
    %375 = vector.extract_strided_slice %370 {offsets = [0, 6], sizes = [2, 3], strides = [1, 1]} : vector<2x9xf32> to vector<2x3xf32>
    %376 = arith.mulf %374, %348 : vector<2x3xf32>
    %377 = arith.mulf %373, %372 : vector<2x3xf32>
    %378 = arith.addf %376, %377 : vector<2x3xf32>
    %379 = math.tanh %378 : vector<2x3xf32>
    %380 = arith.mulf %375, %379 : vector<2x3xf32>
    %c2_48 = arith.constant 2 : index
    %c0_49 = arith.constant 0 : index
    %381 = vector.load %arg7[%c2_48, %c0_49] : memref<16x3xf32, #tpu.memory_space<vmem>>, vector<2x3xf32>
    tpu.vector_store %arg7[%c2_48, %c0_49], %380 {strides = array<i32>} : memref<16x3xf32, #tpu.memory_space<vmem>>, vector<2x3xf32>,
    %382 = vector.extract_strided_slice %380 {offsets = [0, 0], sizes = [2, 1], strides = [1, 1]} : vector<2x3xf32> to vector<2x1xf32>
    %383 = vector.broadcast %382 : vector<2x1xf32> to vector<2x12xf32>
    %384 = arith.mulf %383, %313 : vector<2x12xf32>
    %385 = vector.extract_strided_slice %380 {offsets = [0, 1], sizes = [2, 1], strides = [1, 1]} : vector<2x3xf32> to vector<2x1xf32>
    %386 = vector.broadcast %385 : vector<2x1xf32> to vector<2x12xf32>
    %387 = arith.mulf %386, %316 : vector<2x12xf32>
    %388 = arith.addf %384, %387 : vector<2x12xf32>
    %389 = vector.extract_strided_slice %380 {offsets = [0, 2], sizes = [2, 1], strides = [1, 1]} : vector<2x3xf32> to vector<2x1xf32>
    %390 = vector.broadcast %389 : vector<2x1xf32> to vector<2x12xf32>
    %391 = arith.mulf %390, %319 : vector<2x12xf32>
    %392 = arith.addf %388, %391 : vector<2x12xf32>
    %393 = vector.extract_strided_slice %308 {offsets = [4, 0], sizes = [2, 12], strides = [1, 1]} : vector<16x12xf32> to vector<2x12xf32>
    %394 = arith.addf %393, %392 : vector<2x12xf32>
    %395 = vector.extract_strided_slice %394 {offsets = [0, 0], sizes = [2, 9], strides = [1, 1]} : vector<2x12xf32> to vector<2x9xf32>
    %396 = arith.negf %395 : vector<2x9xf32>
    %397 = math.exp %396 : vector<2x9xf32>
    %cst_50 = arith.constant 1.000000e+00 : f32
    %398 = vector.broadcast %cst_50 : f32 to vector<2x9xf32>
    %399 = arith.addf %398, %397 : vector<2x9xf32>
    %400 = arith.divf %398, %399 : vector<2x9xf32>
    %401 = vector.extract_strided_slice %394 {offsets = [0, 9], sizes = [2, 3], strides = [1, 1]} : vector<2x12xf32> to vector<2x3xf32>
    %402 = math.tanh %401 : vector<2x3xf32>
    %403 = vector.extract_strided_slice %400 {offsets = [0, 0], sizes = [2, 3], strides = [1, 1]} : vector<2x9xf32> to vector<2x3xf32>
    %404 = vector.extract_strided_slice %400 {offsets = [0, 3], sizes = [2, 3], strides = [1, 1]} : vector<2x9xf32> to vector<2x3xf32>
    %405 = vector.extract_strided_slice %400 {offsets = [0, 6], sizes = [2, 3], strides = [1, 1]} : vector<2x9xf32> to vector<2x3xf32>
    %406 = arith.mulf %404, %378 : vector<2x3xf32>
    %407 = arith.mulf %403, %402 : vector<2x3xf32>
    %408 = arith.addf %406, %407 : vector<2x3xf32>
    %409 = math.tanh %408 : vector<2x3xf32>
    %410 = arith.mulf %405, %409 : vector<2x3xf32>
    %c4_51 = arith.constant 4 : index
    %c0_52 = arith.constant 0 : index
    %411 = vector.load %arg7[%c4_51, %c0_52] : memref<16x3xf32, #tpu.memory_space<vmem>>, vector<2x3xf32>
    tpu.vector_store %arg7[%c4_51, %c0_52], %410 {strides = array<i32>} : memref<16x3xf32, #tpu.memory_space<vmem>>, vector<2x3xf32>,
    %412 = vector.extract_strided_slice %410 {offsets = [0, 0], sizes = [2, 1], strides = [1, 1]} : vector<2x3xf32> to vector<2x1xf32>
    %413 = vector.broadcast %412 : vector<2x1xf32> to vector<2x12xf32>
    %414 = arith.mulf %413, %313 : vector<2x12xf32>
    %415 = vector.extract_strided_slice %410 {offsets = [0, 1], sizes = [2, 1], strides = [1, 1]} : vector<2x3xf32> to vector<2x1xf32>
    %416 = vector.broadcast %415 : vector<2x1xf32> to vector<2x12xf32>
    %417 = arith.mulf %416, %316 : vector<2x12xf32>
    %418 = arith.addf %414, %417 : vector<2x12xf32>
    %419 = vector.extract_strided_slice %410 {offsets = [0, 2], sizes = [2, 1], strides = [1, 1]} : vector<2x3xf32> to vector<2x1xf32>
    %420 = vector.broadcast %419 : vector<2x1xf32> to vector<2x12xf32>
    %421 = arith.mulf %420, %319 : vector<2x12xf32>
    %422 = arith.addf %418, %421 : vector<2x12xf32>
    %423 = vector.extract_strided_slice %308 {offsets = [6, 0], sizes = [2, 12], strides = [1, 1]} : vector<16x12xf32> to vector<2x12xf32>
    %424 = arith.addf %423, %422 : vector<2x12xf32>
    %425 = vector.extract_strided_slice %424 {offsets = [0, 0], sizes = [2, 9], strides = [1, 1]} : vector<2x12xf32> to vector<2x9xf32>
    %426 = arith.negf %425 : vector<2x9xf32>
    %427 = math.exp %426 : vector<2x9xf32>
    %cst_53 = arith.constant 1.000000e+00 : f32
    %428 = vector.broadcast %cst_53 : f32 to vector<2x9xf32>
    %429 = arith.addf %428, %427 : vector<2x9xf32>
    %430 = arith.divf %428, %429 : vector<2x9xf32>
    %431 = vector.extract_strided_slice %424 {offsets = [0, 9], sizes = [2, 3], strides = [1, 1]} : vector<2x12xf32> to vector<2x3xf32>
    %432 = math.tanh %431 : vector<2x3xf32>
    %433 = vector.extract_strided_slice %430 {offsets = [0, 0], sizes = [2, 3], strides = [1, 1]} : vector<2x9xf32> to vector<2x3xf32>
    %434 = vector.extract_strided_slice %430 {offsets = [0, 3], sizes = [2, 3], strides = [1, 1]} : vector<2x9xf32> to vector<2x3xf32>
    %435 = vector.extract_strided_slice %430 {offsets = [0, 6], sizes = [2, 3], strides = [1, 1]} : vector<2x9xf32> to vector<2x3xf32>
    %436 = arith.mulf %434, %408 : vector<2x3xf32>
    %437 = arith.mulf %433, %432 : vector<2x3xf32>
    %438 = arith.addf %436, %437 : vector<2x3xf32>
    %439 = math.tanh %438 : vector<2x3xf32>
    %440 = arith.mulf %435, %439 : vector<2x3xf32>
    %c6_54 = arith.constant 6 : index
    %c0_55 = arith.constant 0 : index
    %441 = vector.load %arg7[%c6_54, %c0_55] : memref<16x3xf32, #tpu.memory_space<vmem>>, vector<2x3xf32>
    tpu.vector_store %arg7[%c6_54, %c0_55], %440 {strides = array<i32>} : memref<16x3xf32, #tpu.memory_space<vmem>>, vector<2x3xf32>,
    %442 = vector.extract_strided_slice %440 {offsets = [0, 0], sizes = [2, 1], strides = [1, 1]} : vector<2x3xf32> to vector<2x1xf32>
    %443 = vector.broadcast %442 : vector<2x1xf32> to vector<2x12xf32>
    %444 = arith.mulf %443, %313 : vector<2x12xf32>
    %445 = vector.extract_strided_slice %440 {offsets = [0, 1], sizes = [2, 1], strides = [1, 1]} : vector<2x3xf32> to vector<2x1xf32>
    %446 = vector.broadcast %445 : vector<2x1xf32> to vector<2x12xf32>
    %447 = arith.mulf %446, %316 : vector<2x12xf32>
    %448 = arith.addf %444, %447 : vector<2x12xf32>
    %449 = vector.extract_strided_slice %440 {offsets = [0, 2], sizes = [2, 1], strides = [1, 1]} : vector<2x3xf32> to vector<2x1xf32>
    %450 = vector.broadcast %449 : vector<2x1xf32> to vector<2x12xf32>
    %451 = arith.mulf %450, %319 : vector<2x12xf32>
    %452 = arith.addf %448, %451 : vector<2x12xf32>
    %453 = vector.extract_strided_slice %308 {offsets = [8, 0], sizes = [2, 12], strides = [1, 1]} : vector<16x12xf32> to vector<2x12xf32>
    %454 = arith.addf %453, %452 : vector<2x12xf32>
    %455 = vector.extract_strided_slice %454 {offsets = [0, 0], sizes = [2, 9], strides = [1, 1]} : vector<2x12xf32> to vector<2x9xf32>
    %456 = arith.negf %455 : vector<2x9xf32>
    %457 = math.exp %456 : vector<2x9xf32>
    %cst_56 = arith.constant 1.000000e+00 : f32
    %458 = vector.broadcast %cst_56 : f32 to vector<2x9xf32>
    %459 = arith.addf %458, %457 : vector<2x9xf32>
    %460 = arith.divf %458, %459 : vector<2x9xf32>
    %461 = vector.extract_strided_slice %454 {offsets = [0, 9], sizes = [2, 3], strides = [1, 1]} : vector<2x12xf32> to vector<2x3xf32>
    %462 = math.tanh %461 : vector<2x3xf32>
    %463 = vector.extract_strided_slice %460 {offsets = [0, 0], sizes = [2, 3], strides = [1, 1]} : vector<2x9xf32> to vector<2x3xf32>
    %464 = vector.extract_strided_slice %460 {offsets = [0, 3], sizes = [2, 3], strides = [1, 1]} : vector<2x9xf32> to vector<2x3xf32>
    %465 = vector.extract_strided_slice %460 {offsets = [0, 6], sizes = [2, 3], strides = [1, 1]} : vector<2x9xf32> to vector<2x3xf32>
    %466 = arith.mulf %464, %438 : vector<2x3xf32>
    %467 = arith.mulf %463, %462 : vector<2x3xf32>
    %468 = arith.addf %466, %467 : vector<2x3xf32>
    %469 = math.tanh %468 : vector<2x3xf32>
    %470 = arith.mulf %465, %469 : vector<2x3xf32>
    %c8_57 = arith.constant 8 : index
    %c0_58 = arith.constant 0 : index
    %471 = vector.load %arg7[%c8_57, %c0_58] : memref<16x3xf32, #tpu.memory_space<vmem>>, vector<2x3xf32>
    tpu.vector_store %arg7[%c8_57, %c0_58], %470 {strides = array<i32>} : memref<16x3xf32, #tpu.memory_space<vmem>>, vector<2x3xf32>,
    %472 = vector.extract_strided_slice %470 {offsets = [0, 0], sizes = [2, 1], strides = [1, 1]} : vector<2x3xf32> to vector<2x1xf32>
    %473 = vector.broadcast %472 : vector<2x1xf32> to vector<2x12xf32>
    %474 = arith.mulf %473, %313 : vector<2x12xf32>
    %475 = vector.extract_strided_slice %470 {offsets = [0, 1], sizes = [2, 1], strides = [1, 1]} : vector<2x3xf32> to vector<2x1xf32>
    %476 = vector.broadcast %475 : vector<2x1xf32> to vector<2x12xf32>
    %477 = arith.mulf %476, %316 : vector<2x12xf32>
    %478 = arith.addf %474, %477 : vector<2x12xf32>
    %479 = vector.extract_strided_slice %470 {offsets = [0, 2], sizes = [2, 1], strides = [1, 1]} : vector<2x3xf32> to vector<2x1xf32>
    %480 = vector.broadcast %479 : vector<2x1xf32> to vector<2x12xf32>
    %481 = arith.mulf %480, %319 : vector<2x12xf32>
    %482 = arith.addf %478, %481 : vector<2x12xf32>
    %483 = vector.extract_strided_slice %308 {offsets = [10, 0], sizes = [2, 12], strides = [1, 1]} : vector<16x12xf32> to vector<2x12xf32>
    %484 = arith.addf %483, %482 : vector<2x12xf32>
    %485 = vector.extract_strided_slice %484 {offsets = [0, 0], sizes = [2, 9], strides = [1, 1]} : vector<2x12xf32> to vector<2x9xf32>
    %486 = arith.negf %485 : vector<2x9xf32>
    %487 = math.exp %486 : vector<2x9xf32>
    %cst_59 = arith.constant 1.000000e+00 : f32
    %488 = vector.broadcast %cst_59 : f32 to vector<2x9xf32>
    %489 = arith.addf %488, %487 : vector<2x9xf32>
    %490 = arith.divf %488, %489 : vector<2x9xf32>
    %491 = vector.extract_strided_slice %484 {offsets = [0, 9], sizes = [2, 3], strides = [1, 1]} : vector<2x12xf32> to vector<2x3xf32>
    %492 = math.tanh %491 : vector<2x3xf32>
    %493 = vector.extract_strided_slice %490 {offsets = [0, 0], sizes = [2, 3], strides = [1, 1]} : vector<2x9xf32> to vector<2x3xf32>
    %494 = vector.extract_strided_slice %490 {offsets = [0, 3], sizes = [2, 3], strides = [1, 1]} : vector<2x9xf32> to vector<2x3xf32>
    %495 = vector.extract_strided_slice %490 {offsets = [0, 6], sizes = [2, 3], strides = [1, 1]} : vector<2x9xf32> to vector<2x3xf32>
    %496 = arith.mulf %494, %468 : vector<2x3xf32>
    %497 = arith.mulf %493, %492 : vector<2x3xf32>
    %498 = arith.addf %496, %497 : vector<2x3xf32>
    %499 = math.tanh %498 : vector<2x3xf32>
    %500 = arith.mulf %495, %499 : vector<2x3xf32>
    %c10_60 = arith.constant 10 : index
    %c0_61 = arith.constant 0 : index
    %501 = vector.load %arg7[%c10_60, %c0_61] : memref<16x3xf32, #tpu.memory_space<vmem>>, vector<2x3xf32>
    tpu.vector_store %arg7[%c10_60, %c0_61], %500 {strides = array<i32>} : memref<16x3xf32, #tpu.memory_space<vmem>>, vector<2x3xf32>,
    %502 = vector.extract_strided_slice %500 {offsets = [0, 0], sizes = [2, 1], strides = [1, 1]} : vector<2x3xf32> to vector<2x1xf32>
    %503 = vector.broadcast %502 : vector<2x1xf32> to vector<2x12xf32>
    %504 = arith.mulf %503, %313 : vector<2x12xf32>
    %505 = vector.extract_strided_slice %500 {offsets = [0, 1], sizes = [2, 1], strides = [1, 1]} : vector<2x3xf32> to vector<2x1xf32>
    %506 = vector.broadcast %505 : vector<2x1xf32> to vector<2x12xf32>
    %507 = arith.mulf %506, %316 : vector<2x12xf32>
    %508 = arith.addf %504, %507 : vector<2x12xf32>
    %509 = vector.extract_strided_slice %500 {offsets = [0, 2], sizes = [2, 1], strides = [1, 1]} : vector<2x3xf32> to vector<2x1xf32>
    %510 = vector.broadcast %509 : vector<2x1xf32> to vector<2x12xf32>
    %511 = arith.mulf %510, %319 : vector<2x12xf32>
    %512 = arith.addf %508, %511 : vector<2x12xf32>
    %513 = vector.extract_strided_slice %308 {offsets = [12, 0], sizes = [2, 12], strides = [1, 1]} : vector<16x12xf32> to vector<2x12xf32>
    %514 = arith.addf %513, %512 : vector<2x12xf32>
    %515 = vector.extract_strided_slice %514 {offsets = [0, 0], sizes = [2, 9], strides = [1, 1]} : vector<2x12xf32> to vector<2x9xf32>
    %516 = arith.negf %515 : vector<2x9xf32>
    %517 = math.exp %516 : vector<2x9xf32>
    %cst_62 = arith.constant 1.000000e+00 : f32
    %518 = vector.broadcast %cst_62 : f32 to vector<2x9xf32>
    %519 = arith.addf %518, %517 : vector<2x9xf32>
    %520 = arith.divf %518, %519 : vector<2x9xf32>
    %521 = vector.extract_strided_slice %514 {offsets = [0, 9], sizes = [2, 3], strides = [1, 1]} : vector<2x12xf32> to vector<2x3xf32>
    %522 = math.tanh %521 : vector<2x3xf32>
    %523 = vector.extract_strided_slice %520 {offsets = [0, 0], sizes = [2, 3], strides = [1, 1]} : vector<2x9xf32> to vector<2x3xf32>
    %524 = vector.extract_strided_slice %520 {offsets = [0, 3], sizes = [2, 3], strides = [1, 1]} : vector<2x9xf32> to vector<2x3xf32>
    %525 = vector.extract_strided_slice %520 {offsets = [0, 6], sizes = [2, 3], strides = [1, 1]} : vector<2x9xf32> to vector<2x3xf32>
    %526 = arith.mulf %524, %498 : vector<2x3xf32>
    %527 = arith.mulf %523, %522 : vector<2x3xf32>
    %528 = arith.addf %526, %527 : vector<2x3xf32>
    %529 = math.tanh %528 : vector<2x3xf32>
    %530 = arith.mulf %525, %529 : vector<2x3xf32>
    %c12_63 = arith.constant 12 : index
    %c0_64 = arith.constant 0 : index
    %531 = vector.load %arg7[%c12_63, %c0_64] : memref<16x3xf32, #tpu.memory_space<vmem>>, vector<2x3xf32>
    tpu.vector_store %arg7[%c12_63, %c0_64], %530 {strides = array<i32>} : memref<16x3xf32, #tpu.memory_space<vmem>>, vector<2x3xf32>,
    %532 = vector.extract_strided_slice %530 {offsets = [0, 0], sizes = [2, 1], strides = [1, 1]} : vector<2x3xf32> to vector<2x1xf32>
    %533 = vector.broadcast %532 : vector<2x1xf32> to vector<2x12xf32>
    %534 = arith.mulf %533, %313 : vector<2x12xf32>
    %535 = vector.extract_strided_slice %530 {offsets = [0, 1], sizes = [2, 1], strides = [1, 1]} : vector<2x3xf32> to vector<2x1xf32>
    %536 = vector.broadcast %535 : vector<2x1xf32> to vector<2x12xf32>
    %537 = arith.mulf %536, %316 : vector<2x12xf32>
    %538 = arith.addf %534, %537 : vector<2x12xf32>
    %539 = vector.extract_strided_slice %530 {offsets = [0, 2], sizes = [2, 1], strides = [1, 1]} : vector<2x3xf32> to vector<2x1xf32>
    %540 = vector.broadcast %539 : vector<2x1xf32> to vector<2x12xf32>
    %541 = arith.mulf %540, %319 : vector<2x12xf32>
    %542 = arith.addf %538, %541 : vector<2x12xf32>
    %543 = vector.extract_strided_slice %308 {offsets = [14, 0], sizes = [2, 12], strides = [1, 1]} : vector<16x12xf32> to vector<2x12xf32>
    %544 = arith.addf %543, %542 : vector<2x12xf32>
    %545 = vector.extract_strided_slice %544 {offsets = [0, 0], sizes = [2, 9], strides = [1, 1]} : vector<2x12xf32> to vector<2x9xf32>
    %546 = arith.negf %545 : vector<2x9xf32>
    %547 = math.exp %546 : vector<2x9xf32>
    %cst_65 = arith.constant 1.000000e+00 : f32
    %548 = vector.broadcast %cst_65 : f32 to vector<2x9xf32>
    %549 = arith.addf %548, %547 : vector<2x9xf32>
    %550 = arith.divf %548, %549 : vector<2x9xf32>
    %551 = vector.extract_strided_slice %544 {offsets = [0, 9], sizes = [2, 3], strides = [1, 1]} : vector<2x12xf32> to vector<2x3xf32>
    %552 = math.tanh %551 : vector<2x3xf32>
    %553 = vector.extract_strided_slice %550 {offsets = [0, 0], sizes = [2, 3], strides = [1, 1]} : vector<2x9xf32> to vector<2x3xf32>
    %554 = vector.extract_strided_slice %550 {offsets = [0, 3], sizes = [2, 3], strides = [1, 1]} : vector<2x9xf32> to vector<2x3xf32>
    %555 = vector.extract_strided_slice %550 {offsets = [0, 6], sizes = [2, 3], strides = [1, 1]} : vector<2x9xf32> to vector<2x3xf32>
    %556 = arith.mulf %554, %528 : vector<2x3xf32>
    %557 = arith.mulf %553, %552 : vector<2x3xf32>
    %558 = arith.addf %556, %557 : vector<2x3xf32>
    %559 = math.tanh %558 : vector<2x3xf32>
    %560 = arith.mulf %555, %559 : vector<2x3xf32>
    %c14_66 = arith.constant 14 : index
    %c0_67 = arith.constant 0 : index
    %561 = vector.load %arg7[%c14_66, %c0_67] : memref<16x3xf32, #tpu.memory_space<vmem>>, vector<2x3xf32>
    tpu.vector_store %arg7[%c14_66, %c0_67], %560 {strides = array<i32>} : memref<16x3xf32, #tpu.memory_space<vmem>>, vector<2x3xf32>,
    %c0_68 = arith.constant 0 : index
    %c0_69 = arith.constant 0 : index
    %562 = vector.load %arg7[%c0_68, %c0_69] : memref<16x3xf32, #tpu.memory_space<vmem>>, vector<16x3xf32>
    %c2_70 = arith.constant 2 : index
    %c0_71 = arith.constant 0 : index
    %c0_72 = arith.constant 0 : index
    %563 = vector.load %arg1[%c2_70, %c0_71, %c0_72] : memref<5x3x12xf32, #tpu.memory_space<vmem>>, vector<1x3x12xf32>
    %564 = vector.shape_cast %563 : vector<1x3x12xf32> to vector<3x12xf32>
    %565 = vector.extract_strided_slice %562 {offsets = [0, 0], sizes = [16, 1], strides = [1, 1]} : vector<16x3xf32> to vector<16x1xf32>
    %566 = vector.extract_strided_slice %564 {offsets = [0, 0], sizes = [1, 12], strides = [1, 1]} : vector<3x12xf32> to vector<1x12xf32>
    %567 = vector.shape_cast %566 : vector<1x12xf32> to vector<1x12xf32>
    %568 = vector.broadcast %567 : vector<1x12xf32> to vector<16x12xf32>
    %569 = vector.broadcast %565 : vector<16x1xf32> to vector<16x12xf32>
    %570 = arith.mulf %569, %568 : vector<16x12xf32>
    %571 = vector.extract_strided_slice %562 {offsets = [0, 1], sizes = [16, 1], strides = [1, 1]} : vector<16x3xf32> to vector<16x1xf32>
    %572 = vector.extract_strided_slice %564 {offsets = [1, 0], sizes = [1, 12], strides = [1, 1]} : vector<3x12xf32> to vector<1x12xf32>
    %573 = vector.shape_cast %572 : vector<1x12xf32> to vector<1x12xf32>
    %574 = vector.broadcast %573 : vector<1x12xf32> to vector<16x12xf32>
    %575 = vector.broadcast %571 : vector<16x1xf32> to vector<16x12xf32>
    %576 = arith.mulf %575, %574 : vector<16x12xf32>
    %577 = arith.addf %570, %576 : vector<16x12xf32>
    %578 = vector.extract_strided_slice %562 {offsets = [0, 2], sizes = [16, 1], strides = [1, 1]} : vector<16x3xf32> to vector<16x1xf32>
    %579 = vector.extract_strided_slice %564 {offsets = [2, 0], sizes = [1, 12], strides = [1, 1]} : vector<3x12xf32> to vector<1x12xf32>
    %580 = vector.shape_cast %579 : vector<1x12xf32> to vector<1x12xf32>
    %581 = vector.broadcast %580 : vector<1x12xf32> to vector<16x12xf32>
    %582 = vector.broadcast %578 : vector<16x1xf32> to vector<16x12xf32>
    %583 = arith.mulf %582, %581 : vector<16x12xf32>
    %584 = arith.addf %577, %583 : vector<16x12xf32>
    %c2_73 = arith.constant 2 : index
    %c0_74 = arith.constant 0 : index
    %c0_75 = arith.constant 0 : index
    %585 = vector.load %arg3[%c2_73, %c0_74, %c0_75] : memref<5x1x12xf32, #tpu.memory_space<vmem>>, vector<1x1x12xf32>
    %586 = vector.shape_cast %585 : vector<1x1x12xf32> to vector<1x12xf32>
    %587 = vector.broadcast %586 : vector<1x12xf32> to vector<16x12xf32>
    %588 = arith.addf %584, %587 : vector<16x12xf32>
    %c2_76 = arith.constant 2 : index
    %c0_77 = arith.constant 0 : index
    %c0_78 = arith.constant 0 : index
    %589 = vector.load %arg2[%c2_76, %c0_77, %c0_78] : memref<5x3x12xf32, #tpu.memory_space<vmem>>, vector<1x3x12xf32>
    %590 = vector.shape_cast %589 : vector<1x3x12xf32> to vector<3x12xf32>
    %591 = vector.extract_strided_slice %590 {offsets = [0, 0], sizes = [1, 12], strides = [1, 1]} : vector<3x12xf32> to vector<1x12xf32>
    %592 = vector.shape_cast %591 : vector<1x12xf32> to vector<1x12xf32>
    %593 = vector.broadcast %592 : vector<1x12xf32> to vector<2x12xf32>
    %594 = vector.extract_strided_slice %590 {offsets = [1, 0], sizes = [1, 12], strides = [1, 1]} : vector<3x12xf32> to vector<1x12xf32>
    %595 = vector.shape_cast %594 : vector<1x12xf32> to vector<1x12xf32>
    %596 = vector.broadcast %595 : vector<1x12xf32> to vector<2x12xf32>
    %597 = vector.extract_strided_slice %590 {offsets = [2, 0], sizes = [1, 12], strides = [1, 1]} : vector<3x12xf32> to vector<1x12xf32>
    %598 = vector.shape_cast %597 : vector<1x12xf32> to vector<1x12xf32>
    %599 = vector.broadcast %598 : vector<1x12xf32> to vector<2x12xf32>
    %cst_79 = arith.constant 0.000000e+00 : f32
    %600 = vector.broadcast %cst_79 : f32 to vector<2x3xf32>
    %cst_80 = arith.constant 0.000000e+00 : f32
    %601 = vector.broadcast %cst_80 : f32 to vector<2x3xf32>
    %602 = vector.extract_strided_slice %600 {offsets = [0, 0], sizes = [2, 1], strides = [1, 1]} : vector<2x3xf32> to vector<2x1xf32>
    %603 = vector.broadcast %602 : vector<2x1xf32> to vector<2x12xf32>
    %604 = arith.mulf %603, %593 : vector<2x12xf32>
    %605 = vector.extract_strided_slice %600 {offsets = [0, 1], sizes = [2, 1], strides = [1, 1]} : vector<2x3xf32> to vector<2x1xf32>
    %606 = vector.broadcast %605 : vector<2x1xf32> to vector<2x12xf32>
    %607 = arith.mulf %606, %596 : vector<2x12xf32>
    %608 = arith.addf %604, %607 : vector<2x12xf32>
    %609 = vector.extract_strided_slice %600 {offsets = [0, 2], sizes = [2, 1], strides = [1, 1]} : vector<2x3xf32> to vector<2x1xf32>
    %610 = vector.broadcast %609 : vector<2x1xf32> to vector<2x12xf32>
    %611 = arith.mulf %610, %599 : vector<2x12xf32>
    %612 = arith.addf %608, %611 : vector<2x12xf32>
    %613 = vector.extract_strided_slice %588 {offsets = [0, 0], sizes = [2, 12], strides = [1, 1]} : vector<16x12xf32> to vector<2x12xf32>
    %614 = arith.addf %613, %612 : vector<2x12xf32>
    %615 = vector.extract_strided_slice %614 {offsets = [0, 0], sizes = [2, 9], strides = [1, 1]} : vector<2x12xf32> to vector<2x9xf32>
    %616 = arith.negf %615 : vector<2x9xf32>
    %617 = math.exp %616 : vector<2x9xf32>
    %cst_81 = arith.constant 1.000000e+00 : f32
    %618 = vector.broadcast %cst_81 : f32 to vector<2x9xf32>
    %619 = arith.addf %618, %617 : vector<2x9xf32>
    %620 = arith.divf %618, %619 : vector<2x9xf32>
    %621 = vector.extract_strided_slice %614 {offsets = [0, 9], sizes = [2, 3], strides = [1, 1]} : vector<2x12xf32> to vector<2x3xf32>
    %622 = math.tanh %621 : vector<2x3xf32>
    %623 = vector.extract_strided_slice %620 {offsets = [0, 0], sizes = [2, 3], strides = [1, 1]} : vector<2x9xf32> to vector<2x3xf32>
    %624 = vector.extract_strided_slice %620 {offsets = [0, 3], sizes = [2, 3], strides = [1, 1]} : vector<2x9xf32> to vector<2x3xf32>
    %625 = vector.extract_strided_slice %620 {offsets = [0, 6], sizes = [2, 3], strides = [1, 1]} : vector<2x9xf32> to vector<2x3xf32>
    %626 = arith.mulf %624, %601 : vector<2x3xf32>
    %627 = arith.mulf %623, %622 : vector<2x3xf32>
    %628 = arith.addf %626, %627 : vector<2x3xf32>
    %629 = math.tanh %628 : vector<2x3xf32>
    %630 = arith.mulf %625, %629 : vector<2x3xf32>
    %c0_82 = arith.constant 0 : index
    %c0_83 = arith.constant 0 : index
    %631 = vector.load %arg7[%c0_82, %c0_83] : memref<16x3xf32, #tpu.memory_space<vmem>>, vector<2x3xf32>
    tpu.vector_store %arg7[%c0_82, %c0_83], %630 {strides = array<i32>} : memref<16x3xf32, #tpu.memory_space<vmem>>, vector<2x3xf32>,
    %632 = vector.extract_strided_slice %630 {offsets = [0, 0], sizes = [2, 1], strides = [1, 1]} : vector<2x3xf32> to vector<2x1xf32>
    %633 = vector.broadcast %632 : vector<2x1xf32> to vector<2x12xf32>
    %634 = arith.mulf %633, %593 : vector<2x12xf32>
    %635 = vector.extract_strided_slice %630 {offsets = [0, 1], sizes = [2, 1], strides = [1, 1]} : vector<2x3xf32> to vector<2x1xf32>
    %636 = vector.broadcast %635 : vector<2x1xf32> to vector<2x12xf32>
    %637 = arith.mulf %636, %596 : vector<2x12xf32>
    %638 = arith.addf %634, %637 : vector<2x12xf32>
    %639 = vector.extract_strided_slice %630 {offsets = [0, 2], sizes = [2, 1], strides = [1, 1]} : vector<2x3xf32> to vector<2x1xf32>
    %640 = vector.broadcast %639 : vector<2x1xf32> to vector<2x12xf32>
    %641 = arith.mulf %640, %599 : vector<2x12xf32>
    %642 = arith.addf %638, %641 : vector<2x12xf32>
    %643 = vector.extract_strided_slice %588 {offsets = [2, 0], sizes = [2, 12], strides = [1, 1]} : vector<16x12xf32> to vector<2x12xf32>
    %644 = arith.addf %643, %642 : vector<2x12xf32>
    %645 = vector.extract_strided_slice %644 {offsets = [0, 0], sizes = [2, 9], strides = [1, 1]} : vector<2x12xf32> to vector<2x9xf32>
    %646 = arith.negf %645 : vector<2x9xf32>
    %647 = math.exp %646 : vector<2x9xf32>
    %cst_84 = arith.constant 1.000000e+00 : f32
    %648 = vector.broadcast %cst_84 : f32 to vector<2x9xf32>
    %649 = arith.addf %648, %647 : vector<2x9xf32>
    %650 = arith.divf %648, %649 : vector<2x9xf32>
    %651 = vector.extract_strided_slice %644 {offsets = [0, 9], sizes = [2, 3], strides = [1, 1]} : vector<2x12xf32> to vector<2x3xf32>
    %652 = math.tanh %651 : vector<2x3xf32>
    %653 = vector.extract_strided_slice %650 {offsets = [0, 0], sizes = [2, 3], strides = [1, 1]} : vector<2x9xf32> to vector<2x3xf32>
    %654 = vector.extract_strided_slice %650 {offsets = [0, 3], sizes = [2, 3], strides = [1, 1]} : vector<2x9xf32> to vector<2x3xf32>
    %655 = vector.extract_strided_slice %650 {offsets = [0, 6], sizes = [2, 3], strides = [1, 1]} : vector<2x9xf32> to vector<2x3xf32>
    %656 = arith.mulf %654, %628 : vector<2x3xf32>
    %657 = arith.mulf %653, %652 : vector<2x3xf32>
    %658 = arith.addf %656, %657 : vector<2x3xf32>
    %659 = math.tanh %658 : vector<2x3xf32>
    %660 = arith.mulf %655, %659 : vector<2x3xf32>
    %c2_85 = arith.constant 2 : index
    %c0_86 = arith.constant 0 : index
    %661 = vector.load %arg7[%c2_85, %c0_86] : memref<16x3xf32, #tpu.memory_space<vmem>>, vector<2x3xf32>
    tpu.vector_store %arg7[%c2_85, %c0_86], %660 {strides = array<i32>} : memref<16x3xf32, #tpu.memory_space<vmem>>, vector<2x3xf32>,
    %662 = vector.extract_strided_slice %660 {offsets = [0, 0], sizes = [2, 1], strides = [1, 1]} : vector<2x3xf32> to vector<2x1xf32>
    %663 = vector.broadcast %662 : vector<2x1xf32> to vector<2x12xf32>
    %664 = arith.mulf %663, %593 : vector<2x12xf32>
    %665 = vector.extract_strided_slice %660 {offsets = [0, 1], sizes = [2, 1], strides = [1, 1]} : vector<2x3xf32> to vector<2x1xf32>
    %666 = vector.broadcast %665 : vector<2x1xf32> to vector<2x12xf32>
    %667 = arith.mulf %666, %596 : vector<2x12xf32>
    %668 = arith.addf %664, %667 : vector<2x12xf32>
    %669 = vector.extract_strided_slice %660 {offsets = [0, 2], sizes = [2, 1], strides = [1, 1]} : vector<2x3xf32> to vector<2x1xf32>
    %670 = vector.broadcast %669 : vector<2x1xf32> to vector<2x12xf32>
    %671 = arith.mulf %670, %599 : vector<2x12xf32>
    %672 = arith.addf %668, %671 : vector<2x12xf32>
    %673 = vector.extract_strided_slice %588 {offsets = [4, 0], sizes = [2, 12], strides = [1, 1]} : vector<16x12xf32> to vector<2x12xf32>
    %674 = arith.addf %673, %672 : vector<2x12xf32>
    %675 = vector.extract_strided_slice %674 {offsets = [0, 0], sizes = [2, 9], strides = [1, 1]} : vector<2x12xf32> to vector<2x9xf32>
    %676 = arith.negf %675 : vector<2x9xf32>
    %677 = math.exp %676 : vector<2x9xf32>
    %cst_87 = arith.constant 1.000000e+00 : f32
    %678 = vector.broadcast %cst_87 : f32 to vector<2x9xf32>
    %679 = arith.addf %678, %677 : vector<2x9xf32>
    %680 = arith.divf %678, %679 : vector<2x9xf32>
    %681 = vector.extract_strided_slice %674 {offsets = [0, 9], sizes = [2, 3], strides = [1, 1]} : vector<2x12xf32> to vector<2x3xf32>
    %682 = math.tanh %681 : vector<2x3xf32>
    %683 = vector.extract_strided_slice %680 {offsets = [0, 0], sizes = [2, 3], strides = [1, 1]} : vector<2x9xf32> to vector<2x3xf32>
    %684 = vector.extract_strided_slice %680 {offsets = [0, 3], sizes = [2, 3], strides = [1, 1]} : vector<2x9xf32> to vector<2x3xf32>
    %685 = vector.extract_strided_slice %680 {offsets = [0, 6], sizes = [2, 3], strides = [1, 1]} : vector<2x9xf32> to vector<2x3xf32>
    %686 = arith.mulf %684, %658 : vector<2x3xf32>
    %687 = arith.mulf %683, %682 : vector<2x3xf32>
    %688 = arith.addf %686, %687 : vector<2x3xf32>
    %689 = math.tanh %688 : vector<2x3xf32>
    %690 = arith.mulf %685, %689 : vector<2x3xf32>
    %c4_88 = arith.constant 4 : index
    %c0_89 = arith.constant 0 : index
    %691 = vector.load %arg7[%c4_88, %c0_89] : memref<16x3xf32, #tpu.memory_space<vmem>>, vector<2x3xf32>
    tpu.vector_store %arg7[%c4_88, %c0_89], %690 {strides = array<i32>} : memref<16x3xf32, #tpu.memory_space<vmem>>, vector<2x3xf32>,
    %692 = vector.extract_strided_slice %690 {offsets = [0, 0], sizes = [2, 1], strides = [1, 1]} : vector<2x3xf32> to vector<2x1xf32>
    %693 = vector.broadcast %692 : vector<2x1xf32> to vector<2x12xf32>
    %694 = arith.mulf %693, %593 : vector<2x12xf32>
    %695 = vector.extract_strided_slice %690 {offsets = [0, 1], sizes = [2, 1], strides = [1, 1]} : vector<2x3xf32> to vector<2x1xf32>
    %696 = vector.broadcast %695 : vector<2x1xf32> to vector<2x12xf32>
    %697 = arith.mulf %696, %596 : vector<2x12xf32>
    %698 = arith.addf %694, %697 : vector<2x12xf32>
    %699 = vector.extract_strided_slice %690 {offsets = [0, 2], sizes = [2, 1], strides = [1, 1]} : vector<2x3xf32> to vector<2x1xf32>
    %700 = vector.broadcast %699 : vector<2x1xf32> to vector<2x12xf32>
    %701 = arith.mulf %700, %599 : vector<2x12xf32>
    %702 = arith.addf %698, %701 : vector<2x12xf32>
    %703 = vector.extract_strided_slice %588 {offsets = [6, 0], sizes = [2, 12], strides = [1, 1]} : vector<16x12xf32> to vector<2x12xf32>
    %704 = arith.addf %703, %702 : vector<2x12xf32>
    %705 = vector.extract_strided_slice %704 {offsets = [0, 0], sizes = [2, 9], strides = [1, 1]} : vector<2x12xf32> to vector<2x9xf32>
    %706 = arith.negf %705 : vector<2x9xf32>
    %707 = math.exp %706 : vector<2x9xf32>
    %cst_90 = arith.constant 1.000000e+00 : f32
    %708 = vector.broadcast %cst_90 : f32 to vector<2x9xf32>
    %709 = arith.addf %708, %707 : vector<2x9xf32>
    %710 = arith.divf %708, %709 : vector<2x9xf32>
    %711 = vector.extract_strided_slice %704 {offsets = [0, 9], sizes = [2, 3], strides = [1, 1]} : vector<2x12xf32> to vector<2x3xf32>
    %712 = math.tanh %711 : vector<2x3xf32>
    %713 = vector.extract_strided_slice %710 {offsets = [0, 0], sizes = [2, 3], strides = [1, 1]} : vector<2x9xf32> to vector<2x3xf32>
    %714 = vector.extract_strided_slice %710 {offsets = [0, 3], sizes = [2, 3], strides = [1, 1]} : vector<2x9xf32> to vector<2x3xf32>
    %715 = vector.extract_strided_slice %710 {offsets = [0, 6], sizes = [2, 3], strides = [1, 1]} : vector<2x9xf32> to vector<2x3xf32>
    %716 = arith.mulf %714, %688 : vector<2x3xf32>
    %717 = arith.mulf %713, %712 : vector<2x3xf32>
    %718 = arith.addf %716, %717 : vector<2x3xf32>
    %719 = math.tanh %718 : vector<2x3xf32>
    %720 = arith.mulf %715, %719 : vector<2x3xf32>
    %c6_91 = arith.constant 6 : index
    %c0_92 = arith.constant 0 : index
    %721 = vector.load %arg7[%c6_91, %c0_92] : memref<16x3xf32, #tpu.memory_space<vmem>>, vector<2x3xf32>
    tpu.vector_store %arg7[%c6_91, %c0_92], %720 {strides = array<i32>} : memref<16x3xf32, #tpu.memory_space<vmem>>, vector<2x3xf32>,
    %722 = vector.extract_strided_slice %720 {offsets = [0, 0], sizes = [2, 1], strides = [1, 1]} : vector<2x3xf32> to vector<2x1xf32>
    %723 = vector.broadcast %722 : vector<2x1xf32> to vector<2x12xf32>
    %724 = arith.mulf %723, %593 : vector<2x12xf32>
    %725 = vector.extract_strided_slice %720 {offsets = [0, 1], sizes = [2, 1], strides = [1, 1]} : vector<2x3xf32> to vector<2x1xf32>
    %726 = vector.broadcast %725 : vector<2x1xf32> to vector<2x12xf32>
    %727 = arith.mulf %726, %596 : vector<2x12xf32>
    %728 = arith.addf %724, %727 : vector<2x12xf32>
    %729 = vector.extract_strided_slice %720 {offsets = [0, 2], sizes = [2, 1], strides = [1, 1]} : vector<2x3xf32> to vector<2x1xf32>
    %730 = vector.broadcast %729 : vector<2x1xf32> to vector<2x12xf32>
    %731 = arith.mulf %730, %599 : vector<2x12xf32>
    %732 = arith.addf %728, %731 : vector<2x12xf32>
    %733 = vector.extract_strided_slice %588 {offsets = [8, 0], sizes = [2, 12], strides = [1, 1]} : vector<16x12xf32> to vector<2x12xf32>
    %734 = arith.addf %733, %732 : vector<2x12xf32>
    %735 = vector.extract_strided_slice %734 {offsets = [0, 0], sizes = [2, 9], strides = [1, 1]} : vector<2x12xf32> to vector<2x9xf32>
    %736 = arith.negf %735 : vector<2x9xf32>
    %737 = math.exp %736 : vector<2x9xf32>
    %cst_93 = arith.constant 1.000000e+00 : f32
    %738 = vector.broadcast %cst_93 : f32 to vector<2x9xf32>
    %739 = arith.addf %738, %737 : vector<2x9xf32>
    %740 = arith.divf %738, %739 : vector<2x9xf32>
    %741 = vector.extract_strided_slice %734 {offsets = [0, 9], sizes = [2, 3], strides = [1, 1]} : vector<2x12xf32> to vector<2x3xf32>
    %742 = math.tanh %741 : vector<2x3xf32>
    %743 = vector.extract_strided_slice %740 {offsets = [0, 0], sizes = [2, 3], strides = [1, 1]} : vector<2x9xf32> to vector<2x3xf32>
    %744 = vector.extract_strided_slice %740 {offsets = [0, 3], sizes = [2, 3], strides = [1, 1]} : vector<2x9xf32> to vector<2x3xf32>
    %745 = vector.extract_strided_slice %740 {offsets = [0, 6], sizes = [2, 3], strides = [1, 1]} : vector<2x9xf32> to vector<2x3xf32>
    %746 = arith.mulf %744, %718 : vector<2x3xf32>
    %747 = arith.mulf %743, %742 : vector<2x3xf32>
    %748 = arith.addf %746, %747 : vector<2x3xf32>
    %749 = math.tanh %748 : vector<2x3xf32>
    %750 = arith.mulf %745, %749 : vector<2x3xf32>
    %c8_94 = arith.constant 8 : index
    %c0_95 = arith.constant 0 : index
    %751 = vector.load %arg7[%c8_94, %c0_95] : memref<16x3xf32, #tpu.memory_space<vmem>>, vector<2x3xf32>
    tpu.vector_store %arg7[%c8_94, %c0_95], %750 {strides = array<i32>} : memref<16x3xf32, #tpu.memory_space<vmem>>, vector<2x3xf32>,
    %752 = vector.extract_strided_slice %750 {offsets = [0, 0], sizes = [2, 1], strides = [1, 1]} : vector<2x3xf32> to vector<2x1xf32>
    %753 = vector.broadcast %752 : vector<2x1xf32> to vector<2x12xf32>
    %754 = arith.mulf %753, %593 : vector<2x12xf32>
    %755 = vector.extract_strided_slice %750 {offsets = [0, 1], sizes = [2, 1], strides = [1, 1]} : vector<2x3xf32> to vector<2x1xf32>
    %756 = vector.broadcast %755 : vector<2x1xf32> to vector<2x12xf32>
    %757 = arith.mulf %756, %596 : vector<2x12xf32>
    %758 = arith.addf %754, %757 : vector<2x12xf32>
    %759 = vector.extract_strided_slice %750 {offsets = [0, 2], sizes = [2, 1], strides = [1, 1]} : vector<2x3xf32> to vector<2x1xf32>
    %760 = vector.broadcast %759 : vector<2x1xf32> to vector<2x12xf32>
    %761 = arith.mulf %760, %599 : vector<2x12xf32>
    %762 = arith.addf %758, %761 : vector<2x12xf32>
    %763 = vector.extract_strided_slice %588 {offsets = [10, 0], sizes = [2, 12], strides = [1, 1]} : vector<16x12xf32> to vector<2x12xf32>
    %764 = arith.addf %763, %762 : vector<2x12xf32>
    %765 = vector.extract_strided_slice %764 {offsets = [0, 0], sizes = [2, 9], strides = [1, 1]} : vector<2x12xf32> to vector<2x9xf32>
    %766 = arith.negf %765 : vector<2x9xf32>
    %767 = math.exp %766 : vector<2x9xf32>
    %cst_96 = arith.constant 1.000000e+00 : f32
    %768 = vector.broadcast %cst_96 : f32 to vector<2x9xf32>
    %769 = arith.addf %768, %767 : vector<2x9xf32>
    %770 = arith.divf %768, %769 : vector<2x9xf32>
    %771 = vector.extract_strided_slice %764 {offsets = [0, 9], sizes = [2, 3], strides = [1, 1]} : vector<2x12xf32> to vector<2x3xf32>
    %772 = math.tanh %771 : vector<2x3xf32>
    %773 = vector.extract_strided_slice %770 {offsets = [0, 0], sizes = [2, 3], strides = [1, 1]} : vector<2x9xf32> to vector<2x3xf32>
    %774 = vector.extract_strided_slice %770 {offsets = [0, 3], sizes = [2, 3], strides = [1, 1]} : vector<2x9xf32> to vector<2x3xf32>
    %775 = vector.extract_strided_slice %770 {offsets = [0, 6], sizes = [2, 3], strides = [1, 1]} : vector<2x9xf32> to vector<2x3xf32>
    %776 = arith.mulf %774, %748 : vector<2x3xf32>
    %777 = arith.mulf %773, %772 : vector<2x3xf32>
    %778 = arith.addf %776, %777 : vector<2x3xf32>
    %779 = math.tanh %778 : vector<2x3xf32>
    %780 = arith.mulf %775, %779 : vector<2x3xf32>
    %c10_97 = arith.constant 10 : index
    %c0_98 = arith.constant 0 : index
    %781 = vector.load %arg7[%c10_97, %c0_98] : memref<16x3xf32, #tpu.memory_space<vmem>>, vector<2x3xf32>
    tpu.vector_store %arg7[%c10_97, %c0_98], %780 {strides = array<i32>} : memref<16x3xf32, #tpu.memory_space<vmem>>, vector<2x3xf32>,
    %782 = vector.extract_strided_slice %780 {offsets = [0, 0], sizes = [2, 1], strides = [1, 1]} : vector<2x3xf32> to vector<2x1xf32>
    %783 = vector.broadcast %782 : vector<2x1xf32> to vector<2x12xf32>
    %784 = arith.mulf %783, %593 : vector<2x12xf32>
    %785 = vector.extract_strided_slice %780 {offsets = [0, 1], sizes = [2, 1], strides = [1, 1]} : vector<2x3xf32> to vector<2x1xf32>
    %786 = vector.broadcast %785 : vector<2x1xf32> to vector<2x12xf32>
    %787 = arith.mulf %786, %596 : vector<2x12xf32>
    %788 = arith.addf %784, %787 : vector<2x12xf32>
    %789 = vector.extract_strided_slice %780 {offsets = [0, 2], sizes = [2, 1], strides = [1, 1]} : vector<2x3xf32> to vector<2x1xf32>
    %790 = vector.broadcast %789 : vector<2x1xf32> to vector<2x12xf32>
    %791 = arith.mulf %790, %599 : vector<2x12xf32>
    %792 = arith.addf %788, %791 : vector<2x12xf32>
    %793 = vector.extract_strided_slice %588 {offsets = [12, 0], sizes = [2, 12], strides = [1, 1]} : vector<16x12xf32> to vector<2x12xf32>
    %794 = arith.addf %793, %792 : vector<2x12xf32>
    %795 = vector.extract_strided_slice %794 {offsets = [0, 0], sizes = [2, 9], strides = [1, 1]} : vector<2x12xf32> to vector<2x9xf32>
    %796 = arith.negf %795 : vector<2x9xf32>
    %797 = math.exp %796 : vector<2x9xf32>
    %cst_99 = arith.constant 1.000000e+00 : f32
    %798 = vector.broadcast %cst_99 : f32 to vector<2x9xf32>
    %799 = arith.addf %798, %797 : vector<2x9xf32>
    %800 = arith.divf %798, %799 : vector<2x9xf32>
    %801 = vector.extract_strided_slice %794 {offsets = [0, 9], sizes = [2, 3], strides = [1, 1]} : vector<2x12xf32> to vector<2x3xf32>
    %802 = math.tanh %801 : vector<2x3xf32>
    %803 = vector.extract_strided_slice %800 {offsets = [0, 0], sizes = [2, 3], strides = [1, 1]} : vector<2x9xf32> to vector<2x3xf32>
    %804 = vector.extract_strided_slice %800 {offsets = [0, 3], sizes = [2, 3], strides = [1, 1]} : vector<2x9xf32> to vector<2x3xf32>
    %805 = vector.extract_strided_slice %800 {offsets = [0, 6], sizes = [2, 3], strides = [1, 1]} : vector<2x9xf32> to vector<2x3xf32>
    %806 = arith.mulf %804, %778 : vector<2x3xf32>
    %807 = arith.mulf %803, %802 : vector<2x3xf32>
    %808 = arith.addf %806, %807 : vector<2x3xf32>
    %809 = math.tanh %808 : vector<2x3xf32>
    %810 = arith.mulf %805, %809 : vector<2x3xf32>
    %c12_100 = arith.constant 12 : index
    %c0_101 = arith.constant 0 : index
    %811 = vector.load %arg7[%c12_100, %c0_101] : memref<16x3xf32, #tpu.memory_space<vmem>>, vector<2x3xf32>
    tpu.vector_store %arg7[%c12_100, %c0_101], %810 {strides = array<i32>} : memref<16x3xf32, #tpu.memory_space<vmem>>, vector<2x3xf32>,
    %812 = vector.extract_strided_slice %810 {offsets = [0, 0], sizes = [2, 1], strides = [1, 1]} : vector<2x3xf32> to vector<2x1xf32>
    %813 = vector.broadcast %812 : vector<2x1xf32> to vector<2x12xf32>
    %814 = arith.mulf %813, %593 : vector<2x12xf32>
    %815 = vector.extract_strided_slice %810 {offsets = [0, 1], sizes = [2, 1], strides = [1, 1]} : vector<2x3xf32> to vector<2x1xf32>
    %816 = vector.broadcast %815 : vector<2x1xf32> to vector<2x12xf32>
    %817 = arith.mulf %816, %596 : vector<2x12xf32>
    %818 = arith.addf %814, %817 : vector<2x12xf32>
    %819 = vector.extract_strided_slice %810 {offsets = [0, 2], sizes = [2, 1], strides = [1, 1]} : vector<2x3xf32> to vector<2x1xf32>
    %820 = vector.broadcast %819 : vector<2x1xf32> to vector<2x12xf32>
    %821 = arith.mulf %820, %599 : vector<2x12xf32>
    %822 = arith.addf %818, %821 : vector<2x12xf32>
    %823 = vector.extract_strided_slice %588 {offsets = [14, 0], sizes = [2, 12], strides = [1, 1]} : vector<16x12xf32> to vector<2x12xf32>
    %824 = arith.addf %823, %822 : vector<2x12xf32>
    %825 = vector.extract_strided_slice %824 {offsets = [0, 0], sizes = [2, 9], strides = [1, 1]} : vector<2x12xf32> to vector<2x9xf32>
    %826 = arith.negf %825 : vector<2x9xf32>
    %827 = math.exp %826 : vector<2x9xf32>
    %cst_102 = arith.constant 1.000000e+00 : f32
    %828 = vector.broadcast %cst_102 : f32 to vector<2x9xf32>
    %829 = arith.addf %828, %827 : vector<2x9xf32>
    %830 = arith.divf %828, %829 : vector<2x9xf32>
    %831 = vector.extract_strided_slice %824 {offsets = [0, 9], sizes = [2, 3], strides = [1, 1]} : vector<2x12xf32> to vector<2x3xf32>
    %832 = math.tanh %831 : vector<2x3xf32>
    %833 = vector.extract_strided_slice %830 {offsets = [0, 0], sizes = [2, 3], strides = [1, 1]} : vector<2x9xf32> to vector<2x3xf32>
    %834 = vector.extract_strided_slice %830 {offsets = [0, 3], sizes = [2, 3], strides = [1, 1]} : vector<2x9xf32> to vector<2x3xf32>
    %835 = vector.extract_strided_slice %830 {offsets = [0, 6], sizes = [2, 3], strides = [1, 1]} : vector<2x9xf32> to vector<2x3xf32>
    %836 = arith.mulf %834, %808 : vector<2x3xf32>
    %837 = arith.mulf %833, %832 : vector<2x3xf32>
    %838 = arith.addf %836, %837 : vector<2x3xf32>
    %839 = math.tanh %838 : vector<2x3xf32>
    %840 = arith.mulf %835, %839 : vector<2x3xf32>
    %c14_103 = arith.constant 14 : index
    %c0_104 = arith.constant 0 : index
    %841 = vector.load %arg7[%c14_103, %c0_104] : memref<16x3xf32, #tpu.memory_space<vmem>>, vector<2x3xf32>
    tpu.vector_store %arg7[%c14_103, %c0_104], %840 {strides = array<i32>} : memref<16x3xf32, #tpu.memory_space<vmem>>, vector<2x3xf32>,
    %c0_105 = arith.constant 0 : index
    %c0_106 = arith.constant 0 : index
    %842 = vector.load %arg7[%c0_105, %c0_106] : memref<16x3xf32, #tpu.memory_space<vmem>>, vector<16x3xf32>
    %c3 = arith.constant 3 : index
    %c0_107 = arith.constant 0 : index
    %c0_108 = arith.constant 0 : index
    %843 = vector.load %arg1[%c3, %c0_107, %c0_108] : memref<5x3x12xf32, #tpu.memory_space<vmem>>, vector<1x3x12xf32>
    %844 = vector.shape_cast %843 : vector<1x3x12xf32> to vector<3x12xf32>
    %845 = vector.extract_strided_slice %842 {offsets = [0, 0], sizes = [16, 1], strides = [1, 1]} : vector<16x3xf32> to vector<16x1xf32>
    %846 = vector.extract_strided_slice %844 {offsets = [0, 0], sizes = [1, 12], strides = [1, 1]} : vector<3x12xf32> to vector<1x12xf32>
    %847 = vector.shape_cast %846 : vector<1x12xf32> to vector<1x12xf32>
    %848 = vector.broadcast %847 : vector<1x12xf32> to vector<16x12xf32>
    %849 = vector.broadcast %845 : vector<16x1xf32> to vector<16x12xf32>
    %850 = arith.mulf %849, %848 : vector<16x12xf32>
    %851 = vector.extract_strided_slice %842 {offsets = [0, 1], sizes = [16, 1], strides = [1, 1]} : vector<16x3xf32> to vector<16x1xf32>
    %852 = vector.extract_strided_slice %844 {offsets = [1, 0], sizes = [1, 12], strides = [1, 1]} : vector<3x12xf32> to vector<1x12xf32>
    %853 = vector.shape_cast %852 : vector<1x12xf32> to vector<1x12xf32>
    %854 = vector.broadcast %853 : vector<1x12xf32> to vector<16x12xf32>
    %855 = vector.broadcast %851 : vector<16x1xf32> to vector<16x12xf32>
    %856 = arith.mulf %855, %854 : vector<16x12xf32>
    %857 = arith.addf %850, %856 : vector<16x12xf32>
    %858 = vector.extract_strided_slice %842 {offsets = [0, 2], sizes = [16, 1], strides = [1, 1]} : vector<16x3xf32> to vector<16x1xf32>
    %859 = vector.extract_strided_slice %844 {offsets = [2, 0], sizes = [1, 12], strides = [1, 1]} : vector<3x12xf32> to vector<1x12xf32>
    %860 = vector.shape_cast %859 : vector<1x12xf32> to vector<1x12xf32>
    %861 = vector.broadcast %860 : vector<1x12xf32> to vector<16x12xf32>
    %862 = vector.broadcast %858 : vector<16x1xf32> to vector<16x12xf32>
    %863 = arith.mulf %862, %861 : vector<16x12xf32>
    %864 = arith.addf %857, %863 : vector<16x12xf32>
    %c3_109 = arith.constant 3 : index
    %c0_110 = arith.constant 0 : index
    %c0_111 = arith.constant 0 : index
    %865 = vector.load %arg3[%c3_109, %c0_110, %c0_111] : memref<5x1x12xf32, #tpu.memory_space<vmem>>, vector<1x1x12xf32>
    %866 = vector.shape_cast %865 : vector<1x1x12xf32> to vector<1x12xf32>
    %867 = vector.broadcast %866 : vector<1x12xf32> to vector<16x12xf32>
    %868 = arith.addf %864, %867 : vector<16x12xf32>
    %c3_112 = arith.constant 3 : index
    %c0_113 = arith.constant 0 : index
    %c0_114 = arith.constant 0 : index
    %869 = vector.load %arg2[%c3_112, %c0_113, %c0_114] : memref<5x3x12xf32, #tpu.memory_space<vmem>>, vector<1x3x12xf32>
    %870 = vector.shape_cast %869 : vector<1x3x12xf32> to vector<3x12xf32>
    %871 = vector.extract_strided_slice %870 {offsets = [0, 0], sizes = [1, 12], strides = [1, 1]} : vector<3x12xf32> to vector<1x12xf32>
    %872 = vector.shape_cast %871 : vector<1x12xf32> to vector<1x12xf32>
    %873 = vector.broadcast %872 : vector<1x12xf32> to vector<2x12xf32>
    %874 = vector.extract_strided_slice %870 {offsets = [1, 0], sizes = [1, 12], strides = [1, 1]} : vector<3x12xf32> to vector<1x12xf32>
    %875 = vector.shape_cast %874 : vector<1x12xf32> to vector<1x12xf32>
    %876 = vector.broadcast %875 : vector<1x12xf32> to vector<2x12xf32>
    %877 = vector.extract_strided_slice %870 {offsets = [2, 0], sizes = [1, 12], strides = [1, 1]} : vector<3x12xf32> to vector<1x12xf32>
    %878 = vector.shape_cast %877 : vector<1x12xf32> to vector<1x12xf32>
    %879 = vector.broadcast %878 : vector<1x12xf32> to vector<2x12xf32>
    %cst_115 = arith.constant 0.000000e+00 : f32
    %880 = vector.broadcast %cst_115 : f32 to vector<2x3xf32>
    %cst_116 = arith.constant 0.000000e+00 : f32
    %881 = vector.broadcast %cst_116 : f32 to vector<2x3xf32>
    %882 = vector.extract_strided_slice %880 {offsets = [0, 0], sizes = [2, 1], strides = [1, 1]} : vector<2x3xf32> to vector<2x1xf32>
    %883 = vector.broadcast %882 : vector<2x1xf32> to vector<2x12xf32>
    %884 = arith.mulf %883, %873 : vector<2x12xf32>
    %885 = vector.extract_strided_slice %880 {offsets = [0, 1], sizes = [2, 1], strides = [1, 1]} : vector<2x3xf32> to vector<2x1xf32>
    %886 = vector.broadcast %885 : vector<2x1xf32> to vector<2x12xf32>
    %887 = arith.mulf %886, %876 : vector<2x12xf32>
    %888 = arith.addf %884, %887 : vector<2x12xf32>
    %889 = vector.extract_strided_slice %880 {offsets = [0, 2], sizes = [2, 1], strides = [1, 1]} : vector<2x3xf32> to vector<2x1xf32>
    %890 = vector.broadcast %889 : vector<2x1xf32> to vector<2x12xf32>
    %891 = arith.mulf %890, %879 : vector<2x12xf32>
    %892 = arith.addf %888, %891 : vector<2x12xf32>
    %893 = vector.extract_strided_slice %868 {offsets = [0, 0], sizes = [2, 12], strides = [1, 1]} : vector<16x12xf32> to vector<2x12xf32>
    %894 = arith.addf %893, %892 : vector<2x12xf32>
    %895 = vector.extract_strided_slice %894 {offsets = [0, 0], sizes = [2, 9], strides = [1, 1]} : vector<2x12xf32> to vector<2x9xf32>
    %896 = arith.negf %895 : vector<2x9xf32>
    %897 = math.exp %896 : vector<2x9xf32>
    %cst_117 = arith.constant 1.000000e+00 : f32
    %898 = vector.broadcast %cst_117 : f32 to vector<2x9xf32>
    %899 = arith.addf %898, %897 : vector<2x9xf32>
    %900 = arith.divf %898, %899 : vector<2x9xf32>
    %901 = vector.extract_strided_slice %894 {offsets = [0, 9], sizes = [2, 3], strides = [1, 1]} : vector<2x12xf32> to vector<2x3xf32>
    %902 = math.tanh %901 : vector<2x3xf32>
    %903 = vector.extract_strided_slice %900 {offsets = [0, 0], sizes = [2, 3], strides = [1, 1]} : vector<2x9xf32> to vector<2x3xf32>
    %904 = vector.extract_strided_slice %900 {offsets = [0, 3], sizes = [2, 3], strides = [1, 1]} : vector<2x9xf32> to vector<2x3xf32>
    %905 = vector.extract_strided_slice %900 {offsets = [0, 6], sizes = [2, 3], strides = [1, 1]} : vector<2x9xf32> to vector<2x3xf32>
    %906 = arith.mulf %904, %881 : vector<2x3xf32>
    %907 = arith.mulf %903, %902 : vector<2x3xf32>
    %908 = arith.addf %906, %907 : vector<2x3xf32>
    %909 = math.tanh %908 : vector<2x3xf32>
    %910 = arith.mulf %905, %909 : vector<2x3xf32>
    %c0_118 = arith.constant 0 : index
    %c0_119 = arith.constant 0 : index
    %911 = vector.load %arg7[%c0_118, %c0_119] : memref<16x3xf32, #tpu.memory_space<vmem>>, vector<2x3xf32>
    tpu.vector_store %arg7[%c0_118, %c0_119], %910 {strides = array<i32>} : memref<16x3xf32, #tpu.memory_space<vmem>>, vector<2x3xf32>,
    %912 = vector.extract_strided_slice %910 {offsets = [0, 0], sizes = [2, 1], strides = [1, 1]} : vector<2x3xf32> to vector<2x1xf32>
    %913 = vector.broadcast %912 : vector<2x1xf32> to vector<2x12xf32>
    %914 = arith.mulf %913, %873 : vector<2x12xf32>
    %915 = vector.extract_strided_slice %910 {offsets = [0, 1], sizes = [2, 1], strides = [1, 1]} : vector<2x3xf32> to vector<2x1xf32>
    %916 = vector.broadcast %915 : vector<2x1xf32> to vector<2x12xf32>
    %917 = arith.mulf %916, %876 : vector<2x12xf32>
    %918 = arith.addf %914, %917 : vector<2x12xf32>
    %919 = vector.extract_strided_slice %910 {offsets = [0, 2], sizes = [2, 1], strides = [1, 1]} : vector<2x3xf32> to vector<2x1xf32>
    %920 = vector.broadcast %919 : vector<2x1xf32> to vector<2x12xf32>
    %921 = arith.mulf %920, %879 : vector<2x12xf32>
    %922 = arith.addf %918, %921 : vector<2x12xf32>
    %923 = vector.extract_strided_slice %868 {offsets = [2, 0], sizes = [2, 12], strides = [1, 1]} : vector<16x12xf32> to vector<2x12xf32>
    %924 = arith.addf %923, %922 : vector<2x12xf32>
    %925 = vector.extract_strided_slice %924 {offsets = [0, 0], sizes = [2, 9], strides = [1, 1]} : vector<2x12xf32> to vector<2x9xf32>
    %926 = arith.negf %925 : vector<2x9xf32>
    %927 = math.exp %926 : vector<2x9xf32>
    %cst_120 = arith.constant 1.000000e+00 : f32
    %928 = vector.broadcast %cst_120 : f32 to vector<2x9xf32>
    %929 = arith.addf %928, %927 : vector<2x9xf32>
    %930 = arith.divf %928, %929 : vector<2x9xf32>
    %931 = vector.extract_strided_slice %924 {offsets = [0, 9], sizes = [2, 3], strides = [1, 1]} : vector<2x12xf32> to vector<2x3xf32>
    %932 = math.tanh %931 : vector<2x3xf32>
    %933 = vector.extract_strided_slice %930 {offsets = [0, 0], sizes = [2, 3], strides = [1, 1]} : vector<2x9xf32> to vector<2x3xf32>
    %934 = vector.extract_strided_slice %930 {offsets = [0, 3], sizes = [2, 3], strides = [1, 1]} : vector<2x9xf32> to vector<2x3xf32>
    %935 = vector.extract_strided_slice %930 {offsets = [0, 6], sizes = [2, 3], strides = [1, 1]} : vector<2x9xf32> to vector<2x3xf32>
    %936 = arith.mulf %934, %908 : vector<2x3xf32>
    %937 = arith.mulf %933, %932 : vector<2x3xf32>
    %938 = arith.addf %936, %937 : vector<2x3xf32>
    %939 = math.tanh %938 : vector<2x3xf32>
    %940 = arith.mulf %935, %939 : vector<2x3xf32>
    %c2_121 = arith.constant 2 : index
    %c0_122 = arith.constant 0 : index
    %941 = vector.load %arg7[%c2_121, %c0_122] : memref<16x3xf32, #tpu.memory_space<vmem>>, vector<2x3xf32>
    tpu.vector_store %arg7[%c2_121, %c0_122], %940 {strides = array<i32>} : memref<16x3xf32, #tpu.memory_space<vmem>>, vector<2x3xf32>,
    %942 = vector.extract_strided_slice %940 {offsets = [0, 0], sizes = [2, 1], strides = [1, 1]} : vector<2x3xf32> to vector<2x1xf32>
    %943 = vector.broadcast %942 : vector<2x1xf32> to vector<2x12xf32>
    %944 = arith.mulf %943, %873 : vector<2x12xf32>
    %945 = vector.extract_strided_slice %940 {offsets = [0, 1], sizes = [2, 1], strides = [1, 1]} : vector<2x3xf32> to vector<2x1xf32>
    %946 = vector.broadcast %945 : vector<2x1xf32> to vector<2x12xf32>
    %947 = arith.mulf %946, %876 : vector<2x12xf32>
    %948 = arith.addf %944, %947 : vector<2x12xf32>
    %949 = vector.extract_strided_slice %940 {offsets = [0, 2], sizes = [2, 1], strides = [1, 1]} : vector<2x3xf32> to vector<2x1xf32>
    %950 = vector.broadcast %949 : vector<2x1xf32> to vector<2x12xf32>
    %951 = arith.mulf %950, %879 : vector<2x12xf32>
    %952 = arith.addf %948, %951 : vector<2x12xf32>
    %953 = vector.extract_strided_slice %868 {offsets = [4, 0], sizes = [2, 12], strides = [1, 1]} : vector<16x12xf32> to vector<2x12xf32>
    %954 = arith.addf %953, %952 : vector<2x12xf32>
    %955 = vector.extract_strided_slice %954 {offsets = [0, 0], sizes = [2, 9], strides = [1, 1]} : vector<2x12xf32> to vector<2x9xf32>
    %956 = arith.negf %955 : vector<2x9xf32>
    %957 = math.exp %956 : vector<2x9xf32>
    %cst_123 = arith.constant 1.000000e+00 : f32
    %958 = vector.broadcast %cst_123 : f32 to vector<2x9xf32>
    %959 = arith.addf %958, %957 : vector<2x9xf32>
    %960 = arith.divf %958, %959 : vector<2x9xf32>
    %961 = vector.extract_strided_slice %954 {offsets = [0, 9], sizes = [2, 3], strides = [1, 1]} : vector<2x12xf32> to vector<2x3xf32>
    %962 = math.tanh %961 : vector<2x3xf32>
    %963 = vector.extract_strided_slice %960 {offsets = [0, 0], sizes = [2, 3], strides = [1, 1]} : vector<2x9xf32> to vector<2x3xf32>
    %964 = vector.extract_strided_slice %960 {offsets = [0, 3], sizes = [2, 3], strides = [1, 1]} : vector<2x9xf32> to vector<2x3xf32>
    %965 = vector.extract_strided_slice %960 {offsets = [0, 6], sizes = [2, 3], strides = [1, 1]} : vector<2x9xf32> to vector<2x3xf32>
    %966 = arith.mulf %964, %938 : vector<2x3xf32>
    %967 = arith.mulf %963, %962 : vector<2x3xf32>
    %968 = arith.addf %966, %967 : vector<2x3xf32>
    %969 = math.tanh %968 : vector<2x3xf32>
    %970 = arith.mulf %965, %969 : vector<2x3xf32>
    %c4_124 = arith.constant 4 : index
    %c0_125 = arith.constant 0 : index
    %971 = vector.load %arg7[%c4_124, %c0_125] : memref<16x3xf32, #tpu.memory_space<vmem>>, vector<2x3xf32>
    tpu.vector_store %arg7[%c4_124, %c0_125], %970 {strides = array<i32>} : memref<16x3xf32, #tpu.memory_space<vmem>>, vector<2x3xf32>,
    %972 = vector.extract_strided_slice %970 {offsets = [0, 0], sizes = [2, 1], strides = [1, 1]} : vector<2x3xf32> to vector<2x1xf32>
    %973 = vector.broadcast %972 : vector<2x1xf32> to vector<2x12xf32>
    %974 = arith.mulf %973, %873 : vector<2x12xf32>
    %975 = vector.extract_strided_slice %970 {offsets = [0, 1], sizes = [2, 1], strides = [1, 1]} : vector<2x3xf32> to vector<2x1xf32>
    %976 = vector.broadcast %975 : vector<2x1xf32> to vector<2x12xf32>
    %977 = arith.mulf %976, %876 : vector<2x12xf32>
    %978 = arith.addf %974, %977 : vector<2x12xf32>
    %979 = vector.extract_strided_slice %970 {offsets = [0, 2], sizes = [2, 1], strides = [1, 1]} : vector<2x3xf32> to vector<2x1xf32>
    %980 = vector.broadcast %979 : vector<2x1xf32> to vector<2x12xf32>
    %981 = arith.mulf %980, %879 : vector<2x12xf32>
    %982 = arith.addf %978, %981 : vector<2x12xf32>
    %983 = vector.extract_strided_slice %868 {offsets = [6, 0], sizes = [2, 12], strides = [1, 1]} : vector<16x12xf32> to vector<2x12xf32>
    %984 = arith.addf %983, %982 : vector<2x12xf32>
    %985 = vector.extract_strided_slice %984 {offsets = [0, 0], sizes = [2, 9], strides = [1, 1]} : vector<2x12xf32> to vector<2x9xf32>
    %986 = arith.negf %985 : vector<2x9xf32>
    %987 = math.exp %986 : vector<2x9xf32>
    %cst_126 = arith.constant 1.000000e+00 : f32
    %988 = vector.broadcast %cst_126 : f32 to vector<2x9xf32>
    %989 = arith.addf %988, %987 : vector<2x9xf32>
    %990 = arith.divf %988, %989 : vector<2x9xf32>
    %991 = vector.extract_strided_slice %984 {offsets = [0, 9], sizes = [2, 3], strides = [1, 1]} : vector<2x12xf32> to vector<2x3xf32>
    %992 = math.tanh %991 : vector<2x3xf32>
    %993 = vector.extract_strided_slice %990 {offsets = [0, 0], sizes = [2, 3], strides = [1, 1]} : vector<2x9xf32> to vector<2x3xf32>
    %994 = vector.extract_strided_slice %990 {offsets = [0, 3], sizes = [2, 3], strides = [1, 1]} : vector<2x9xf32> to vector<2x3xf32>
    %995 = vector.extract_strided_slice %990 {offsets = [0, 6], sizes = [2, 3], strides = [1, 1]} : vector<2x9xf32> to vector<2x3xf32>
    %996 = arith.mulf %994, %968 : vector<2x3xf32>
    %997 = arith.mulf %993, %992 : vector<2x3xf32>
    %998 = arith.addf %996, %997 : vector<2x3xf32>
    %999 = math.tanh %998 : vector<2x3xf32>
    %1000 = arith.mulf %995, %999 : vector<2x3xf32>
    %c6_127 = arith.constant 6 : index
    %c0_128 = arith.constant 0 : index
    %1001 = vector.load %arg7[%c6_127, %c0_128] : memref<16x3xf32, #tpu.memory_space<vmem>>, vector<2x3xf32>
    tpu.vector_store %arg7[%c6_127, %c0_128], %1000 {strides = array<i32>} : memref<16x3xf32, #tpu.memory_space<vmem>>, vector<2x3xf32>,
    %1002 = vector.extract_strided_slice %1000 {offsets = [0, 0], sizes = [2, 1], strides = [1, 1]} : vector<2x3xf32> to vector<2x1xf32>
    %1003 = vector.broadcast %1002 : vector<2x1xf32> to vector<2x12xf32>
    %1004 = arith.mulf %1003, %873 : vector<2x12xf32>
    %1005 = vector.extract_strided_slice %1000 {offsets = [0, 1], sizes = [2, 1], strides = [1, 1]} : vector<2x3xf32> to vector<2x1xf32>
    %1006 = vector.broadcast %1005 : vector<2x1xf32> to vector<2x12xf32>
    %1007 = arith.mulf %1006, %876 : vector<2x12xf32>
    %1008 = arith.addf %1004, %1007 : vector<2x12xf32>
    %1009 = vector.extract_strided_slice %1000 {offsets = [0, 2], sizes = [2, 1], strides = [1, 1]} : vector<2x3xf32> to vector<2x1xf32>
    %1010 = vector.broadcast %1009 : vector<2x1xf32> to vector<2x12xf32>
    %1011 = arith.mulf %1010, %879 : vector<2x12xf32>
    %1012 = arith.addf %1008, %1011 : vector<2x12xf32>
    %1013 = vector.extract_strided_slice %868 {offsets = [8, 0], sizes = [2, 12], strides = [1, 1]} : vector<16x12xf32> to vector<2x12xf32>
    %1014 = arith.addf %1013, %1012 : vector<2x12xf32>
    %1015 = vector.extract_strided_slice %1014 {offsets = [0, 0], sizes = [2, 9], strides = [1, 1]} : vector<2x12xf32> to vector<2x9xf32>
    %1016 = arith.negf %1015 : vector<2x9xf32>
    %1017 = math.exp %1016 : vector<2x9xf32>
    %cst_129 = arith.constant 1.000000e+00 : f32
    %1018 = vector.broadcast %cst_129 : f32 to vector<2x9xf32>
    %1019 = arith.addf %1018, %1017 : vector<2x9xf32>
    %1020 = arith.divf %1018, %1019 : vector<2x9xf32>
    %1021 = vector.extract_strided_slice %1014 {offsets = [0, 9], sizes = [2, 3], strides = [1, 1]} : vector<2x12xf32> to vector<2x3xf32>
    %1022 = math.tanh %1021 : vector<2x3xf32>
    %1023 = vector.extract_strided_slice %1020 {offsets = [0, 0], sizes = [2, 3], strides = [1, 1]} : vector<2x9xf32> to vector<2x3xf32>
    %1024 = vector.extract_strided_slice %1020 {offsets = [0, 3], sizes = [2, 3], strides = [1, 1]} : vector<2x9xf32> to vector<2x3xf32>
    %1025 = vector.extract_strided_slice %1020 {offsets = [0, 6], sizes = [2, 3], strides = [1, 1]} : vector<2x9xf32> to vector<2x3xf32>
    %1026 = arith.mulf %1024, %998 : vector<2x3xf32>
    %1027 = arith.mulf %1023, %1022 : vector<2x3xf32>
    %1028 = arith.addf %1026, %1027 : vector<2x3xf32>
    %1029 = math.tanh %1028 : vector<2x3xf32>
    %1030 = arith.mulf %1025, %1029 : vector<2x3xf32>
    %c8_130 = arith.constant 8 : index
    %c0_131 = arith.constant 0 : index
    %1031 = vector.load %arg7[%c8_130, %c0_131] : memref<16x3xf32, #tpu.memory_space<vmem>>, vector<2x3xf32>
    tpu.vector_store %arg7[%c8_130, %c0_131], %1030 {strides = array<i32>} : memref<16x3xf32, #tpu.memory_space<vmem>>, vector<2x3xf32>,
    %1032 = vector.extract_strided_slice %1030 {offsets = [0, 0], sizes = [2, 1], strides = [1, 1]} : vector<2x3xf32> to vector<2x1xf32>
    %1033 = vector.broadcast %1032 : vector<2x1xf32> to vector<2x12xf32>
    %1034 = arith.mulf %1033, %873 : vector<2x12xf32>
    %1035 = vector.extract_strided_slice %1030 {offsets = [0, 1], sizes = [2, 1], strides = [1, 1]} : vector<2x3xf32> to vector<2x1xf32>
    %1036 = vector.broadcast %1035 : vector<2x1xf32> to vector<2x12xf32>
    %1037 = arith.mulf %1036, %876 : vector<2x12xf32>
    %1038 = arith.addf %1034, %1037 : vector<2x12xf32>
    %1039 = vector.extract_strided_slice %1030 {offsets = [0, 2], sizes = [2, 1], strides = [1, 1]} : vector<2x3xf32> to vector<2x1xf32>
    %1040 = vector.broadcast %1039 : vector<2x1xf32> to vector<2x12xf32>
    %1041 = arith.mulf %1040, %879 : vector<2x12xf32>
    %1042 = arith.addf %1038, %1041 : vector<2x12xf32>
    %1043 = vector.extract_strided_slice %868 {offsets = [10, 0], sizes = [2, 12], strides = [1, 1]} : vector<16x12xf32> to vector<2x12xf32>
    %1044 = arith.addf %1043, %1042 : vector<2x12xf32>
    %1045 = vector.extract_strided_slice %1044 {offsets = [0, 0], sizes = [2, 9], strides = [1, 1]} : vector<2x12xf32> to vector<2x9xf32>
    %1046 = arith.negf %1045 : vector<2x9xf32>
    %1047 = math.exp %1046 : vector<2x9xf32>
    %cst_132 = arith.constant 1.000000e+00 : f32
    %1048 = vector.broadcast %cst_132 : f32 to vector<2x9xf32>
    %1049 = arith.addf %1048, %1047 : vector<2x9xf32>
    %1050 = arith.divf %1048, %1049 : vector<2x9xf32>
    %1051 = vector.extract_strided_slice %1044 {offsets = [0, 9], sizes = [2, 3], strides = [1, 1]} : vector<2x12xf32> to vector<2x3xf32>
    %1052 = math.tanh %1051 : vector<2x3xf32>
    %1053 = vector.extract_strided_slice %1050 {offsets = [0, 0], sizes = [2, 3], strides = [1, 1]} : vector<2x9xf32> to vector<2x3xf32>
    %1054 = vector.extract_strided_slice %1050 {offsets = [0, 3], sizes = [2, 3], strides = [1, 1]} : vector<2x9xf32> to vector<2x3xf32>
    %1055 = vector.extract_strided_slice %1050 {offsets = [0, 6], sizes = [2, 3], strides = [1, 1]} : vector<2x9xf32> to vector<2x3xf32>
    %1056 = arith.mulf %1054, %1028 : vector<2x3xf32>
    %1057 = arith.mulf %1053, %1052 : vector<2x3xf32>
    %1058 = arith.addf %1056, %1057 : vector<2x3xf32>
    %1059 = math.tanh %1058 : vector<2x3xf32>
    %1060 = arith.mulf %1055, %1059 : vector<2x3xf32>
    %c10_133 = arith.constant 10 : index
    %c0_134 = arith.constant 0 : index
    %1061 = vector.load %arg7[%c10_133, %c0_134] : memref<16x3xf32, #tpu.memory_space<vmem>>, vector<2x3xf32>
    tpu.vector_store %arg7[%c10_133, %c0_134], %1060 {strides = array<i32>} : memref<16x3xf32, #tpu.memory_space<vmem>>, vector<2x3xf32>,
    %1062 = vector.extract_strided_slice %1060 {offsets = [0, 0], sizes = [2, 1], strides = [1, 1]} : vector<2x3xf32> to vector<2x1xf32>
    %1063 = vector.broadcast %1062 : vector<2x1xf32> to vector<2x12xf32>
    %1064 = arith.mulf %1063, %873 : vector<2x12xf32>
    %1065 = vector.extract_strided_slice %1060 {offsets = [0, 1], sizes = [2, 1], strides = [1, 1]} : vector<2x3xf32> to vector<2x1xf32>
    %1066 = vector.broadcast %1065 : vector<2x1xf32> to vector<2x12xf32>
    %1067 = arith.mulf %1066, %876 : vector<2x12xf32>
    %1068 = arith.addf %1064, %1067 : vector<2x12xf32>
    %1069 = vector.extract_strided_slice %1060 {offsets = [0, 2], sizes = [2, 1], strides = [1, 1]} : vector<2x3xf32> to vector<2x1xf32>
    %1070 = vector.broadcast %1069 : vector<2x1xf32> to vector<2x12xf32>
    %1071 = arith.mulf %1070, %879 : vector<2x12xf32>
    %1072 = arith.addf %1068, %1071 : vector<2x12xf32>
    %1073 = vector.extract_strided_slice %868 {offsets = [12, 0], sizes = [2, 12], strides = [1, 1]} : vector<16x12xf32> to vector<2x12xf32>
    %1074 = arith.addf %1073, %1072 : vector<2x12xf32>
    %1075 = vector.extract_strided_slice %1074 {offsets = [0, 0], sizes = [2, 9], strides = [1, 1]} : vector<2x12xf32> to vector<2x9xf32>
    %1076 = arith.negf %1075 : vector<2x9xf32>
    %1077 = math.exp %1076 : vector<2x9xf32>
    %cst_135 = arith.constant 1.000000e+00 : f32
    %1078 = vector.broadcast %cst_135 : f32 to vector<2x9xf32>
    %1079 = arith.addf %1078, %1077 : vector<2x9xf32>
    %1080 = arith.divf %1078, %1079 : vector<2x9xf32>
    %1081 = vector.extract_strided_slice %1074 {offsets = [0, 9], sizes = [2, 3], strides = [1, 1]} : vector<2x12xf32> to vector<2x3xf32>
    %1082 = math.tanh %1081 : vector<2x3xf32>
    %1083 = vector.extract_strided_slice %1080 {offsets = [0, 0], sizes = [2, 3], strides = [1, 1]} : vector<2x9xf32> to vector<2x3xf32>
    %1084 = vector.extract_strided_slice %1080 {offsets = [0, 3], sizes = [2, 3], strides = [1, 1]} : vector<2x9xf32> to vector<2x3xf32>
    %1085 = vector.extract_strided_slice %1080 {offsets = [0, 6], sizes = [2, 3], strides = [1, 1]} : vector<2x9xf32> to vector<2x3xf32>
    %1086 = arith.mulf %1084, %1058 : vector<2x3xf32>
    %1087 = arith.mulf %1083, %1082 : vector<2x3xf32>
    %1088 = arith.addf %1086, %1087 : vector<2x3xf32>
    %1089 = math.tanh %1088 : vector<2x3xf32>
    %1090 = arith.mulf %1085, %1089 : vector<2x3xf32>
    %c12_136 = arith.constant 12 : index
    %c0_137 = arith.constant 0 : index
    %1091 = vector.load %arg7[%c12_136, %c0_137] : memref<16x3xf32, #tpu.memory_space<vmem>>, vector<2x3xf32>
    tpu.vector_store %arg7[%c12_136, %c0_137], %1090 {strides = array<i32>} : memref<16x3xf32, #tpu.memory_space<vmem>>, vector<2x3xf32>,
    %1092 = vector.extract_strided_slice %1090 {offsets = [0, 0], sizes = [2, 1], strides = [1, 1]} : vector<2x3xf32> to vector<2x1xf32>
    %1093 = vector.broadcast %1092 : vector<2x1xf32> to vector<2x12xf32>
    %1094 = arith.mulf %1093, %873 : vector<2x12xf32>
    %1095 = vector.extract_strided_slice %1090 {offsets = [0, 1], sizes = [2, 1], strides = [1, 1]} : vector<2x3xf32> to vector<2x1xf32>
    %1096 = vector.broadcast %1095 : vector<2x1xf32> to vector<2x12xf32>
    %1097 = arith.mulf %1096, %876 : vector<2x12xf32>
    %1098 = arith.addf %1094, %1097 : vector<2x12xf32>
    %1099 = vector.extract_strided_slice %1090 {offsets = [0, 2], sizes = [2, 1], strides = [1, 1]} : vector<2x3xf32> to vector<2x1xf32>
    %1100 = vector.broadcast %1099 : vector<2x1xf32> to vector<2x12xf32>
    %1101 = arith.mulf %1100, %879 : vector<2x12xf32>
    %1102 = arith.addf %1098, %1101 : vector<2x12xf32>
    %1103 = vector.extract_strided_slice %868 {offsets = [14, 0], sizes = [2, 12], strides = [1, 1]} : vector<16x12xf32> to vector<2x12xf32>
    %1104 = arith.addf %1103, %1102 : vector<2x12xf32>
    %1105 = vector.extract_strided_slice %1104 {offsets = [0, 0], sizes = [2, 9], strides = [1, 1]} : vector<2x12xf32> to vector<2x9xf32>
    %1106 = arith.negf %1105 : vector<2x9xf32>
    %1107 = math.exp %1106 : vector<2x9xf32>
    %cst_138 = arith.constant 1.000000e+00 : f32
    %1108 = vector.broadcast %cst_138 : f32 to vector<2x9xf32>
    %1109 = arith.addf %1108, %1107 : vector<2x9xf32>
    %1110 = arith.divf %1108, %1109 : vector<2x9xf32>
    %1111 = vector.extract_strided_slice %1104 {offsets = [0, 9], sizes = [2, 3], strides = [1, 1]} : vector<2x12xf32> to vector<2x3xf32>
    %1112 = math.tanh %1111 : vector<2x3xf32>
    %1113 = vector.extract_strided_slice %1110 {offsets = [0, 0], sizes = [2, 3], strides = [1, 1]} : vector<2x9xf32> to vector<2x3xf32>
    %1114 = vector.extract_strided_slice %1110 {offsets = [0, 3], sizes = [2, 3], strides = [1, 1]} : vector<2x9xf32> to vector<2x3xf32>
    %1115 = vector.extract_strided_slice %1110 {offsets = [0, 6], sizes = [2, 3], strides = [1, 1]} : vector<2x9xf32> to vector<2x3xf32>
    %1116 = arith.mulf %1114, %1088 : vector<2x3xf32>
    %1117 = arith.mulf %1113, %1112 : vector<2x3xf32>
    %1118 = arith.addf %1116, %1117 : vector<2x3xf32>
    %1119 = math.tanh %1118 : vector<2x3xf32>
    %1120 = arith.mulf %1115, %1119 : vector<2x3xf32>
    %c14_139 = arith.constant 14 : index
    %c0_140 = arith.constant 0 : index
    %1121 = vector.load %arg7[%c14_139, %c0_140] : memref<16x3xf32, #tpu.memory_space<vmem>>, vector<2x3xf32>
    tpu.vector_store %arg7[%c14_139, %c0_140], %1120 {strides = array<i32>} : memref<16x3xf32, #tpu.memory_space<vmem>>, vector<2x3xf32>,
    %c0_141 = arith.constant 0 : index
    %c0_142 = arith.constant 0 : index
    %1122 = vector.load %arg7[%c0_141, %c0_142] : memref<16x3xf32, #tpu.memory_space<vmem>>, vector<16x3xf32>
    %c4_143 = arith.constant 4 : index
    %c0_144 = arith.constant 0 : index
    %c0_145 = arith.constant 0 : index
    %1123 = vector.load %arg1[%c4_143, %c0_144, %c0_145] : memref<5x3x12xf32, #tpu.memory_space<vmem>>, vector<1x3x12xf32>
    %1124 = vector.shape_cast %1123 : vector<1x3x12xf32> to vector<3x12xf32>
    %1125 = vector.extract_strided_slice %1122 {offsets = [0, 0], sizes = [16, 1], strides = [1, 1]} : vector<16x3xf32> to vector<16x1xf32>
    %1126 = vector.extract_strided_slice %1124 {offsets = [0, 0], sizes = [1, 12], strides = [1, 1]} : vector<3x12xf32> to vector<1x12xf32>
    %1127 = vector.shape_cast %1126 : vector<1x12xf32> to vector<1x12xf32>
    %1128 = vector.broadcast %1127 : vector<1x12xf32> to vector<16x12xf32>
    %1129 = vector.broadcast %1125 : vector<16x1xf32> to vector<16x12xf32>
    %1130 = arith.mulf %1129, %1128 : vector<16x12xf32>
    %1131 = vector.extract_strided_slice %1122 {offsets = [0, 1], sizes = [16, 1], strides = [1, 1]} : vector<16x3xf32> to vector<16x1xf32>
    %1132 = vector.extract_strided_slice %1124 {offsets = [1, 0], sizes = [1, 12], strides = [1, 1]} : vector<3x12xf32> to vector<1x12xf32>
    %1133 = vector.shape_cast %1132 : vector<1x12xf32> to vector<1x12xf32>
    %1134 = vector.broadcast %1133 : vector<1x12xf32> to vector<16x12xf32>
    %1135 = vector.broadcast %1131 : vector<16x1xf32> to vector<16x12xf32>
    %1136 = arith.mulf %1135, %1134 : vector<16x12xf32>
    %1137 = arith.addf %1130, %1136 : vector<16x12xf32>
    %1138 = vector.extract_strided_slice %1122 {offsets = [0, 2], sizes = [16, 1], strides = [1, 1]} : vector<16x3xf32> to vector<16x1xf32>
    %1139 = vector.extract_strided_slice %1124 {offsets = [2, 0], sizes = [1, 12], strides = [1, 1]} : vector<3x12xf32> to vector<1x12xf32>
    %1140 = vector.shape_cast %1139 : vector<1x12xf32> to vector<1x12xf32>
    %1141 = vector.broadcast %1140 : vector<1x12xf32> to vector<16x12xf32>
    %1142 = vector.broadcast %1138 : vector<16x1xf32> to vector<16x12xf32>
    %1143 = arith.mulf %1142, %1141 : vector<16x12xf32>
    %1144 = arith.addf %1137, %1143 : vector<16x12xf32>
    %c4_146 = arith.constant 4 : index
    %c0_147 = arith.constant 0 : index
    %c0_148 = arith.constant 0 : index
    %1145 = vector.load %arg3[%c4_146, %c0_147, %c0_148] : memref<5x1x12xf32, #tpu.memory_space<vmem>>, vector<1x1x12xf32>
    %1146 = vector.shape_cast %1145 : vector<1x1x12xf32> to vector<1x12xf32>
    %1147 = vector.broadcast %1146 : vector<1x12xf32> to vector<16x12xf32>
    %1148 = arith.addf %1144, %1147 : vector<16x12xf32>
    %c4_149 = arith.constant 4 : index
    %c0_150 = arith.constant 0 : index
    %c0_151 = arith.constant 0 : index
    %1149 = vector.load %arg2[%c4_149, %c0_150, %c0_151] : memref<5x3x12xf32, #tpu.memory_space<vmem>>, vector<1x3x12xf32>
    %1150 = vector.shape_cast %1149 : vector<1x3x12xf32> to vector<3x12xf32>
    %1151 = vector.extract_strided_slice %1150 {offsets = [0, 0], sizes = [1, 12], strides = [1, 1]} : vector<3x12xf32> to vector<1x12xf32>
    %1152 = vector.shape_cast %1151 : vector<1x12xf32> to vector<1x12xf32>
    %1153 = vector.broadcast %1152 : vector<1x12xf32> to vector<2x12xf32>
    %1154 = vector.extract_strided_slice %1150 {offsets = [1, 0], sizes = [1, 12], strides = [1, 1]} : vector<3x12xf32> to vector<1x12xf32>
    %1155 = vector.shape_cast %1154 : vector<1x12xf32> to vector<1x12xf32>
    %1156 = vector.broadcast %1155 : vector<1x12xf32> to vector<2x12xf32>
    %1157 = vector.extract_strided_slice %1150 {offsets = [2, 0], sizes = [1, 12], strides = [1, 1]} : vector<3x12xf32> to vector<1x12xf32>
    %1158 = vector.shape_cast %1157 : vector<1x12xf32> to vector<1x12xf32>
    %1159 = vector.broadcast %1158 : vector<1x12xf32> to vector<2x12xf32>
    %cst_152 = arith.constant 0.000000e+00 : f32
    %1160 = vector.broadcast %cst_152 : f32 to vector<2x3xf32>
    %cst_153 = arith.constant 0.000000e+00 : f32
    %1161 = vector.broadcast %cst_153 : f32 to vector<2x3xf32>
    %1162 = vector.extract_strided_slice %1160 {offsets = [0, 0], sizes = [2, 1], strides = [1, 1]} : vector<2x3xf32> to vector<2x1xf32>
    %1163 = vector.broadcast %1162 : vector<2x1xf32> to vector<2x12xf32>
    %1164 = arith.mulf %1163, %1153 : vector<2x12xf32>
    %1165 = vector.extract_strided_slice %1160 {offsets = [0, 1], sizes = [2, 1], strides = [1, 1]} : vector<2x3xf32> to vector<2x1xf32>
    %1166 = vector.broadcast %1165 : vector<2x1xf32> to vector<2x12xf32>
    %1167 = arith.mulf %1166, %1156 : vector<2x12xf32>
    %1168 = arith.addf %1164, %1167 : vector<2x12xf32>
    %1169 = vector.extract_strided_slice %1160 {offsets = [0, 2], sizes = [2, 1], strides = [1, 1]} : vector<2x3xf32> to vector<2x1xf32>
    %1170 = vector.broadcast %1169 : vector<2x1xf32> to vector<2x12xf32>
    %1171 = arith.mulf %1170, %1159 : vector<2x12xf32>
    %1172 = arith.addf %1168, %1171 : vector<2x12xf32>
    %1173 = vector.extract_strided_slice %1148 {offsets = [0, 0], sizes = [2, 12], strides = [1, 1]} : vector<16x12xf32> to vector<2x12xf32>
    %1174 = arith.addf %1173, %1172 : vector<2x12xf32>
    %1175 = vector.extract_strided_slice %1174 {offsets = [0, 0], sizes = [2, 9], strides = [1, 1]} : vector<2x12xf32> to vector<2x9xf32>
    %1176 = arith.negf %1175 : vector<2x9xf32>
    %1177 = math.exp %1176 : vector<2x9xf32>
    %cst_154 = arith.constant 1.000000e+00 : f32
    %1178 = vector.broadcast %cst_154 : f32 to vector<2x9xf32>
    %1179 = arith.addf %1178, %1177 : vector<2x9xf32>
    %1180 = arith.divf %1178, %1179 : vector<2x9xf32>
    %1181 = vector.extract_strided_slice %1174 {offsets = [0, 9], sizes = [2, 3], strides = [1, 1]} : vector<2x12xf32> to vector<2x3xf32>
    %1182 = math.tanh %1181 : vector<2x3xf32>
    %1183 = vector.extract_strided_slice %1180 {offsets = [0, 0], sizes = [2, 3], strides = [1, 1]} : vector<2x9xf32> to vector<2x3xf32>
    %1184 = vector.extract_strided_slice %1180 {offsets = [0, 3], sizes = [2, 3], strides = [1, 1]} : vector<2x9xf32> to vector<2x3xf32>
    %1185 = vector.extract_strided_slice %1180 {offsets = [0, 6], sizes = [2, 3], strides = [1, 1]} : vector<2x9xf32> to vector<2x3xf32>
    %1186 = arith.mulf %1184, %1161 : vector<2x3xf32>
    %1187 = arith.mulf %1183, %1182 : vector<2x3xf32>
    %1188 = arith.addf %1186, %1187 : vector<2x3xf32>
    %1189 = math.tanh %1188 : vector<2x3xf32>
    %1190 = arith.mulf %1185, %1189 : vector<2x3xf32>
    %1191 = vector.extract_strided_slice %1190 {offsets = [0, 0], sizes = [2, 1], strides = [1, 1]} : vector<2x3xf32> to vector<2x1xf32>
    %1192 = vector.broadcast %1191 : vector<2x1xf32> to vector<2x12xf32>
    %1193 = arith.mulf %1192, %1153 : vector<2x12xf32>
    %1194 = vector.extract_strided_slice %1190 {offsets = [0, 1], sizes = [2, 1], strides = [1, 1]} : vector<2x3xf32> to vector<2x1xf32>
    %1195 = vector.broadcast %1194 : vector<2x1xf32> to vector<2x12xf32>
    %1196 = arith.mulf %1195, %1156 : vector<2x12xf32>
    %1197 = arith.addf %1193, %1196 : vector<2x12xf32>
    %1198 = vector.extract_strided_slice %1190 {offsets = [0, 2], sizes = [2, 1], strides = [1, 1]} : vector<2x3xf32> to vector<2x1xf32>
    %1199 = vector.broadcast %1198 : vector<2x1xf32> to vector<2x12xf32>
    %1200 = arith.mulf %1199, %1159 : vector<2x12xf32>
    %1201 = arith.addf %1197, %1200 : vector<2x12xf32>
    %1202 = vector.extract_strided_slice %1148 {offsets = [2, 0], sizes = [2, 12], strides = [1, 1]} : vector<16x12xf32> to vector<2x12xf32>
    %1203 = arith.addf %1202, %1201 : vector<2x12xf32>
    %1204 = vector.extract_strided_slice %1203 {offsets = [0, 0], sizes = [2, 9], strides = [1, 1]} : vector<2x12xf32> to vector<2x9xf32>
    %1205 = arith.negf %1204 : vector<2x9xf32>
    %1206 = math.exp %1205 : vector<2x9xf32>
    %cst_155 = arith.constant 1.000000e+00 : f32
    %1207 = vector.broadcast %cst_155 : f32 to vector<2x9xf32>
    %1208 = arith.addf %1207, %1206 : vector<2x9xf32>
    %1209 = arith.divf %1207, %1208 : vector<2x9xf32>
    %1210 = vector.extract_strided_slice %1203 {offsets = [0, 9], sizes = [2, 3], strides = [1, 1]} : vector<2x12xf32> to vector<2x3xf32>
    %1211 = math.tanh %1210 : vector<2x3xf32>
    %1212 = vector.extract_strided_slice %1209 {offsets = [0, 0], sizes = [2, 3], strides = [1, 1]} : vector<2x9xf32> to vector<2x3xf32>
    %1213 = vector.extract_strided_slice %1209 {offsets = [0, 3], sizes = [2, 3], strides = [1, 1]} : vector<2x9xf32> to vector<2x3xf32>
    %1214 = vector.extract_strided_slice %1209 {offsets = [0, 6], sizes = [2, 3], strides = [1, 1]} : vector<2x9xf32> to vector<2x3xf32>
    %1215 = arith.mulf %1213, %1188 : vector<2x3xf32>
    %1216 = arith.mulf %1212, %1211 : vector<2x3xf32>
    %1217 = arith.addf %1215, %1216 : vector<2x3xf32>
    %1218 = math.tanh %1217 : vector<2x3xf32>
    %1219 = arith.mulf %1214, %1218 : vector<2x3xf32>
    %1220 = vector.extract_strided_slice %1219 {offsets = [0, 0], sizes = [2, 1], strides = [1, 1]} : vector<2x3xf32> to vector<2x1xf32>
    %1221 = vector.broadcast %1220 : vector<2x1xf32> to vector<2x12xf32>
    %1222 = arith.mulf %1221, %1153 : vector<2x12xf32>
    %1223 = vector.extract_strided_slice %1219 {offsets = [0, 1], sizes = [2, 1], strides = [1, 1]} : vector<2x3xf32> to vector<2x1xf32>
    %1224 = vector.broadcast %1223 : vector<2x1xf32> to vector<2x12xf32>
    %1225 = arith.mulf %1224, %1156 : vector<2x12xf32>
    %1226 = arith.addf %1222, %1225 : vector<2x12xf32>
    %1227 = vector.extract_strided_slice %1219 {offsets = [0, 2], sizes = [2, 1], strides = [1, 1]} : vector<2x3xf32> to vector<2x1xf32>
    %1228 = vector.broadcast %1227 : vector<2x1xf32> to vector<2x12xf32>
    %1229 = arith.mulf %1228, %1159 : vector<2x12xf32>
    %1230 = arith.addf %1226, %1229 : vector<2x12xf32>
    %1231 = vector.extract_strided_slice %1148 {offsets = [4, 0], sizes = [2, 12], strides = [1, 1]} : vector<16x12xf32> to vector<2x12xf32>
    %1232 = arith.addf %1231, %1230 : vector<2x12xf32>
    %1233 = vector.extract_strided_slice %1232 {offsets = [0, 0], sizes = [2, 9], strides = [1, 1]} : vector<2x12xf32> to vector<2x9xf32>
    %1234 = arith.negf %1233 : vector<2x9xf32>
    %1235 = math.exp %1234 : vector<2x9xf32>
    %cst_156 = arith.constant 1.000000e+00 : f32
    %1236 = vector.broadcast %cst_156 : f32 to vector<2x9xf32>
    %1237 = arith.addf %1236, %1235 : vector<2x9xf32>
    %1238 = arith.divf %1236, %1237 : vector<2x9xf32>
    %1239 = vector.extract_strided_slice %1232 {offsets = [0, 9], sizes = [2, 3], strides = [1, 1]} : vector<2x12xf32> to vector<2x3xf32>
    %1240 = math.tanh %1239 : vector<2x3xf32>
    %1241 = vector.extract_strided_slice %1238 {offsets = [0, 0], sizes = [2, 3], strides = [1, 1]} : vector<2x9xf32> to vector<2x3xf32>
    %1242 = vector.extract_strided_slice %1238 {offsets = [0, 3], sizes = [2, 3], strides = [1, 1]} : vector<2x9xf32> to vector<2x3xf32>
    %1243 = vector.extract_strided_slice %1238 {offsets = [0, 6], sizes = [2, 3], strides = [1, 1]} : vector<2x9xf32> to vector<2x3xf32>
    %1244 = arith.mulf %1242, %1217 : vector<2x3xf32>
    %1245 = arith.mulf %1241, %1240 : vector<2x3xf32>
    %1246 = arith.addf %1244, %1245 : vector<2x3xf32>
    %1247 = math.tanh %1246 : vector<2x3xf32>
    %1248 = arith.mulf %1243, %1247 : vector<2x3xf32>
    %1249 = vector.extract_strided_slice %1248 {offsets = [0, 0], sizes = [2, 1], strides = [1, 1]} : vector<2x3xf32> to vector<2x1xf32>
    %1250 = vector.broadcast %1249 : vector<2x1xf32> to vector<2x12xf32>
    %1251 = arith.mulf %1250, %1153 : vector<2x12xf32>
    %1252 = vector.extract_strided_slice %1248 {offsets = [0, 1], sizes = [2, 1], strides = [1, 1]} : vector<2x3xf32> to vector<2x1xf32>
    %1253 = vector.broadcast %1252 : vector<2x1xf32> to vector<2x12xf32>
    %1254 = arith.mulf %1253, %1156 : vector<2x12xf32>
    %1255 = arith.addf %1251, %1254 : vector<2x12xf32>
    %1256 = vector.extract_strided_slice %1248 {offsets = [0, 2], sizes = [2, 1], strides = [1, 1]} : vector<2x3xf32> to vector<2x1xf32>
    %1257 = vector.broadcast %1256 : vector<2x1xf32> to vector<2x12xf32>
    %1258 = arith.mulf %1257, %1159 : vector<2x12xf32>
    %1259 = arith.addf %1255, %1258 : vector<2x12xf32>
    %1260 = vector.extract_strided_slice %1148 {offsets = [6, 0], sizes = [2, 12], strides = [1, 1]} : vector<16x12xf32> to vector<2x12xf32>
    %1261 = arith.addf %1260, %1259 : vector<2x12xf32>
    %1262 = vector.extract_strided_slice %1261 {offsets = [0, 0], sizes = [2, 9], strides = [1, 1]} : vector<2x12xf32> to vector<2x9xf32>
    %1263 = arith.negf %1262 : vector<2x9xf32>
    %1264 = math.exp %1263 : vector<2x9xf32>
    %cst_157 = arith.constant 1.000000e+00 : f32
    %1265 = vector.broadcast %cst_157 : f32 to vector<2x9xf32>
    %1266 = arith.addf %1265, %1264 : vector<2x9xf32>
    %1267 = arith.divf %1265, %1266 : vector<2x9xf32>
    %1268 = vector.extract_strided_slice %1261 {offsets = [0, 9], sizes = [2, 3], strides = [1, 1]} : vector<2x12xf32> to vector<2x3xf32>
    %1269 = math.tanh %1268 : vector<2x3xf32>
    %1270 = vector.extract_strided_slice %1267 {offsets = [0, 0], sizes = [2, 3], strides = [1, 1]} : vector<2x9xf32> to vector<2x3xf32>
    %1271 = vector.extract_strided_slice %1267 {offsets = [0, 3], sizes = [2, 3], strides = [1, 1]} : vector<2x9xf32> to vector<2x3xf32>
    %1272 = vector.extract_strided_slice %1267 {offsets = [0, 6], sizes = [2, 3], strides = [1, 1]} : vector<2x9xf32> to vector<2x3xf32>
    %1273 = arith.mulf %1271, %1246 : vector<2x3xf32>
    %1274 = arith.mulf %1270, %1269 : vector<2x3xf32>
    %1275 = arith.addf %1273, %1274 : vector<2x3xf32>
    %1276 = math.tanh %1275 : vector<2x3xf32>
    %1277 = arith.mulf %1272, %1276 : vector<2x3xf32>
    %1278 = vector.extract_strided_slice %1277 {offsets = [0, 0], sizes = [2, 1], strides = [1, 1]} : vector<2x3xf32> to vector<2x1xf32>
    %1279 = vector.broadcast %1278 : vector<2x1xf32> to vector<2x12xf32>
    %1280 = arith.mulf %1279, %1153 : vector<2x12xf32>
    %1281 = vector.extract_strided_slice %1277 {offsets = [0, 1], sizes = [2, 1], strides = [1, 1]} : vector<2x3xf32> to vector<2x1xf32>
    %1282 = vector.broadcast %1281 : vector<2x1xf32> to vector<2x12xf32>
    %1283 = arith.mulf %1282, %1156 : vector<2x12xf32>
    %1284 = arith.addf %1280, %1283 : vector<2x12xf32>
    %1285 = vector.extract_strided_slice %1277 {offsets = [0, 2], sizes = [2, 1], strides = [1, 1]} : vector<2x3xf32> to vector<2x1xf32>
    %1286 = vector.broadcast %1285 : vector<2x1xf32> to vector<2x12xf32>
    %1287 = arith.mulf %1286, %1159 : vector<2x12xf32>
    %1288 = arith.addf %1284, %1287 : vector<2x12xf32>
    %1289 = vector.extract_strided_slice %1148 {offsets = [8, 0], sizes = [2, 12], strides = [1, 1]} : vector<16x12xf32> to vector<2x12xf32>
    %1290 = arith.addf %1289, %1288 : vector<2x12xf32>
    %1291 = vector.extract_strided_slice %1290 {offsets = [0, 0], sizes = [2, 9], strides = [1, 1]} : vector<2x12xf32> to vector<2x9xf32>
    %1292 = arith.negf %1291 : vector<2x9xf32>
    %1293 = math.exp %1292 : vector<2x9xf32>
    %cst_158 = arith.constant 1.000000e+00 : f32
    %1294 = vector.broadcast %cst_158 : f32 to vector<2x9xf32>
    %1295 = arith.addf %1294, %1293 : vector<2x9xf32>
    %1296 = arith.divf %1294, %1295 : vector<2x9xf32>
    %1297 = vector.extract_strided_slice %1290 {offsets = [0, 9], sizes = [2, 3], strides = [1, 1]} : vector<2x12xf32> to vector<2x3xf32>
    %1298 = math.tanh %1297 : vector<2x3xf32>
    %1299 = vector.extract_strided_slice %1296 {offsets = [0, 0], sizes = [2, 3], strides = [1, 1]} : vector<2x9xf32> to vector<2x3xf32>
    %1300 = vector.extract_strided_slice %1296 {offsets = [0, 3], sizes = [2, 3], strides = [1, 1]} : vector<2x9xf32> to vector<2x3xf32>
    %1301 = vector.extract_strided_slice %1296 {offsets = [0, 6], sizes = [2, 3], strides = [1, 1]} : vector<2x9xf32> to vector<2x3xf32>
    %1302 = arith.mulf %1300, %1275 : vector<2x3xf32>
    %1303 = arith.mulf %1299, %1298 : vector<2x3xf32>
    %1304 = arith.addf %1302, %1303 : vector<2x3xf32>
    %1305 = math.tanh %1304 : vector<2x3xf32>
    %1306 = arith.mulf %1301, %1305 : vector<2x3xf32>
    %1307 = vector.extract_strided_slice %1306 {offsets = [0, 0], sizes = [2, 1], strides = [1, 1]} : vector<2x3xf32> to vector<2x1xf32>
    %1308 = vector.broadcast %1307 : vector<2x1xf32> to vector<2x12xf32>
    %1309 = arith.mulf %1308, %1153 : vector<2x12xf32>
    %1310 = vector.extract_strided_slice %1306 {offsets = [0, 1], sizes = [2, 1], strides = [1, 1]} : vector<2x3xf32> to vector<2x1xf32>
    %1311 = vector.broadcast %1310 : vector<2x1xf32> to vector<2x12xf32>
    %1312 = arith.mulf %1311, %1156 : vector<2x12xf32>
    %1313 = arith.addf %1309, %1312 : vector<2x12xf32>
    %1314 = vector.extract_strided_slice %1306 {offsets = [0, 2], sizes = [2, 1], strides = [1, 1]} : vector<2x3xf32> to vector<2x1xf32>
    %1315 = vector.broadcast %1314 : vector<2x1xf32> to vector<2x12xf32>
    %1316 = arith.mulf %1315, %1159 : vector<2x12xf32>
    %1317 = arith.addf %1313, %1316 : vector<2x12xf32>
    %1318 = vector.extract_strided_slice %1148 {offsets = [10, 0], sizes = [2, 12], strides = [1, 1]} : vector<16x12xf32> to vector<2x12xf32>
    %1319 = arith.addf %1318, %1317 : vector<2x12xf32>
    %1320 = vector.extract_strided_slice %1319 {offsets = [0, 0], sizes = [2, 9], strides = [1, 1]} : vector<2x12xf32> to vector<2x9xf32>
    %1321 = arith.negf %1320 : vector<2x9xf32>
    %1322 = math.exp %1321 : vector<2x9xf32>
    %cst_159 = arith.constant 1.000000e+00 : f32
    %1323 = vector.broadcast %cst_159 : f32 to vector<2x9xf32>
    %1324 = arith.addf %1323, %1322 : vector<2x9xf32>
    %1325 = arith.divf %1323, %1324 : vector<2x9xf32>
    %1326 = vector.extract_strided_slice %1319 {offsets = [0, 9], sizes = [2, 3], strides = [1, 1]} : vector<2x12xf32> to vector<2x3xf32>
    %1327 = math.tanh %1326 : vector<2x3xf32>
    %1328 = vector.extract_strided_slice %1325 {offsets = [0, 0], sizes = [2, 3], strides = [1, 1]} : vector<2x9xf32> to vector<2x3xf32>
    %1329 = vector.extract_strided_slice %1325 {offsets = [0, 3], sizes = [2, 3], strides = [1, 1]} : vector<2x9xf32> to vector<2x3xf32>
    %1330 = vector.extract_strided_slice %1325 {offsets = [0, 6], sizes = [2, 3], strides = [1, 1]} : vector<2x9xf32> to vector<2x3xf32>
    %1331 = arith.mulf %1329, %1304 : vector<2x3xf32>
    %1332 = arith.mulf %1328, %1327 : vector<2x3xf32>
    %1333 = arith.addf %1331, %1332 : vector<2x3xf32>
    %1334 = math.tanh %1333 : vector<2x3xf32>
    %1335 = arith.mulf %1330, %1334 : vector<2x3xf32>
    %1336 = vector.extract_strided_slice %1335 {offsets = [0, 0], sizes = [2, 1], strides = [1, 1]} : vector<2x3xf32> to vector<2x1xf32>
    %1337 = vector.broadcast %1336 : vector<2x1xf32> to vector<2x12xf32>
    %1338 = arith.mulf %1337, %1153 : vector<2x12xf32>
    %1339 = vector.extract_strided_slice %1335 {offsets = [0, 1], sizes = [2, 1], strides = [1, 1]} : vector<2x3xf32> to vector<2x1xf32>
    %1340 = vector.broadcast %1339 : vector<2x1xf32> to vector<2x12xf32>
    %1341 = arith.mulf %1340, %1156 : vector<2x12xf32>
    %1342 = arith.addf %1338, %1341 : vector<2x12xf32>
    %1343 = vector.extract_strided_slice %1335 {offsets = [0, 2], sizes = [2, 1], strides = [1, 1]} : vector<2x3xf32> to vector<2x1xf32>
    %1344 = vector.broadcast %1343 : vector<2x1xf32> to vector<2x12xf32>
    %1345 = arith.mulf %1344, %1159 : vector<2x12xf32>
    %1346 = arith.addf %1342, %1345 : vector<2x12xf32>
    %1347 = vector.extract_strided_slice %1148 {offsets = [12, 0], sizes = [2, 12], strides = [1, 1]} : vector<16x12xf32> to vector<2x12xf32>
    %1348 = arith.addf %1347, %1346 : vector<2x12xf32>
    %1349 = vector.extract_strided_slice %1348 {offsets = [0, 0], sizes = [2, 9], strides = [1, 1]} : vector<2x12xf32> to vector<2x9xf32>
    %1350 = arith.negf %1349 : vector<2x9xf32>
    %1351 = math.exp %1350 : vector<2x9xf32>
    %cst_160 = arith.constant 1.000000e+00 : f32
    %1352 = vector.broadcast %cst_160 : f32 to vector<2x9xf32>
    %1353 = arith.addf %1352, %1351 : vector<2x9xf32>
    %1354 = arith.divf %1352, %1353 : vector<2x9xf32>
    %1355 = vector.extract_strided_slice %1348 {offsets = [0, 9], sizes = [2, 3], strides = [1, 1]} : vector<2x12xf32> to vector<2x3xf32>
    %1356 = math.tanh %1355 : vector<2x3xf32>
    %1357 = vector.extract_strided_slice %1354 {offsets = [0, 0], sizes = [2, 3], strides = [1, 1]} : vector<2x9xf32> to vector<2x3xf32>
    %1358 = vector.extract_strided_slice %1354 {offsets = [0, 3], sizes = [2, 3], strides = [1, 1]} : vector<2x9xf32> to vector<2x3xf32>
    %1359 = vector.extract_strided_slice %1354 {offsets = [0, 6], sizes = [2, 3], strides = [1, 1]} : vector<2x9xf32> to vector<2x3xf32>
    %1360 = arith.mulf %1358, %1333 : vector<2x3xf32>
    %1361 = arith.mulf %1357, %1356 : vector<2x3xf32>
    %1362 = arith.addf %1360, %1361 : vector<2x3xf32>
    %1363 = math.tanh %1362 : vector<2x3xf32>
    %1364 = arith.mulf %1359, %1363 : vector<2x3xf32>
    %1365 = vector.extract_strided_slice %1364 {offsets = [0, 0], sizes = [2, 1], strides = [1, 1]} : vector<2x3xf32> to vector<2x1xf32>
    %1366 = vector.broadcast %1365 : vector<2x1xf32> to vector<2x12xf32>
    %1367 = arith.mulf %1366, %1153 : vector<2x12xf32>
    %1368 = vector.extract_strided_slice %1364 {offsets = [0, 1], sizes = [2, 1], strides = [1, 1]} : vector<2x3xf32> to vector<2x1xf32>
    %1369 = vector.broadcast %1368 : vector<2x1xf32> to vector<2x12xf32>
    %1370 = arith.mulf %1369, %1156 : vector<2x12xf32>
    %1371 = arith.addf %1367, %1370 : vector<2x12xf32>
    %1372 = vector.extract_strided_slice %1364 {offsets = [0, 2], sizes = [2, 1], strides = [1, 1]} : vector<2x3xf32> to vector<2x1xf32>
    %1373 = vector.broadcast %1372 : vector<2x1xf32> to vector<2x12xf32>
    %1374 = arith.mulf %1373, %1159 : vector<2x12xf32>
    %1375 = arith.addf %1371, %1374 : vector<2x12xf32>
    %1376 = vector.extract_strided_slice %1148 {offsets = [14, 0], sizes = [2, 12], strides = [1, 1]} : vector<16x12xf32> to vector<2x12xf32>
    %1377 = arith.addf %1376, %1375 : vector<2x12xf32>
    %1378 = vector.extract_strided_slice %1377 {offsets = [0, 0], sizes = [2, 9], strides = [1, 1]} : vector<2x12xf32> to vector<2x9xf32>
    %1379 = arith.negf %1378 : vector<2x9xf32>
    %1380 = math.exp %1379 : vector<2x9xf32>
    %cst_161 = arith.constant 1.000000e+00 : f32
    %1381 = vector.broadcast %cst_161 : f32 to vector<2x9xf32>
    %1382 = arith.addf %1381, %1380 : vector<2x9xf32>
    %1383 = arith.divf %1381, %1382 : vector<2x9xf32>
    %1384 = vector.extract_strided_slice %1377 {offsets = [0, 9], sizes = [2, 3], strides = [1, 1]} : vector<2x12xf32> to vector<2x3xf32>
    %1385 = math.tanh %1384 : vector<2x3xf32>
    %1386 = vector.extract_strided_slice %1383 {offsets = [0, 0], sizes = [2, 3], strides = [1, 1]} : vector<2x9xf32> to vector<2x3xf32>
    %1387 = vector.extract_strided_slice %1383 {offsets = [0, 3], sizes = [2, 3], strides = [1, 1]} : vector<2x9xf32> to vector<2x3xf32>
    %1388 = vector.extract_strided_slice %1383 {offsets = [0, 6], sizes = [2, 3], strides = [1, 1]} : vector<2x9xf32> to vector<2x3xf32>
    %1389 = arith.mulf %1387, %1362 : vector<2x3xf32>
    %1390 = arith.mulf %1386, %1385 : vector<2x3xf32>
    %1391 = arith.addf %1389, %1390 : vector<2x3xf32>
    %1392 = math.tanh %1391 : vector<2x3xf32>
    %1393 = arith.mulf %1388, %1392 : vector<2x3xf32>
    %c0_162 = arith.constant 0 : index
    %c0_163 = arith.constant 0 : index
    %1394 = vector.load %arg4[%c0_162, %c0_163] : memref<3x3xf32, #tpu.memory_space<vmem>>, vector<3x3xf32>
    %1395 = vector.extract_strided_slice %1393 {offsets = [0, 0], sizes = [2, 1], strides = [1, 1]} : vector<2x3xf32> to vector<2x1xf32>
    %1396 = vector.extract_strided_slice %1394 {offsets = [0, 0], sizes = [1, 3], strides = [1, 1]} : vector<3x3xf32> to vector<1x3xf32>
    %1397 = vector.shape_cast %1396 : vector<1x3xf32> to vector<1x3xf32>
    %1398 = vector.broadcast %1397 : vector<1x3xf32> to vector<2x3xf32>
    %1399 = vector.broadcast %1395 : vector<2x1xf32> to vector<2x3xf32>
    %1400 = arith.mulf %1399, %1398 : vector<2x3xf32>
    %1401 = vector.extract_strided_slice %1393 {offsets = [0, 1], sizes = [2, 1], strides = [1, 1]} : vector<2x3xf32> to vector<2x1xf32>
    %1402 = vector.extract_strided_slice %1394 {offsets = [1, 0], sizes = [1, 3], strides = [1, 1]} : vector<3x3xf32> to vector<1x3xf32>
    %1403 = vector.shape_cast %1402 : vector<1x3xf32> to vector<1x3xf32>
    %1404 = vector.broadcast %1403 : vector<1x3xf32> to vector<2x3xf32>
    %1405 = vector.broadcast %1401 : vector<2x1xf32> to vector<2x3xf32>
    %1406 = arith.mulf %1405, %1404 : vector<2x3xf32>
    %1407 = arith.addf %1400, %1406 : vector<2x3xf32>
    %1408 = vector.extract_strided_slice %1393 {offsets = [0, 2], sizes = [2, 1], strides = [1, 1]} : vector<2x3xf32> to vector<2x1xf32>
    %1409 = vector.extract_strided_slice %1394 {offsets = [2, 0], sizes = [1, 3], strides = [1, 1]} : vector<3x3xf32> to vector<1x3xf32>
    %1410 = vector.shape_cast %1409 : vector<1x3xf32> to vector<1x3xf32>
    %1411 = vector.broadcast %1410 : vector<1x3xf32> to vector<2x3xf32>
    %1412 = vector.broadcast %1408 : vector<2x1xf32> to vector<2x3xf32>
    %1413 = arith.mulf %1412, %1411 : vector<2x3xf32>
    %1414 = arith.addf %1407, %1413 : vector<2x3xf32>
    %c0_164 = arith.constant 0 : index
    %c0_165 = arith.constant 0 : index
    %1415 = vector.load %arg5[%c0_164, %c0_165] : memref<1x3xf32, #tpu.memory_space<vmem>>, vector<1x3xf32>
    %1416 = vector.broadcast %1415 : vector<1x3xf32> to vector<2x3xf32>
    %1417 = arith.addf %1414, %1416 : vector<2x3xf32>
    %c14_166 = arith.constant 14 : index
    %c0_167 = arith.constant 0 : index
    %1418 = vector.load %arg0[%c14_166, %c0_167] : memref<16x3xf32, #tpu.memory_space<vmem>>, vector<2x3xf32>
    %cst_168 = arith.constant 1.000000e+00 : f32
    %1419 = vector.broadcast %cst_168 : f32 to vector<2x3xf32>
    %1420 = arith.addf %1419, %1417 : vector<2x3xf32>
    %1421 = arith.mulf %1420, %1418 : vector<2x3xf32>
    %cst_169 = arith.constant 0.000000e+00 : f32
    %1422 = vector.broadcast %cst_169 : f32 to vector<2x3xf32>
    %1423 = arith.maximumf %1421, %1422 : vector<2x3xf32>
    %c0_170 = arith.constant 0 : index
    %c0_171 = arith.constant 0 : index
    %1424 = vector.load %arg6[%c0_170, %c0_171] : memref<2x3xf32, #tpu.memory_space<vmem>>, vector<2x3xf32>
    tpu.vector_store %arg6[%c0_170, %c0_171], %1423 {strides = array<i32>} : memref<2x3xf32, #tpu.memory_space<vmem>>, vector<2x3xf32>,
    return
  }
}

</mosaic_0001>

<llo_original>
// kernel: tpu_custom_call.1
$region0: #{tpu_custom_call.1}
  #allocation0 [shape = 'u32[]', space=smem, size = 0x4, offset = 0x4, fixed_abs, tag = 'smem constant byte address 0x4 - core index']
  #allocation1 [shape = 'u32[72,128]{1,0:T(1,128)}', space=vmem, size = 0x9000, scoped, tag = 'internal scratch']
  #allocation2 [shape = 'f32[16,3]{1,0:T(8,128)}', space=vmem, size = 0x2000, scoped, tag = 'scratch operand']
  %s0 = inlined_call_operand.vmem [shape: f32[16,3], index: 0, kind: input, shape index: {}]
  %s1 = inlined_call_operand.vmem [shape: f32[5,3,12], index: 1, kind: input, shape index: {}]
  %s2 = inlined_call_operand.hbm [shape: f32[5,3,12], index: 2, kind: input, shape index: {}]
  %s3 = inlined_call_operand.hbm [shape: f32[5,1,12], index: 3, kind: input, shape index: {}]
  %s4 = inlined_call_operand.hbm [shape: f32[3,3], index: 4, kind: input, shape index: {}]
  %s5 = inlined_call_operand.vmem [shape: f32[1,3], index: 5, kind: input, shape index: {}]
  %s6 = inlined_call_operand.hbm [shape: f32[2,3], index: 6, kind: output, shape index: {}]
  %s7 = sld [smem:[#allocation0]]
  $region46: #{tpu_custom_call.1} parent=0
    _
  %s9 = ssub.s32 1, %s7
  %s10 = scalar_select 0, %s9, %s7
  $region1: #{tpu_custom_call.1} parent=0
    #allocation3 [shape = 'u8[10240]{0}', space=vmem, size = 0x2800, scoped, tag = 'input window, operand 2, single buffered']
    #allocation4 [shape = 's32[1]{0}', space=sflag, size = 0x4, scoped, tag = 'scoped memory for tpu_custom_call.1']
    #allocation5 [shape = 's32[1]{0}', space=sflag, size = 0x4, scoped, tag = 'scoped memory for tpu_custom_call.1']
    #allocation6 [shape = 'u8[2560]{0}', space=vmem, size = 0xc00, scoped, tag = 'input window, operand 3, single buffered']
    #allocation7 [shape = 's32[1]{0}', space=sflag, size = 0x4, scoped, tag = 'scoped memory for tpu_custom_call.1']
    #allocation8 [shape = 'u8[2048]{0}', space=vmem, size = 0x800, scoped, tag = 'input window, operand 4, single buffered']
    #allocation9 [shape = 'u8[1024]{0}', space=vmem, size = 0x400, scoped, tag = 'output window, operand 0, single buffered']
    %11 = vsyncpa [#allocation4], 0
    %12 = vsyncpa [#allocation7], 0
    %13 = vsyncpa [#allocation5], 0
    // Predicated region
    $region2: #{tpu_custom_call.1} parent=1 // pred_check
      _
    $region3: #{tpu_custom_call.1} parent=1 // pred_check_branch
      %15 = sbr.rel (0) target = $region5
    $region4: #{tpu_custom_call.1} parent=1 // pred_region
      _
    $region5: #{tpu_custom_call.1} parent=1 // pred_fallthru
      _
    // Predicated region
    $region6: #{tpu_custom_call.1} parent=1 // pred_check
      _
    $region7: #{tpu_custom_call.1} parent=1 // pred_check_branch
      %17 = sbr.rel (0) target = $region9
    $region8: #{tpu_custom_call.1} parent=1 // pred_region
      _
    $region9: #{tpu_custom_call.1} parent=1 // pred_fallthru
      _
    // Predicated region
    $region10: #{tpu_custom_call.1} parent=1 // pred_check
      _
    $region11: #{tpu_custom_call.1} parent=1 // pred_check_branch
      %19 = sbr.rel (0) target = $region13
    $region12: #{tpu_custom_call.1} parent=1 // pred_region
      %21 = vsyncadd [#allocation4], 0
      %s22 = sshll.u32 %s2, 4
      %s23 = int_to_ptr.hbm [resolvable:$true] %s22
      %s24 = sshll.u32 [#allocation3], 4
      %s25 = int_to_ptr.vmem [resolvable:$true] %s24
      %30 = dma.hbm_to_vmem [thread:$0]  %s23, 320, %s25, [#allocation4], 64, 64, 4
    $region13: #{tpu_custom_call.1} parent=1 // pred_fallthru
      _
    // Predicated region
    $region14: #{tpu_custom_call.1} parent=1 // pred_check
      _
    $region15: #{tpu_custom_call.1} parent=1 // pred_check_branch
      %32 = sbr.rel (0) target = $region17
    $region16: #{tpu_custom_call.1} parent=1 // pred_region
      %34 = vsyncadd [#allocation7], 0
      %s35 = sshll.u32 %s3, 4
      %s36 = int_to_ptr.hbm [resolvable:$true] %s35
      %s37 = sshll.u32 [#allocation6], 4
      %s38 = int_to_ptr.vmem [resolvable:$true] %s37
      %43 = dma.hbm_to_vmem [thread:$0]  %s36, 80, %s38, [#allocation7], 16, 16, 1
    $region17: #{tpu_custom_call.1} parent=1 // pred_fallthru
      _
    // Predicated region
    $region18: #{tpu_custom_call.1} parent=1 // pred_check
      _
    $region19: #{tpu_custom_call.1} parent=1 // pred_check_branch
      %45 = sbr.rel (0) target = $region21
    $region20: #{tpu_custom_call.1} parent=1 // pred_region
      %47 = vsyncadd [#allocation7], 0
      %s49 = sshll.u32 %s4, 4
      %s50 = int_to_ptr.hbm [resolvable:$true] %s49
      %s51 = sshll.u32 [#allocation8], 4
      %s52 = int_to_ptr.vmem [resolvable:$true] %s51
      %54 = dma.hbm_to_vmem [thread:$0]  %s50, 64, %s52, [#allocation7]
    $region21: #{tpu_custom_call.1} parent=1 // pred_fallthru
      _
    // Predicated region
    $region22: #{tpu_custom_call.1} parent=1 // pred_check
      _
    $region23: #{tpu_custom_call.1} parent=1 // pred_check_branch
      %56 = sbr.rel (0) target = $region25
    $region24: #{tpu_custom_call.1} parent=1 // pred_region
      _
    $region25: #{tpu_custom_call.1} parent=1 // pred_fallthru
      _
    // Predicated region
    $region26: #{tpu_custom_call.1} parent=1 // pred_check
      _
    $region27: #{tpu_custom_call.1} parent=1 // pred_check_branch
      %58 = sbr.rel (0) target = $region29
    $region28: #{tpu_custom_call.1} parent=1 // pred_region
      %60 = dma.done [#allocation4], 320
    $region29: #{tpu_custom_call.1} parent=1 // pred_fallthru
      _
    // Predicated region
    $region30: #{tpu_custom_call.1} parent=1 // pred_check
      _
    $region31: #{tpu_custom_call.1} parent=1 // pred_check_branch
      %62 = sbr.rel (0) target = $region33
    $region32: #{tpu_custom_call.1} parent=1 // pred_region
      %64 = dma.done [#allocation7], 80
    $region33: #{tpu_custom_call.1} parent=1 // pred_fallthru
      _
    // Predicated region
    $region34: #{tpu_custom_call.1} parent=1 // pred_check
      _
    $region35: #{tpu_custom_call.1} parent=1 // pred_check_branch
      %66 = sbr.rel (0) target = $region37
    $region36: #{tpu_custom_call.1} parent=1 // pred_region
      %68 = dma.done [#allocation7], 64
    $region37: #{tpu_custom_call.1} parent=1 // pred_fallthru
      _
    %v69 = vld [vmem:[%s0] sm:$0xff]
    %v70 = vld [vmem:[%s0 + $0x8] sm:$0xff]
    %vm71 = vcmask 23552
    %72 = vst.msk [vmem:[#allocation2] sm:$0xff] %vm71, %v69
    %73 = vst.msk [vmem:[#allocation2 + $0x8] sm:$0xff] %vm71, %v70
    %v74 = vld [vmem:[#allocation2] sm:$0xff]
    %v75 = vld [vmem:[#allocation2 + $0x8] sm:$0xff]
    %v76 = vld [vmem:[%s1] sm:$0x7]
    %v77 = vperm.slane %v76, 0
    %79 = vset.pattern.permute.xlu0 0
    %80 = vperm.xlu0 %79, %v74
    %v81 = vpop.permute.xlu0 %80
    %84 = vset.pattern.permute.xlu0 0
    %85 = vperm.xlu0 %84, %v75
    %v86 = vpop.permute.xlu0 %85
    %v88 = vmul.f32 %v81, %v77
    %v89 = vmul.f32 %v86, %v77
    %v90 = vperm.slane %v76, 1
    %91 = vset.pattern.permute.xlu0 1
    %92 = vperm.xlu0 %91, %v74
    %v93 = vpop.permute.xlu0 %92
    %95 = vset.pattern.permute.xlu0 1
    %96 = vperm.xlu0 %95, %v75
    %v97 = vpop.permute.xlu0 %96
    %v99 = vmul.f32 %v93, %v90
    %v100 = vmul.f32 %v97, %v90
    %v101 = vadd.f32 %v88, %v99
    %v102 = vadd.f32 %v89, %v100
    %v103 = vperm.slane %v76, 2
    %104 = vset.pattern.permute.xlu0 2
    %105 = vperm.xlu0 %104, %v74
    %v106 = vpop.permute.xlu0 %105
    %108 = vset.pattern.permute.xlu0 2
    %109 = vperm.xlu0 %108, %v75
    %v110 = vpop.permute.xlu0 %109
    %v112 = vmul.f32 %v106, %v103
    %v113 = vmul.f32 %v110, %v103
    %v114 = vadd.f32 %v101, %v112
    %v115 = vadd.f32 %v102, %v113
    %v116 = vld [vmem:[#allocation6] sm:$0x1]
    %v118 = vperm.slane %v116, 0
    %v120 = vadd.f32 %v114, %v118
    %v121 = vadd.f32 %v115, %v118
    %v122 = vld [vmem:[#allocation3] sm:$0x7]
    %v123 = vperm.slane %v122, 0
    %v124 = vperm.slane %v122, 1
    %v125 = vperm.slane %v122, 2
    %v126 = vmul.f32 %v123, 0.0
    %v127 = vmul.f32 %v124, 0.0
    %v128 = vadd.f32 %v126, %v127
    %v129 = vmul.f32 %v125, 0.0
    %v130 = vadd.f32 %v128, %v129
    %v131 = vadd.f32 %v120, %v130
    %v132 = vxor.u32 %v131, 2147483648
    %v133 = vmul.f32 %v132, 1.442695
    %v134 = vpow.pop %v133
    %v135 = vadd.f32 %v134, 1.0
    %v136 = vrcp.pop %v135
    %v137 = vmul.f32 %v135, %v136
    %v138 = vsub.f32 1.0, %v137
    %v139 = vmul.f32 %v136, %v138
    %v140 = vadd.f32 %v136, %v139
    %vm141 = vweird.f32 %v135
    %vm142 = vweird.f32 %v136
    %vm143 = vmor %vm141, %vm142
    %v144 = vsel %vm143, %v136, %v140
    %v145 = vand.u32 2147483647, %v135
    %vm146 = vcmp.eq.f32.partialorder %v145, 8.507059e+37
    %v147 = vand.u32 %v135, 2147483648
    %v148 = vor.u32 1.1754944e-38, %v147
    %v149 = vsel %vm146, %v148, %v144
    %v150 = vmul.f32 1.0, %v149
    %v151 = vtanh.pop %v131
    %v152 = vmul.f32 %v150, 0.0
    %154 = vrot.lane.b32.xlu0 %v151, 119
    %v155 = vpop.permute.xlu0 %154
    %v157 = vmul.f32 %v150, %v155
    %159 = vrot.lane.b32.xlu0 %v157, 3
    %v160 = vpop.permute.xlu0 %159
    %v162 = vadd.f32 %v152, %v160
    %v163 = vtanh.pop %v162
    %165 = vrot.lane.b32.xlu0 %v163, 3
    %v166 = vpop.permute.xlu0 %165
    %v168 = vmul.f32 %v150, %v166
    %170 = vrot.lane.b32.xlu0 %v168, 122
    %v171 = vpop.permute.xlu0 %170
    %vm173 = vcmask 17408
    %174 = vst.msk [vmem:[#allocation2] sm:$0x3] %vm173, %v171
    %175 = vset.pattern.permute.xlu0 6
    %176 = vperm.xlu0 %175, %v168
    %v177 = vpop.permute.xlu0 %176
    %v179 = vmul.f32 %v177, %v123
    %180 = vset.pattern.permute.xlu0 7
    %181 = vperm.xlu0 %180, %v168
    %v182 = vpop.permute.xlu0 %181
    %v184 = vmul.f32 %v182, %v124
    %v185 = vadd.f32 %v179, %v184
    %186 = vset.pattern.permute.xlu0 8
    %187 = vperm.xlu0 %186, %v168
    %v188 = vpop.permute.xlu0 %187
    %v190 = vmul.f32 %v188, %v125
    %v191 = vadd.f32 %v185, %v190
    %v193 = vrot.slane %v191, 6
    %v195 = vadd.f32 %v120, %v193
    %v196 = vxor.u32 %v195, 2147483648
    %v197 = vmul.f32 %v196, 1.442695
    %v198 = vpow.pop %v197
    %v199 = vadd.f32 %v198, 1.0
    %v200 = vrcp.pop %v199
    %v201 = vmul.f32 %v199, %v200
    %v202 = vsub.f32 1.0, %v201
    %v203 = vmul.f32 %v200, %v202
    %v204 = vadd.f32 %v200, %v203
    %vm205 = vweird.f32 %v199
    %vm206 = vweird.f32 %v200
    %vm207 = vmor %vm205, %vm206
    %v208 = vsel %vm207, %v200, %v204
    %v209 = vand.u32 2147483647, %v199
    %vm210 = vcmp.eq.f32.partialorder %v209, 8.507059e+37
    %v211 = vand.u32 %v199, 2147483648
    %v212 = vor.u32 1.1754944e-38, %v211
    %v213 = vsel %vm210, %v212, %v208
    %v214 = vmul.f32 1.0, %v213
    %v215 = vtanh.pop %v195
    %v217 = vrot.slane %v162, 6
    %v219 = vmul.f32 %v214, %v217
    %221 = vrot.lane.b32.xlu0 %v215, 119
    %v222 = vpop.permute.xlu0 %221
    %v224 = vmul.f32 %v214, %v222
    %226 = vrot.lane.b32.xlu0 %v224, 3
    %v227 = vpop.permute.xlu0 %226
    %v229 = vadd.f32 %v219, %v227
    %v230 = vtanh.pop %v229
    %232 = vrot.lane.b32.xlu0 %v230, 3
    %v233 = vpop.permute.xlu0 %232
    %v235 = vmul.f32 %v214, %v233
    %237 = vrot.lane.b32.xlu0 %v235, 122
    %v238 = vpop.permute.xlu0 %237
    %vm240 = vcmask 19458
    %241 = vst.msk [vmem:[#allocation2] sm:$0xc] %vm240, %v238
    %242 = vset.pattern.permute.xlu0 6
    %243 = vperm.xlu0 %242, %v235
    %v244 = vpop.permute.xlu0 %243
    %v246 = vmul.f32 %v244, %v123
    %247 = vset.pattern.permute.xlu0 7
    %248 = vperm.xlu0 %247, %v235
    %v249 = vpop.permute.xlu0 %248
    %v251 = vmul.f32 %v249, %v124
    %v252 = vadd.f32 %v246, %v251
    %253 = vset.pattern.permute.xlu0 8
    %254 = vperm.xlu0 %253, %v235
    %v255 = vpop.permute.xlu0 %254
    %v257 = vmul.f32 %v255, %v125
    %v258 = vadd.f32 %v252, %v257
    %v260 = vrot.slane %v258, 6
    %v262 = vadd.f32 %v120, %v260
    %v263 = vxor.u32 %v262, 2147483648
    %v264 = vmul.f32 %v263, 1.442695
    %v265 = vpow.pop %v264
    %v266 = vadd.f32 %v265, 1.0
    %v267 = vrcp.pop %v266
    %v268 = vmul.f32 %v266, %v267
    %v269 = vsub.f32 1.0, %v268
    %v270 = vmul.f32 %v267, %v269
    %v271 = vadd.f32 %v267, %v270
    %vm272 = vweird.f32 %v266
    %vm273 = vweird.f32 %v267
    %vm274 = vmor %vm272, %vm273
    %v275 = vsel %vm274, %v267, %v271
    %v276 = vand.u32 2147483647, %v266
    %vm277 = vcmp.eq.f32.partialorder %v276, 8.507059e+37
    %v278 = vand.u32 %v266, 2147483648
    %v279 = vor.u32 1.1754944e-38, %v278
    %v280 = vsel %vm277, %v279, %v275
    %v281 = vmul.f32 1.0, %v280
    %v282 = vtanh.pop %v262
    %v284 = vrot.slane %v229, 6
    %v286 = vmul.f32 %v281, %v284
    %288 = vrot.lane.b32.xlu0 %v282, 119
    %v289 = vpop.permute.xlu0 %288
    %v291 = vmul.f32 %v281, %v289
    %293 = vrot.lane.b32.xlu0 %v291, 3
    %v294 = vpop.permute.xlu0 %293
    %v296 = vadd.f32 %v286, %v294
    %v297 = vtanh.pop %v296
    %299 = vrot.lane.b32.xlu0 %v297, 3
    %v300 = vpop.permute.xlu0 %299
    %v302 = vmul.f32 %v281, %v300
    %304 = vrot.lane.b32.xlu0 %v302, 122
    %v305 = vpop.permute.xlu0 %304
    %vm307 = vcmask 21508
    %308 = vst.msk [vmem:[#allocation2] sm:$0x30] %vm307, %v305
    %309 = vset.pattern.permute.xlu0 6
    %310 = vperm.xlu0 %309, %v302
    %v311 = vpop.permute.xlu0 %310
    %v313 = vmul.f32 %v311, %v123
    %314 = vset.pattern.permute.xlu0 7
    %315 = vperm.xlu0 %314, %v302
    %v316 = vpop.permute.xlu0 %315
    %v318 = vmul.f32 %v316, %v124
    %v319 = vadd.f32 %v313, %v318
    %320 = vset.pattern.permute.xlu0 8
    %321 = vperm.xlu0 %320, %v302
    %v322 = vpop.permute.xlu0 %321
    %v324 = vmul.f32 %v322, %v125
    %v325 = vadd.f32 %v319, %v324
    %v327 = vrot.slane %v325, 6
    %v329 = vadd.f32 %v120, %v327
    %v330 = vxor.u32 %v329, 2147483648
    %v331 = vmul.f32 %v330, 1.442695
    %v332 = vpow.pop %v331
    %v333 = vadd.f32 %v332, 1.0
    %v334 = vrcp.pop %v333
    %v335 = vmul.f32 %v333, %v334
    %v336 = vsub.f32 1.0, %v335
    %v337 = vmul.f32 %v334, %v336
    %v338 = vadd.f32 %v334, %v337
    %vm339 = vweird.f32 %v333
    %vm340 = vweird.f32 %v334
    %vm341 = vmor %vm339, %vm340
    %v342 = vsel %vm341, %v334, %v338
    %v343 = vand.u32 2147483647, %v333
    %vm344 = vcmp.eq.f32.partialorder %v343, 8.507059e+37
    %v345 = vand.u32 %v333, 2147483648
    %v346 = vor.u32 1.1754944e-38, %v345
    %v347 = vsel %vm344, %v346, %v342
    %v348 = vmul.f32 1.0, %v347
    %v349 = vtanh.pop %v329
    %v351 = vrot.slane %v296, 6
    %v353 = vmul.f32 %v348, %v351
    %355 = vrot.lane.b32.xlu0 %v349, 119
    %v356 = vpop.permute.xlu0 %355
    %v358 = vmul.f32 %v348, %v356
    %360 = vrot.lane.b32.xlu0 %v358, 3
    %v361 = vpop.permute.xlu0 %360
    %v363 = vadd.f32 %v353, %v361
    %v364 = vtanh.pop %v363
    %366 = vrot.lane.b32.xlu0 %v364, 3
    %v367 = vpop.permute.xlu0 %366
    %v369 = vmul.f32 %v348, %v367
    %371 = vrot.lane.b32.xlu0 %v369, 122
    %v372 = vpop.permute.xlu0 %371
    %vm374 = vcmask 23558
    %375 = vst.msk [vmem:[#allocation2] sm:$0xc0] %vm374, %v372
    %376 = vset.pattern.permute.xlu0 6
    %377 = vperm.xlu0 %376, %v369
    %v378 = vpop.permute.xlu0 %377
    %v380 = vmul.f32 %v378, %v123
    %381 = vset.pattern.permute.xlu0 7
    %382 = vperm.xlu0 %381, %v369
    %v383 = vpop.permute.xlu0 %382
    %v385 = vmul.f32 %v383, %v124
    %v386 = vadd.f32 %v380, %v385
    %387 = vset.pattern.permute.xlu0 8
    %388 = vperm.xlu0 %387, %v369
    %v389 = vpop.permute.xlu0 %388
    %v391 = vmul.f32 %v389, %v125
    %v392 = vadd.f32 %v386, %v391
    %v394 = vrot.slane %v392, 6
    %v396 = vadd.f32 %v121, %v394
    %v397 = vxor.u32 %v396, 2147483648
    %v398 = vmul.f32 %v397, 1.442695
    %v399 = vpow.pop %v398
    %v400 = vadd.f32 %v399, 1.0
    %v401 = vrcp.pop %v400
    %v402 = vmul.f32 %v400, %v401
    %v403 = vsub.f32 1.0, %v402
    %v404 = vmul.f32 %v401, %v403
    %v405 = vadd.f32 %v401, %v404
    %vm406 = vweird.f32 %v400
    %vm407 = vweird.f32 %v401
    %vm408 = vmor %vm406, %vm407
    %v409 = vsel %vm408, %v401, %v405
    %v410 = vand.u32 2147483647, %v400
    %vm411 = vcmp.eq.f32.partialorder %v410, 8.507059e+37
    %v412 = vand.u32 %v400, 2147483648
    %v413 = vor.u32 1.1754944e-38, %v412
    %v414 = vsel %vm411, %v413, %v409
    %v415 = vmul.f32 1.0, %v414
    %v416 = vtanh.pop %v396
    %v418 = vrot.slane %v363, 6
    %v420 = vmul.f32 %v415, %v418
    %422 = vrot.lane.b32.xlu0 %v416, 119
    %v423 = vpop.permute.xlu0 %422
    %v425 = vmul.f32 %v415, %v423
    %427 = vrot.lane.b32.xlu0 %v425, 3
    %v428 = vpop.permute.xlu0 %427
    %v430 = vadd.f32 %v420, %v428
    %v431 = vtanh.pop %v430
    %433 = vrot.lane.b32.xlu0 %v431, 3
    %v434 = vpop.permute.xlu0 %433
    %v436 = vmul.f32 %v415, %v434
    %438 = vrot.lane.b32.xlu0 %v436, 122
    %v439 = vpop.permute.xlu0 %438
    %441 = vst.msk [vmem:[#allocation2 + $0x8] sm:$0x3] %vm173, %v439
    %442 = vset.pattern.permute.xlu0 6
    %443 = vperm.xlu0 %442, %v436
    %v444 = vpop.permute.xlu0 %443
    %v446 = vmul.f32 %v444, %v123
    %447 = vset.pattern.permute.xlu0 7
    %448 = vperm.xlu0 %447, %v436
    %v449 = vpop.permute.xlu0 %448
    %v451 = vmul.f32 %v449, %v124
    %v452 = vadd.f32 %v446, %v451
    %453 = vset.pattern.permute.xlu0 8
    %454 = vperm.xlu0 %453, %v436
    %v455 = vpop.permute.xlu0 %454
    %v457 = vmul.f32 %v455, %v125
    %v458 = vadd.f32 %v452, %v457
    %v460 = vrot.slane %v458, 6
    %v462 = vadd.f32 %v121, %v460
    %v463 = vxor.u32 %v462, 2147483648
    %v464 = vmul.f32 %v463, 1.442695
    %v465 = vpow.pop %v464
    %v466 = vadd.f32 %v465, 1.0
    %v467 = vrcp.pop %v466
    %v468 = vmul.f32 %v466, %v467
    %v469 = vsub.f32 1.0, %v468
    %v470 = vmul.f32 %v467, %v469
    %v471 = vadd.f32 %v467, %v470
    %vm472 = vweird.f32 %v466
    %vm473 = vweird.f32 %v467
    %vm474 = vmor %vm472, %vm473
    %v475 = vsel %vm474, %v467, %v471
    %v476 = vand.u32 2147483647, %v466
    %vm477 = vcmp.eq.f32.partialorder %v476, 8.507059e+37
    %v478 = vand.u32 %v466, 2147483648
    %v479 = vor.u32 1.1754944e-38, %v478
    %v480 = vsel %vm477, %v479, %v475
    %v481 = vmul.f32 1.0, %v480
    %v482 = vtanh.pop %v462
    %v484 = vrot.slane %v430, 6
    %v486 = vmul.f32 %v481, %v484
    %488 = vrot.lane.b32.xlu0 %v482, 119
    %v489 = vpop.permute.xlu0 %488
    %v491 = vmul.f32 %v481, %v489
    %493 = vrot.lane.b32.xlu0 %v491, 3
    %v494 = vpop.permute.xlu0 %493
    %v496 = vadd.f32 %v486, %v494
    %v497 = vtanh.pop %v496
    %499 = vrot.lane.b32.xlu0 %v497, 3
    %v500 = vpop.permute.xlu0 %499
    %v502 = vmul.f32 %v481, %v500
    %504 = vrot.lane.b32.xlu0 %v502, 122
    %v505 = vpop.permute.xlu0 %504
    %507 = vst.msk [vmem:[#allocation2 + $0x8] sm:$0xc] %vm240, %v505
    %508 = vset.pattern.permute.xlu0 6
    %509 = vperm.xlu0 %508, %v502
    %v510 = vpop.permute.xlu0 %509
    %v512 = vmul.f32 %v510, %v123
    %513 = vset.pattern.permute.xlu0 7
    %514 = vperm.xlu0 %513, %v502
    %v515 = vpop.permute.xlu0 %514
    %v517 = vmul.f32 %v515, %v124
    %v518 = vadd.f32 %v512, %v517
    %519 = vset.pattern.permute.xlu0 8
    %520 = vperm.xlu0 %519, %v502
    %v521 = vpop.permute.xlu0 %520
    %v523 = vmul.f32 %v521, %v125
    %v524 = vadd.f32 %v518, %v523
    %v526 = vrot.slane %v524, 6
    %v528 = vadd.f32 %v121, %v526
    %v529 = vxor.u32 %v528, 2147483648
    %v530 = vmul.f32 %v529, 1.442695
    %v531 = vpow.pop %v530
    %v532 = vadd.f32 %v531, 1.0
    %v533 = vrcp.pop %v532
    %v534 = vmul.f32 %v532, %v533
    %v535 = vsub.f32 1.0, %v534
    %v536 = vmul.f32 %v533, %v535
    %v537 = vadd.f32 %v533, %v536
    %vm538 = vweird.f32 %v532
    %vm539 = vweird.f32 %v533
    %vm540 = vmor %vm538, %vm539
    %v541 = vsel %vm540, %v533, %v537
    %v542 = vand.u32 2147483647, %v532
    %vm543 = vcmp.eq.f32.partialorder %v542, 8.507059e+37
    %v544 = vand.u32 %v532, 2147483648
    %v545 = vor.u32 1.1754944e-38, %v544
    %v546 = vsel %vm543, %v545, %v541
    %v547 = vmul.f32 1.0, %v546
    %v548 = vtanh.pop %v528
    %v550 = vrot.slane %v496, 6
    %v552 = vmul.f32 %v547, %v550
    %554 = vrot.lane.b32.xlu0 %v548, 119
    %v555 = vpop.permute.xlu0 %554
    %v557 = vmul.f32 %v547, %v555
    %559 = vrot.lane.b32.xlu0 %v557, 3
    %v560 = vpop.permute.xlu0 %559
    %v562 = vadd.f32 %v552, %v560
    %v563 = vtanh.pop %v562
    %565 = vrot.lane.b32.xlu0 %v563, 3
    %v566 = vpop.permute.xlu0 %565
    %v568 = vmul.f32 %v547, %v566
    %570 = vrot.lane.b32.xlu0 %v568, 122
    %v571 = vpop.permute.xlu0 %570
    %573 = vst.msk [vmem:[#allocation2 + $0x8] sm:$0x30] %vm307, %v571
    %574 = vset.pattern.permute.xlu0 6
    %575 = vperm.xlu0 %574, %v568
    %v576 = vpop.permute.xlu0 %575
    %v578 = vmul.f32 %v576, %v123
    %579 = vset.pattern.permute.xlu0 7
    %580 = vperm.xlu0 %579, %v568
    %v581 = vpop.permute.xlu0 %580
    %v583 = vmul.f32 %v581, %v124
    %v584 = vadd.f32 %v578, %v583
    %585 = vset.pattern.permute.xlu0 8
    %586 = vperm.xlu0 %585, %v568
    %v587 = vpop.permute.xlu0 %586
    %v589 = vmul.f32 %v587, %v125
    %v590 = vadd.f32 %v584, %v589
    %v592 = vrot.slane %v590, 6
    %v594 = vadd.f32 %v121, %v592
    %v595 = vxor.u32 %v594, 2147483648
    %v596 = vmul.f32 %v595, 1.442695
    %v597 = vpow.pop %v596
    %v598 = vadd.f32 %v597, 1.0
    %v599 = vrcp.pop %v598
    %v600 = vmul.f32 %v598, %v599
    %v601 = vsub.f32 1.0, %v600
    %v602 = vmul.f32 %v599, %v601
    %v603 = vadd.f32 %v599, %v602
    %vm604 = vweird.f32 %v598
    %vm605 = vweird.f32 %v599
    %vm606 = vmor %vm604, %vm605
    %v607 = vsel %vm606, %v599, %v603
    %v608 = vand.u32 2147483647, %v598
    %vm609 = vcmp.eq.f32.partialorder %v608, 8.507059e+37
    %v610 = vand.u32 %v598, 2147483648
    %v611 = vor.u32 1.1754944e-38, %v610
    %v612 = vsel %vm609, %v611, %v607
    %v613 = vmul.f32 1.0, %v612
    %v614 = vtanh.pop %v594
    %v616 = vrot.slane %v562, 6
    %v618 = vmul.f32 %v613, %v616
    %620 = vrot.lane.b32.xlu0 %v614, 119
    %v621 = vpop.permute.xlu0 %620
    %v623 = vmul.f32 %v613, %v621
    %625 = vrot.lane.b32.xlu0 %v623, 3
    %v626 = vpop.permute.xlu0 %625
    %v628 = vadd.f32 %v618, %v626
    %v629 = vtanh.pop %v628
    %631 = vrot.lane.b32.xlu0 %v629, 3
    %v632 = vpop.permute.xlu0 %631
    %v634 = vmul.f32 %v613, %v632
    %636 = vrot.lane.b32.xlu0 %v634, 122
    %v637 = vpop.permute.xlu0 %636
    %639 = vst.msk [vmem:[#allocation2 + $0x8] sm:$0xc0] %vm374, %v637
    %v640 = vld [vmem:[#allocation2] sm:$0xff]
    %v641 = vld [vmem:[#allocation2 + $0x8] sm:$0xff]
    %s642 = scalar_lea.vmem %s1, 4
    %v643 = vld [vmem:[%s642] sm:$0x7]
    %v644 = vperm.slane %v643, 0
    %646 = vset.pattern.permute.xlu0 0
    %647 = vperm.xlu0 %646, %v640
    %v648 = vpop.permute.xlu0 %647
    %651 = vset.pattern.permute.xlu0 0
    %652 = vperm.xlu0 %651, %v641
    %v653 = vpop.permute.xlu0 %652
    %v655 = vmul.f32 %v648, %v644
    %v656 = vmul.f32 %v653, %v644
    %v657 = vperm.slane %v643, 1
    %658 = vset.pattern.permute.xlu0 1
    %659 = vperm.xlu0 %658, %v640
    %v660 = vpop.permute.xlu0 %659
    %662 = vset.pattern.permute.xlu0 1
    %663 = vperm.xlu0 %662, %v641
    %v664 = vpop.permute.xlu0 %663
    %v666 = vmul.f32 %v660, %v657
    %v667 = vmul.f32 %v664, %v657
    %v668 = vadd.f32 %v655, %v666
    %v669 = vadd.f32 %v656, %v667
    %v670 = vperm.slane %v643, 2
    %671 = vset.pattern.permute.xlu0 2
    %672 = vperm.xlu0 %671, %v640
    %v673 = vpop.permute.xlu0 %672
    %675 = vset.pattern.permute.xlu0 2
    %676 = vperm.xlu0 %675, %v641
    %v677 = vpop.permute.xlu0 %676
    %v679 = vmul.f32 %v673, %v670
    %v680 = vmul.f32 %v677, %v670
    %v681 = vadd.f32 %v668, %v679
    %v682 = vadd.f32 %v669, %v680
    %s683 = scalar_lea.vmem [#allocation6], 1
    %v684 = vld [vmem:[%s683] sm:$0x1]
    %v686 = vperm.slane %v684, 0
    %v688 = vadd.f32 %v681, %v686
    %v689 = vadd.f32 %v682, %v686
    %s690 = scalar_lea.vmem [#allocation3], 4
    %v691 = vld [vmem:[%s690] sm:$0x7]
    %v692 = vperm.slane %v691, 0
    %v693 = vperm.slane %v691, 1
    %v694 = vperm.slane %v691, 2
    %v695 = vmul.f32 %v692, 0.0
    %v696 = vmul.f32 %v693, 0.0
    %v697 = vadd.f32 %v695, %v696
    %v698 = vmul.f32 %v694, 0.0
    %v699 = vadd.f32 %v697, %v698
    %v700 = vadd.f32 %v688, %v699
    %v701 = vxor.u32 %v700, 2147483648
    %v702 = vmul.f32 %v701, 1.442695
    %v703 = vpow.pop %v702
    %v704 = vadd.f32 %v703, 1.0
    %v705 = vrcp.pop %v704
    %v706 = vmul.f32 %v704, %v705
    %v707 = vsub.f32 1.0, %v706
    %v708 = vmul.f32 %v705, %v707
    %v709 = vadd.f32 %v705, %v708
    %vm710 = vweird.f32 %v704
    %vm711 = vweird.f32 %v705
    %vm712 = vmor %vm710, %vm711
    %v713 = vsel %vm712, %v705, %v709
    %v714 = vand.u32 2147483647, %v704
    %vm715 = vcmp.eq.f32.partialorder %v714, 8.507059e+37
    %v716 = vand.u32 %v704, 2147483648
    %v717 = vor.u32 1.1754944e-38, %v716
    %v718 = vsel %vm715, %v717, %v713
    %v719 = vmul.f32 1.0, %v718
    %v720 = vtanh.pop %v700
    %v721 = vmul.f32 %v719, 0.0
    %723 = vrot.lane.b32.xlu0 %v720, 119
    %v724 = vpop.permute.xlu0 %723
    %v726 = vmul.f32 %v719, %v724
    %728 = vrot.lane.b32.xlu0 %v726, 3
    %v729 = vpop.permute.xlu0 %728
    %v731 = vadd.f32 %v721, %v729
    %v732 = vtanh.pop %v731
    %734 = vrot.lane.b32.xlu0 %v732, 3
    %v735 = vpop.permute.xlu0 %734
    %v737 = vmul.f32 %v719, %v735
    %739 = vrot.lane.b32.xlu0 %v737, 122
    %v740 = vpop.permute.xlu0 %739
    %742 = vst.msk [vmem:[#allocation2] sm:$0x3] %vm173, %v740
    %743 = vset.pattern.permute.xlu0 6
    %744 = vperm.xlu0 %743, %v737
    %v745 = vpop.permute.xlu0 %744
    %v747 = vmul.f32 %v745, %v692
    %748 = vset.pattern.permute.xlu0 7
    %749 = vperm.xlu0 %748, %v737
    %v750 = vpop.permute.xlu0 %749
    %v752 = vmul.f32 %v750, %v693
    %v753 = vadd.f32 %v747, %v752
    %754 = vset.pattern.permute.xlu0 8
    %755 = vperm.xlu0 %754, %v737
    %v756 = vpop.permute.xlu0 %755
    %v758 = vmul.f32 %v756, %v694
    %v759 = vadd.f32 %v753, %v758
    %v761 = vrot.slane %v759, 6
    %v763 = vadd.f32 %v688, %v761
    %v764 = vxor.u32 %v763, 2147483648
    %v765 = vmul.f32 %v764, 1.442695
    %v766 = vpow.pop %v765
    %v767 = vadd.f32 %v766, 1.0
    %v768 = vrcp.pop %v767
    %v769 = vmul.f32 %v767, %v768
    %v770 = vsub.f32 1.0, %v769
    %v771 = vmul.f32 %v768, %v770
    %v772 = vadd.f32 %v768, %v771
    %vm773 = vweird.f32 %v767
    %vm774 = vweird.f32 %v768
    %vm775 = vmor %vm773, %vm774
    %v776 = vsel %vm775, %v768, %v772
    %v777 = vand.u32 2147483647, %v767
    %vm778 = vcmp.eq.f32.partialorder %v777, 8.507059e+37
    %v779 = vand.u32 %v767, 2147483648
    %v780 = vor.u32 1.1754944e-38, %v779
    %v781 = vsel %vm778, %v780, %v776
    %v782 = vmul.f32 1.0, %v781
    %v783 = vtanh.pop %v763
    %v785 = vrot.slane %v731, 6
    %v787 = vmul.f32 %v782, %v785
    %789 = vrot.lane.b32.xlu0 %v783, 119
    %v790 = vpop.permute.xlu0 %789
    %v792 = vmul.f32 %v782, %v790
    %794 = vrot.lane.b32.xlu0 %v792, 3
    %v795 = vpop.permute.xlu0 %794
    %v797 = vadd.f32 %v787, %v795
    %v798 = vtanh.pop %v797
    %800 = vrot.lane.b32.xlu0 %v798, 3
    %v801 = vpop.permute.xlu0 %800
    %v803 = vmul.f32 %v782, %v801
    %805 = vrot.lane.b32.xlu0 %v803, 122
    %v806 = vpop.permute.xlu0 %805
    %808 = vst.msk [vmem:[#allocation2] sm:$0xc] %vm240, %v806
    %809 = vset.pattern.permute.xlu0 6
    %810 = vperm.xlu0 %809, %v803
    %v811 = vpop.permute.xlu0 %810
    %v813 = vmul.f32 %v811, %v692
    %814 = vset.pattern.permute.xlu0 7
    %815 = vperm.xlu0 %814, %v803
    %v816 = vpop.permute.xlu0 %815
    %v818 = vmul.f32 %v816, %v693
    %v819 = vadd.f32 %v813, %v818
    %820 = vset.pattern.permute.xlu0 8
    %821 = vperm.xlu0 %820, %v803
    %v822 = vpop.permute.xlu0 %821
    %v824 = vmul.f32 %v822, %v694
    %v825 = vadd.f32 %v819, %v824
    %v827 = vrot.slane %v825, 6
    %v829 = vadd.f32 %v688, %v827
    %v830 = vxor.u32 %v829, 2147483648
    %v831 = vmul.f32 %v830, 1.442695
    %v832 = vpow.pop %v831
    %v833 = vadd.f32 %v832, 1.0
    %v834 = vrcp.pop %v833
    %v835 = vmul.f32 %v833, %v834
    %v836 = vsub.f32 1.0, %v835
    %v837 = vmul.f32 %v834, %v836
    %v838 = vadd.f32 %v834, %v837
    %vm839 = vweird.f32 %v833
    %vm840 = vweird.f32 %v834
    %vm841 = vmor %vm839, %vm840
    %v842 = vsel %vm841, %v834, %v838
    %v843 = vand.u32 2147483647, %v833
    %vm844 = vcmp.eq.f32.partialorder %v843, 8.507059e+37
    %v845 = vand.u32 %v833, 2147483648
    %v846 = vor.u32 1.1754944e-38, %v845
    %v847 = vsel %vm844, %v846, %v842
    %v848 = vmul.f32 1.0, %v847
    %v849 = vtanh.pop %v829
    %v851 = vrot.slane %v797, 6
    %v853 = vmul.f32 %v848, %v851
    %855 = vrot.lane.b32.xlu0 %v849, 119
    %v856 = vpop.permute.xlu0 %855
    %v858 = vmul.f32 %v848, %v856
    %860 = vrot.lane.b32.xlu0 %v858, 3
    %v861 = vpop.permute.xlu0 %860
    %v863 = vadd.f32 %v853, %v861
    %v864 = vtanh.pop %v863
    %866 = vrot.lane.b32.xlu0 %v864, 3
    %v867 = vpop.permute.xlu0 %866
    %v869 = vmul.f32 %v848, %v867
    %871 = vrot.lane.b32.xlu0 %v869, 122
    %v872 = vpop.permute.xlu0 %871
    %874 = vst.msk [vmem:[#allocation2] sm:$0x30] %vm307, %v872
    %875 = vset.pattern.permute.xlu0 6
    %876 = vperm.xlu0 %875, %v869
    %v877 = vpop.permute.xlu0 %876
    %v879 = vmul.f32 %v877, %v692
    %880 = vset.pattern.permute.xlu0 7
    %881 = vperm.xlu0 %880, %v869
    %v882 = vpop.permute.xlu0 %881
    %v884 = vmul.f32 %v882, %v693
    %v885 = vadd.f32 %v879, %v884
    %886 = vset.pattern.permute.xlu0 8
    %887 = vperm.xlu0 %886, %v869
    %v888 = vpop.permute.xlu0 %887
    %v890 = vmul.f32 %v888, %v694
    %v891 = vadd.f32 %v885, %v890
    %v893 = vrot.slane %v891, 6
    %v895 = vadd.f32 %v688, %v893
    %v896 = vxor.u32 %v895, 2147483648
    %v897 = vmul.f32 %v896, 1.442695
    %v898 = vpow.pop %v897
    %v899 = vadd.f32 %v898, 1.0
    %v900 = vrcp.pop %v899
    %v901 = vmul.f32 %v899, %v900
    %v902 = vsub.f32 1.0, %v901
    %v903 = vmul.f32 %v900, %v902
    %v904 = vadd.f32 %v900, %v903
    %vm905 = vweird.f32 %v899
    %vm906 = vweird.f32 %v900
    %vm907 = vmor %vm905, %vm906
    %v908 = vsel %vm907, %v900, %v904
    %v909 = vand.u32 2147483647, %v899
    %vm910 = vcmp.eq.f32.partialorder %v909, 8.507059e+37
    %v911 = vand.u32 %v899, 2147483648
    %v912 = vor.u32 1.1754944e-38, %v911
    %v913 = vsel %vm910, %v912, %v908
    %v914 = vmul.f32 1.0, %v913
    %v915 = vtanh.pop %v895
    %v917 = vrot.slane %v863, 6
    %v919 = vmul.f32 %v914, %v917
    %921 = vrot.lane.b32.xlu0 %v915, 119
    %v922 = vpop.permute.xlu0 %921
    %v924 = vmul.f32 %v914, %v922
    %926 = vrot.lane.b32.xlu0 %v924, 3
    %v927 = vpop.permute.xlu0 %926
    %v929 = vadd.f32 %v919, %v927
    %v930 = vtanh.pop %v929
    %932 = vrot.lane.b32.xlu0 %v930, 3
    %v933 = vpop.permute.xlu0 %932
    %v935 = vmul.f32 %v914, %v933
    %937 = vrot.lane.b32.xlu0 %v935, 122
    %v938 = vpop.permute.xlu0 %937
    %940 = vst.msk [vmem:[#allocation2] sm:$0xc0] %vm374, %v938
    %941 = vset.pattern.permute.xlu0 6
    %942 = vperm.xlu0 %941, %v935
    %v943 = vpop.permute.xlu0 %942
    %v945 = vmul.f32 %v943, %v692
    %946 = vset.pattern.permute.xlu0 7
    %947 = vperm.xlu0 %946, %v935
    %v948 = vpop.permute.xlu0 %947
    %v950 = vmul.f32 %v948, %v693
    %v951 = vadd.f32 %v945, %v950
    %952 = vset.pattern.permute.xlu0 8
    %953 = vperm.xlu0 %952, %v935
    %v954 = vpop.permute.xlu0 %953
    %v956 = vmul.f32 %v954, %v694
    %v957 = vadd.f32 %v951, %v956
    %v959 = vrot.slane %v957, 6
    %v961 = vadd.f32 %v689, %v959
    %v962 = vxor.u32 %v961, 2147483648
    %v963 = vmul.f32 %v962, 1.442695
    %v964 = vpow.pop %v963
    %v965 = vadd.f32 %v964, 1.0
    %v966 = vrcp.pop %v965
    %v967 = vmul.f32 %v965, %v966
    %v968 = vsub.f32 1.0, %v967
    %v969 = vmul.f32 %v966, %v968
    %v970 = vadd.f32 %v966, %v969
    %vm971 = vweird.f32 %v965
    %vm972 = vweird.f32 %v966
    %vm973 = vmor %vm971, %vm972
    %v974 = vsel %vm973, %v966, %v970
    %v975 = vand.u32 2147483647, %v965
    %vm976 = vcmp.eq.f32.partialorder %v975, 8.507059e+37
    %v977 = vand.u32 %v965, 2147483648
    %v978 = vor.u32 1.1754944e-38, %v977
    %v979 = vsel %vm976, %v978, %v974
    %v980 = vmul.f32 1.0, %v979
    %v981 = vtanh.pop %v961
    %v983 = vrot.slane %v929, 6
    %v985 = vmul.f32 %v980, %v983
    %987 = vrot.lane.b32.xlu0 %v981, 119
    %v988 = vpop.permute.xlu0 %987
    %v990 = vmul.f32 %v980, %v988
    %992 = vrot.lane.b32.xlu0 %v990, 3
    %v993 = vpop.permute.xlu0 %992
    %v995 = vadd.f32 %v985, %v993
    %v996 = vtanh.pop %v995
    %998 = vrot.lane.b32.xlu0 %v996, 3
    %v999 = vpop.permute.xlu0 %998
    %v1001 = vmul.f32 %v980, %v999
    %1003 = vrot.lane.b32.xlu0 %v1001, 122
    %v1004 = vpop.permute.xlu0 %1003
    %1006 = vst.msk [vmem:[#allocation2 + $0x8] sm:$0x3] %vm173, %v1004
    %1007 = vset.pattern.permute.xlu0 6
    %1008 = vperm.xlu0 %1007, %v1001
    %v1009 = vpop.permute.xlu0 %1008
    %v1011 = vmul.f32 %v1009, %v692
    %1012 = vset.pattern.permute.xlu0 7
    %1013 = vperm.xlu0 %1012, %v1001
    %v1014 = vpop.permute.xlu0 %1013
    %v1016 = vmul.f32 %v1014, %v693
    %v1017 = vadd.f32 %v1011, %v1016
    %1018 = vset.pattern.permute.xlu0 8
    %1019 = vperm.xlu0 %1018, %v1001
    %v1020 = vpop.permute.xlu0 %1019
    %v1022 = vmul.f32 %v1020, %v694
    %v1023 = vadd.f32 %v1017, %v1022
    %v1025 = vrot.slane %v1023, 6
    %v1027 = vadd.f32 %v689, %v1025
    %v1028 = vxor.u32 %v1027, 2147483648
    %v1029 = vmul.f32 %v1028, 1.442695
    %v1030 = vpow.pop %v1029
    %v1031 = vadd.f32 %v1030, 1.0
    %v1032 = vrcp.pop %v1031
    %v1033 = vmul.f32 %v1031, %v1032
    %v1034 = vsub.f32 1.0, %v1033
    %v1035 = vmul.f32 %v1032, %v1034
    %v1036 = vadd.f32 %v1032, %v1035
    %vm1037 = vweird.f32 %v1031
    %vm1038 = vweird.f32 %v1032
    %vm1039 = vmor %vm1037, %vm1038
    %v1040 = vsel %vm1039, %v1032, %v1036
    %v1041 = vand.u32 2147483647, %v1031
    %vm1042 = vcmp.eq.f32.partialorder %v1041, 8.507059e+37
    %v1043 = vand.u32 %v1031, 2147483648
    %v1044 = vor.u32 1.1754944e-38, %v1043
    %v1045 = vsel %vm1042, %v1044, %v1040
    %v1046 = vmul.f32 1.0, %v1045
    %v1047 = vtanh.pop %v1027
    %v1049 = vrot.slane %v995, 6
    %v1051 = vmul.f32 %v1046, %v1049
    %1053 = vrot.lane.b32.xlu0 %v1047, 119
    %v1054 = vpop.permute.xlu0 %1053
    %v1056 = vmul.f32 %v1046, %v1054
    %1058 = vrot.lane.b32.xlu0 %v1056, 3
    %v1059 = vpop.permute.xlu0 %1058
    %v1061 = vadd.f32 %v1051, %v1059
    %v1062 = vtanh.pop %v1061
    %1064 = vrot.lane.b32.xlu0 %v1062, 3
    %v1065 = vpop.permute.xlu0 %1064
    %v1067 = vmul.f32 %v1046, %v1065
    %1069 = vrot.lane.b32.xlu0 %v1067, 122
    %v1070 = vpop.permute.xlu0 %1069
    %1072 = vst.msk [vmem:[#allocation2 + $0x8] sm:$0xc] %vm240, %v1070
    %1073 = vset.pattern.permute.xlu0 6
    %1074 = vperm.xlu0 %1073, %v1067
    %v1075 = vpop.permute.xlu0 %1074
    %v1077 = vmul.f32 %v1075, %v692
    %1078 = vset.pattern.permute.xlu0 7
    %1079 = vperm.xlu0 %1078, %v1067
    %v1080 = vpop.permute.xlu0 %1079
    %v1082 = vmul.f32 %v1080, %v693
    %v1083 = vadd.f32 %v1077, %v1082
    %1084 = vset.pattern.permute.xlu0 8
    %1085 = vperm.xlu0 %1084, %v1067
    %v1086 = vpop.permute.xlu0 %1085
    %v1088 = vmul.f32 %v1086, %v694
    %v1089 = vadd.f32 %v1083, %v1088
    %v1091 = vrot.slane %v1089, 6
    %v1093 = vadd.f32 %v689, %v1091
    %v1094 = vxor.u32 %v1093, 2147483648
    %v1095 = vmul.f32 %v1094, 1.442695
    %v1096 = vpow.pop %v1095
    %v1097 = vadd.f32 %v1096, 1.0
    %v1098 = vrcp.pop %v1097
    %v1099 = vmul.f32 %v1097, %v1098
    %v1100 = vsub.f32 1.0, %v1099
    %v1101 = vmul.f32 %v1098, %v1100
    %v1102 = vadd.f32 %v1098, %v1101
    %vm1103 = vweird.f32 %v1097
    %vm1104 = vweird.f32 %v1098
    %vm1105 = vmor %vm1103, %vm1104
    %v1106 = vsel %vm1105, %v1098, %v1102
    %v1107 = vand.u32 2147483647, %v1097
    %vm1108 = vcmp.eq.f32.partialorder %v1107, 8.507059e+37
    %v1109 = vand.u32 %v1097, 2147483648
    %v1110 = vor.u32 1.1754944e-38, %v1109
    %v1111 = vsel %vm1108, %v1110, %v1106
    %v1112 = vmul.f32 1.0, %v1111
    %v1113 = vtanh.pop %v1093
    %v1115 = vrot.slane %v1061, 6
    %v1117 = vmul.f32 %v1112, %v1115
    %1119 = vrot.lane.b32.xlu0 %v1113, 119
    %v1120 = vpop.permute.xlu0 %1119
    %v1122 = vmul.f32 %v1112, %v1120
    %1124 = vrot.lane.b32.xlu0 %v1122, 3
    %v1125 = vpop.permute.xlu0 %1124
    %v1127 = vadd.f32 %v1117, %v1125
    %v1128 = vtanh.pop %v1127
    %1130 = vrot.lane.b32.xlu0 %v1128, 3
    %v1131 = vpop.permute.xlu0 %1130
    %v1133 = vmul.f32 %v1112, %v1131
    %1135 = vrot.lane.b32.xlu0 %v1133, 122
    %v1136 = vpop.permute.xlu0 %1135
    %1138 = vst.msk [vmem:[#allocation2 + $0x8] sm:$0x30] %vm307, %v1136
    %1139 = vset.pattern.permute.xlu0 6
    %1140 = vperm.xlu0 %1139, %v1133
    %v1141 = vpop.permute.xlu0 %1140
    %v1143 = vmul.f32 %v1141, %v692
    %1144 = vset.pattern.permute.xlu0 7
    %1145 = vperm.xlu0 %1144, %v1133
    %v1146 = vpop.permute.xlu0 %1145
    %v1148 = vmul.f32 %v1146, %v693
    %v1149 = vadd.f32 %v1143, %v1148
    %1150 = vset.pattern.permute.xlu0 8
    %1151 = vperm.xlu0 %1150, %v1133
    %v1152 = vpop.permute.xlu0 %1151
    %v1154 = vmul.f32 %v1152, %v694
    %v1155 = vadd.f32 %v1149, %v1154
    %v1157 = vrot.slane %v1155, 6
    %v1159 = vadd.f32 %v689, %v1157
    %v1160 = vxor.u32 %v1159, 2147483648
    %v1161 = vmul.f32 %v1160, 1.442695
    %v1162 = vpow.pop %v1161
    %v1163 = vadd.f32 %v1162, 1.0
    %v1164 = vrcp.pop %v1163
    %v1165 = vmul.f32 %v1163, %v1164
    %v1166 = vsub.f32 1.0, %v1165
    %v1167 = vmul.f32 %v1164, %v1166
    %v1168 = vadd.f32 %v1164, %v1167
    %vm1169 = vweird.f32 %v1163
    %vm1170 = vweird.f32 %v1164
    %vm1171 = vmor %vm1169, %vm1170
    %v1172 = vsel %vm1171, %v1164, %v1168
    %v1173 = vand.u32 2147483647, %v1163
    %vm1174 = vcmp.eq.f32.partialorder %v1173, 8.507059e+37
    %v1175 = vand.u32 %v1163, 2147483648
    %v1176 = vor.u32 1.1754944e-38, %v1175
    %v1177 = vsel %vm1174, %v1176, %v1172
    %v1178 = vmul.f32 1.0, %v1177
    %v1179 = vtanh.pop %v1159
    %v1181 = vrot.slane %v1127, 6
    %v1183 = vmul.f32 %v1178, %v1181
    %1185 = vrot.lane.b32.xlu0 %v1179, 119
    %v1186 = vpop.permute.xlu0 %1185
    %v1188 = vmul.f32 %v1178, %v1186
    %1190 = vrot.lane.b32.xlu0 %v1188, 3
    %v1191 = vpop.permute.xlu0 %1190
    %v1193 = vadd.f32 %v1183, %v1191
    %v1194 = vtanh.pop %v1193
    %1196 = vrot.lane.b32.xlu0 %v1194, 3
    %v1197 = vpop.permute.xlu0 %1196
    %v1199 = vmul.f32 %v1178, %v1197
    %1201 = vrot.lane.b32.xlu0 %v1199, 122
    %v1202 = vpop.permute.xlu0 %1201
    %1204 = vst.msk [vmem:[#allocation2 + $0x8] sm:$0xc0] %vm374, %v1202
    %v1205 = vld [vmem:[#allocation2] sm:$0xff]
    %v1206 = vld [vmem:[#allocation2 + $0x8] sm:$0xff]
    %s1207 = scalar_lea.vmem %s1, 8
    %v1208 = vld [vmem:[%s1207] sm:$0x7]
    %v1209 = vperm.slane %v1208, 0
    %1211 = vset.pattern.permute.xlu0 0
    %1212 = vperm.xlu0 %1211, %v1205
    %v1213 = vpop.permute.xlu0 %1212
    %1216 = vset.pattern.permute.xlu0 0
    %1217 = vperm.xlu0 %1216, %v1206
    %v1218 = vpop.permute.xlu0 %1217
    %v1220 = vmul.f32 %v1213, %v1209
    %v1221 = vmul.f32 %v1218, %v1209
    %v1222 = vperm.slane %v1208, 1
    %1223 = vset.pattern.permute.xlu0 1
    %1224 = vperm.xlu0 %1223, %v1205
    %v1225 = vpop.permute.xlu0 %1224
    %1227 = vset.pattern.permute.xlu0 1
    %1228 = vperm.xlu0 %1227, %v1206
    %v1229 = vpop.permute.xlu0 %1228
    %v1231 = vmul.f32 %v1225, %v1222
    %v1232 = vmul.f32 %v1229, %v1222
    %v1233 = vadd.f32 %v1220, %v1231
    %v1234 = vadd.f32 %v1221, %v1232
    %v1235 = vperm.slane %v1208, 2
    %1236 = vset.pattern.permute.xlu0 2
    %1237 = vperm.xlu0 %1236, %v1205
    %v1238 = vpop.permute.xlu0 %1237
    %1240 = vset.pattern.permute.xlu0 2
    %1241 = vperm.xlu0 %1240, %v1206
    %v1242 = vpop.permute.xlu0 %1241
    %v1244 = vmul.f32 %v1238, %v1235
    %v1245 = vmul.f32 %v1242, %v1235
    %v1246 = vadd.f32 %v1233, %v1244
    %v1247 = vadd.f32 %v1234, %v1245
    %s1248 = scalar_lea.vmem [#allocation6], 2
    %v1249 = vld [vmem:[%s1248] sm:$0x1]
    %v1251 = vperm.slane %v1249, 0
    %v1253 = vadd.f32 %v1246, %v1251
    %v1254 = vadd.f32 %v1247, %v1251
    %s1255 = scalar_lea.vmem [#allocation3], 8
    %v1256 = vld [vmem:[%s1255] sm:$0x7]
    %v1257 = vperm.slane %v1256, 0
    %v1258 = vperm.slane %v1256, 1
    %v1259 = vperm.slane %v1256, 2
    %v1260 = vmul.f32 %v1257, 0.0
    %v1261 = vmul.f32 %v1258, 0.0
    %v1262 = vadd.f32 %v1260, %v1261
    %v1263 = vmul.f32 %v1259, 0.0
    %v1264 = vadd.f32 %v1262, %v1263
    %v1265 = vadd.f32 %v1253, %v1264
    %v1266 = vxor.u32 %v1265, 2147483648
    %v1267 = vmul.f32 %v1266, 1.442695
    %v1268 = vpow.pop %v1267
    %v1269 = vadd.f32 %v1268, 1.0
    %v1270 = vrcp.pop %v1269
    %v1271 = vmul.f32 %v1269, %v1270
    %v1272 = vsub.f32 1.0, %v1271
    %v1273 = vmul.f32 %v1270, %v1272
    %v1274 = vadd.f32 %v1270, %v1273
    %vm1275 = vweird.f32 %v1269
    %vm1276 = vweird.f32 %v1270
    %vm1277 = vmor %vm1275, %vm1276
    %v1278 = vsel %vm1277, %v1270, %v1274
    %v1279 = vand.u32 2147483647, %v1269
    %vm1280 = vcmp.eq.f32.partialorder %v1279, 8.507059e+37
    %v1281 = vand.u32 %v1269, 2147483648
    %v1282 = vor.u32 1.1754944e-38, %v1281
    %v1283 = vsel %vm1280, %v1282, %v1278
    %v1284 = vmul.f32 1.0, %v1283
    %v1285 = vtanh.pop %v1265
    %v1286 = vmul.f32 %v1284, 0.0
    %1288 = vrot.lane.b32.xlu0 %v1285, 119
    %v1289 = vpop.permute.xlu0 %1288
    %v1291 = vmul.f32 %v1284, %v1289
    %1293 = vrot.lane.b32.xlu0 %v1291, 3
    %v1294 = vpop.permute.xlu0 %1293
    %v1296 = vadd.f32 %v1286, %v1294
    %v1297 = vtanh.pop %v1296
    %1299 = vrot.lane.b32.xlu0 %v1297, 3
    %v1300 = vpop.permute.xlu0 %1299
    %v1302 = vmul.f32 %v1284, %v1300
    %1304 = vrot.lane.b32.xlu0 %v1302, 122
    %v1305 = vpop.permute.xlu0 %1304
    %1307 = vst.msk [vmem:[#allocation2] sm:$0x3] %vm173, %v1305
    %1308 = vset.pattern.permute.xlu0 6
    %1309 = vperm.xlu0 %1308, %v1302
    %v1310 = vpop.permute.xlu0 %1309
    %v1312 = vmul.f32 %v1310, %v1257
    %1313 = vset.pattern.permute.xlu0 7
    %1314 = vperm.xlu0 %1313, %v1302
    %v1315 = vpop.permute.xlu0 %1314
    %v1317 = vmul.f32 %v1315, %v1258
    %v1318 = vadd.f32 %v1312, %v1317
    %1319 = vset.pattern.permute.xlu0 8
    %1320 = vperm.xlu0 %1319, %v1302
    %v1321 = vpop.permute.xlu0 %1320
    %v1323 = vmul.f32 %v1321, %v1259
    %v1324 = vadd.f32 %v1318, %v1323
    %v1326 = vrot.slane %v1324, 6
    %v1328 = vadd.f32 %v1253, %v1326
    %v1329 = vxor.u32 %v1328, 2147483648
    %v1330 = vmul.f32 %v1329, 1.442695
    %v1331 = vpow.pop %v1330
    %v1332 = vadd.f32 %v1331, 1.0
    %v1333 = vrcp.pop %v1332
    %v1334 = vmul.f32 %v1332, %v1333
    %v1335 = vsub.f32 1.0, %v1334
    %v1336 = vmul.f32 %v1333, %v1335
    %v1337 = vadd.f32 %v1333, %v1336
    %vm1338 = vweird.f32 %v1332
    %vm1339 = vweird.f32 %v1333
    %vm1340 = vmor %vm1338, %vm1339
    %v1341 = vsel %vm1340, %v1333, %v1337
    %v1342 = vand.u32 2147483647, %v1332
    %vm1343 = vcmp.eq.f32.partialorder %v1342, 8.507059e+37
    %v1344 = vand.u32 %v1332, 2147483648
    %v1345 = vor.u32 1.1754944e-38, %v1344
    %v1346 = vsel %vm1343, %v1345, %v1341
    %v1347 = vmul.f32 1.0, %v1346
    %v1348 = vtanh.pop %v1328
    %v1350 = vrot.slane %v1296, 6
    %v1352 = vmul.f32 %v1347, %v1350
    %1354 = vrot.lane.b32.xlu0 %v1348, 119
    %v1355 = vpop.permute.xlu0 %1354
    %v1357 = vmul.f32 %v1347, %v1355
    %1359 = vrot.lane.b32.xlu0 %v1357, 3
    %v1360 = vpop.permute.xlu0 %1359
    %v1362 = vadd.f32 %v1352, %v1360
    %v1363 = vtanh.pop %v1362
    %1365 = vrot.lane.b32.xlu0 %v1363, 3
    %v1366 = vpop.permute.xlu0 %1365
    %v1368 = vmul.f32 %v1347, %v1366
    %1370 = vrot.lane.b32.xlu0 %v1368, 122
    %v1371 = vpop.permute.xlu0 %1370
    %1373 = vst.msk [vmem:[#allocation2] sm:$0xc] %vm240, %v1371
    %1374 = vset.pattern.permute.xlu0 6
    %1375 = vperm.xlu0 %1374, %v1368
    %v1376 = vpop.permute.xlu0 %1375
    %v1378 = vmul.f32 %v1376, %v1257
    %1379 = vset.pattern.permute.xlu0 7
    %1380 = vperm.xlu0 %1379, %v1368
    %v1381 = vpop.permute.xlu0 %1380
    %v1383 = vmul.f32 %v1381, %v1258
    %v1384 = vadd.f32 %v1378, %v1383
    %1385 = vset.pattern.permute.xlu0 8
    %1386 = vperm.xlu0 %1385, %v1368
    %v1387 = vpop.permute.xlu0 %1386
    %v1389 = vmul.f32 %v1387, %v1259
    %v1390 = vadd.f32 %v1384, %v1389
    %v1392 = vrot.slane %v1390, 6
    %v1394 = vadd.f32 %v1253, %v1392
    %v1395 = vxor.u32 %v1394, 2147483648
    %v1396 = vmul.f32 %v1395, 1.442695
    %v1397 = vpow.pop %v1396
    %v1398 = vadd.f32 %v1397, 1.0
    %v1399 = vrcp.pop %v1398
    %v1400 = vmul.f32 %v1398, %v1399
    %v1401 = vsub.f32 1.0, %v1400
    %v1402 = vmul.f32 %v1399, %v1401
    %v1403 = vadd.f32 %v1399, %v1402
    %vm1404 = vweird.f32 %v1398
    %vm1405 = vweird.f32 %v1399
    %vm1406 = vmor %vm1404, %vm1405
    %v1407 = vsel %vm1406, %v1399, %v1403
    %v1408 = vand.u32 2147483647, %v1398
    %vm1409 = vcmp.eq.f32.partialorder %v1408, 8.507059e+37
    %v1410 = vand.u32 %v1398, 2147483648
    %v1411 = vor.u32 1.1754944e-38, %v1410
    %v1412 = vsel %vm1409, %v1411, %v1407
    %v1413 = vmul.f32 1.0, %v1412
    %v1414 = vtanh.pop %v1394
    %v1416 = vrot.slane %v1362, 6
    %v1418 = vmul.f32 %v1413, %v1416
    %1420 = vrot.lane.b32.xlu0 %v1414, 119
    %v1421 = vpop.permute.xlu0 %1420
    %v1423 = vmul.f32 %v1413, %v1421
    %1425 = vrot.lane.b32.xlu0 %v1423, 3
    %v1426 = vpop.permute.xlu0 %1425
    %v1428 = vadd.f32 %v1418, %v1426
    %v1429 = vtanh.pop %v1428
    %1431 = vrot.lane.b32.xlu0 %v1429, 3
    %v1432 = vpop.permute.xlu0 %1431
    %v1434 = vmul.f32 %v1413, %v1432
    %1436 = vrot.lane.b32.xlu0 %v1434, 122
    %v1437 = vpop.permute.xlu0 %1436
    %1439 = vst.msk [vmem:[#allocation2] sm:$0x30] %vm307, %v1437
    %1440 = vset.pattern.permute.xlu0 6
    %1441 = vperm.xlu0 %1440, %v1434
    %v1442 = vpop.permute.xlu0 %1441
    %v1444 = vmul.f32 %v1442, %v1257
    %1445 = vset.pattern.permute.xlu0 7
    %1446 = vperm.xlu0 %1445, %v1434
    %v1447 = vpop.permute.xlu0 %1446
    %v1449 = vmul.f32 %v1447, %v1258
    %v1450 = vadd.f32 %v1444, %v1449
    %1451 = vset.pattern.permute.xlu0 8
    %1452 = vperm.xlu0 %1451, %v1434
    %v1453 = vpop.permute.xlu0 %1452
    %v1455 = vmul.f32 %v1453, %v1259
    %v1456 = vadd.f32 %v1450, %v1455
    %v1458 = vrot.slane %v1456, 6
    %v1460 = vadd.f32 %v1253, %v1458
    %v1461 = vxor.u32 %v1460, 2147483648
    %v1462 = vmul.f32 %v1461, 1.442695
    %v1463 = vpow.pop %v1462
    %v1464 = vadd.f32 %v1463, 1.0
    %v1465 = vrcp.pop %v1464
    %v1466 = vmul.f32 %v1464, %v1465
    %v1467 = vsub.f32 1.0, %v1466
    %v1468 = vmul.f32 %v1465, %v1467
    %v1469 = vadd.f32 %v1465, %v1468
    %vm1470 = vweird.f32 %v1464
    %vm1471 = vweird.f32 %v1465
    %vm1472 = vmor %vm1470, %vm1471
    %v1473 = vsel %vm1472, %v1465, %v1469
    %v1474 = vand.u32 2147483647, %v1464
    %vm1475 = vcmp.eq.f32.partialorder %v1474, 8.507059e+37
    %v1476 = vand.u32 %v1464, 2147483648
    %v1477 = vor.u32 1.1754944e-38, %v1476
    %v1478 = vsel %vm1475, %v1477, %v1473
    %v1479 = vmul.f32 1.0, %v1478
    %v1480 = vtanh.pop %v1460
    %v1482 = vrot.slane %v1428, 6
    %v1484 = vmul.f32 %v1479, %v1482
    %1486 = vrot.lane.b32.xlu0 %v1480, 119
    %v1487 = vpop.permute.xlu0 %1486
    %v1489 = vmul.f32 %v1479, %v1487
    %1491 = vrot.lane.b32.xlu0 %v1489, 3
    %v1492 = vpop.permute.xlu0 %1491
    %v1494 = vadd.f32 %v1484, %v1492
    %v1495 = vtanh.pop %v1494
    %1497 = vrot.lane.b32.xlu0 %v1495, 3
    %v1498 = vpop.permute.xlu0 %1497
    %v1500 = vmul.f32 %v1479, %v1498
    %1502 = vrot.lane.b32.xlu0 %v1500, 122
    %v1503 = vpop.permute.xlu0 %1502
    %1505 = vst.msk [vmem:[#allocation2] sm:$0xc0] %vm374, %v1503
    %1506 = vset.pattern.permute.xlu0 6
    %1507 = vperm.xlu0 %1506, %v1500
    %v1508 = vpop.permute.xlu0 %1507
    %v1510 = vmul.f32 %v1508, %v1257
    %1511 = vset.pattern.permute.xlu0 7
    %1512 = vperm.xlu0 %1511, %v1500
    %v1513 = vpop.permute.xlu0 %1512
    %v1515 = vmul.f32 %v1513, %v1258
    %v1516 = vadd.f32 %v1510, %v1515
    %1517 = vset.pattern.permute.xlu0 8
    %1518 = vperm.xlu0 %1517, %v1500
    %v1519 = vpop.permute.xlu0 %1518
    %v1521 = vmul.f32 %v1519, %v1259
    %v1522 = vadd.f32 %v1516, %v1521
    %v1524 = vrot.slane %v1522, 6
    %v1526 = vadd.f32 %v1254, %v1524
    %v1527 = vxor.u32 %v1526, 2147483648
    %v1528 = vmul.f32 %v1527, 1.442695
    %v1529 = vpow.pop %v1528
    %v1530 = vadd.f32 %v1529, 1.0
    %v1531 = vrcp.pop %v1530
    %v1532 = vmul.f32 %v1530, %v1531
    %v1533 = vsub.f32 1.0, %v1532
    %v1534 = vmul.f32 %v1531, %v1533
    %v1535 = vadd.f32 %v1531, %v1534
    %vm1536 = vweird.f32 %v1530
    %vm1537 = vweird.f32 %v1531
    %vm1538 = vmor %vm1536, %vm1537
    %v1539 = vsel %vm1538, %v1531, %v1535
    %v1540 = vand.u32 2147483647, %v1530
    %vm1541 = vcmp.eq.f32.partialorder %v1540, 8.507059e+37
    %v1542 = vand.u32 %v1530, 2147483648
    %v1543 = vor.u32 1.1754944e-38, %v1542
    %v1544 = vsel %vm1541, %v1543, %v1539
    %v1545 = vmul.f32 1.0, %v1544
    %v1546 = vtanh.pop %v1526
    %v1548 = vrot.slane %v1494, 6
    %v1550 = vmul.f32 %v1545, %v1548
    %1552 = vrot.lane.b32.xlu0 %v1546, 119
    %v1553 = vpop.permute.xlu0 %1552
    %v1555 = vmul.f32 %v1545, %v1553
    %1557 = vrot.lane.b32.xlu0 %v1555, 3
    %v1558 = vpop.permute.xlu0 %1557
    %v1560 = vadd.f32 %v1550, %v1558
    %v1561 = vtanh.pop %v1560
    %1563 = vrot.lane.b32.xlu0 %v1561, 3
    %v1564 = vpop.permute.xlu0 %1563
    %v1566 = vmul.f32 %v1545, %v1564
    %1568 = vrot.lane.b32.xlu0 %v1566, 122
    %v1569 = vpop.permute.xlu0 %1568
    %1571 = vst.msk [vmem:[#allocation2 + $0x8] sm:$0x3] %vm173, %v1569
    %1572 = vset.pattern.permute.xlu0 6
    %1573 = vperm.xlu0 %1572, %v1566
    %v1574 = vpop.permute.xlu0 %1573
    %v1576 = vmul.f32 %v1574, %v1257
    %1577 = vset.pattern.permute.xlu0 7
    %1578 = vperm.xlu0 %1577, %v1566
    %v1579 = vpop.permute.xlu0 %1578
    %v1581 = vmul.f32 %v1579, %v1258
    %v1582 = vadd.f32 %v1576, %v1581
    %1583 = vset.pattern.permute.xlu0 8
    %1584 = vperm.xlu0 %1583, %v1566
    %v1585 = vpop.permute.xlu0 %1584
    %v1587 = vmul.f32 %v1585, %v1259
    %v1588 = vadd.f32 %v1582, %v1587
    %v1590 = vrot.slane %v1588, 6
    %v1592 = vadd.f32 %v1254, %v1590
    %v1593 = vxor.u32 %v1592, 2147483648
    %v1594 = vmul.f32 %v1593, 1.442695
    %v1595 = vpow.pop %v1594
    %v1596 = vadd.f32 %v1595, 1.0
    %v1597 = vrcp.pop %v1596
    %v1598 = vmul.f32 %v1596, %v1597
    %v1599 = vsub.f32 1.0, %v1598
    %v1600 = vmul.f32 %v1597, %v1599
    %v1601 = vadd.f32 %v1597, %v1600
    %vm1602 = vweird.f32 %v1596
    %vm1603 = vweird.f32 %v1597
    %vm1604 = vmor %vm1602, %vm1603
    %v1605 = vsel %vm1604, %v1597, %v1601
    %v1606 = vand.u32 2147483647, %v1596
    %vm1607 = vcmp.eq.f32.partialorder %v1606, 8.507059e+37
    %v1608 = vand.u32 %v1596, 2147483648
    %v1609 = vor.u32 1.1754944e-38, %v1608
    %v1610 = vsel %vm1607, %v1609, %v1605
    %v1611 = vmul.f32 1.0, %v1610
    %v1612 = vtanh.pop %v1592
    %v1614 = vrot.slane %v1560, 6
    %v1616 = vmul.f32 %v1611, %v1614
    %1618 = vrot.lane.b32.xlu0 %v1612, 119
    %v1619 = vpop.permute.xlu0 %1618
    %v1621 = vmul.f32 %v1611, %v1619
    %1623 = vrot.lane.b32.xlu0 %v1621, 3
    %v1624 = vpop.permute.xlu0 %1623
    %v1626 = vadd.f32 %v1616, %v1624
    %v1627 = vtanh.pop %v1626
    %1629 = vrot.lane.b32.xlu0 %v1627, 3
    %v1630 = vpop.permute.xlu0 %1629
    %v1632 = vmul.f32 %v1611, %v1630
    %1634 = vrot.lane.b32.xlu0 %v1632, 122
    %v1635 = vpop.permute.xlu0 %1634
    %1637 = vst.msk [vmem:[#allocation2 + $0x8] sm:$0xc] %vm240, %v1635
    %1638 = vset.pattern.permute.xlu0 6
    %1639 = vperm.xlu0 %1638, %v1632
    %v1640 = vpop.permute.xlu0 %1639
    %v1642 = vmul.f32 %v1640, %v1257
    %1643 = vset.pattern.permute.xlu0 7
    %1644 = vperm.xlu0 %1643, %v1632
    %v1645 = vpop.permute.xlu0 %1644
    %v1647 = vmul.f32 %v1645, %v1258
    %v1648 = vadd.f32 %v1642, %v1647
    %1649 = vset.pattern.permute.xlu0 8
    %1650 = vperm.xlu0 %1649, %v1632
    %v1651 = vpop.permute.xlu0 %1650
    %v1653 = vmul.f32 %v1651, %v1259
    %v1654 = vadd.f32 %v1648, %v1653
    %v1656 = vrot.slane %v1654, 6
    %v1658 = vadd.f32 %v1254, %v1656
    %v1659 = vxor.u32 %v1658, 2147483648
    %v1660 = vmul.f32 %v1659, 1.442695
    %v1661 = vpow.pop %v1660
    %v1662 = vadd.f32 %v1661, 1.0
    %v1663 = vrcp.pop %v1662
    %v1664 = vmul.f32 %v1662, %v1663
    %v1665 = vsub.f32 1.0, %v1664
    %v1666 = vmul.f32 %v1663, %v1665
    %v1667 = vadd.f32 %v1663, %v1666
    %vm1668 = vweird.f32 %v1662
    %vm1669 = vweird.f32 %v1663
    %vm1670 = vmor %vm1668, %vm1669
    %v1671 = vsel %vm1670, %v1663, %v1667
    %v1672 = vand.u32 2147483647, %v1662
    %vm1673 = vcmp.eq.f32.partialorder %v1672, 8.507059e+37
    %v1674 = vand.u32 %v1662, 2147483648
    %v1675 = vor.u32 1.1754944e-38, %v1674
    %v1676 = vsel %vm1673, %v1675, %v1671
    %v1677 = vmul.f32 1.0, %v1676
    %v1678 = vtanh.pop %v1658
    %v1680 = vrot.slane %v1626, 6
    %v1682 = vmul.f32 %v1677, %v1680
    %1684 = vrot.lane.b32.xlu0 %v1678, 119
    %v1685 = vpop.permute.xlu0 %1684
    %v1687 = vmul.f32 %v1677, %v1685
    %1689 = vrot.lane.b32.xlu0 %v1687, 3
    %v1690 = vpop.permute.xlu0 %1689
    %v1692 = vadd.f32 %v1682, %v1690
    %v1693 = vtanh.pop %v1692
    %1695 = vrot.lane.b32.xlu0 %v1693, 3
    %v1696 = vpop.permute.xlu0 %1695
    %v1698 = vmul.f32 %v1677, %v1696
    %1700 = vrot.lane.b32.xlu0 %v1698, 122
    %v1701 = vpop.permute.xlu0 %1700
    %1703 = vst.msk [vmem:[#allocation2 + $0x8] sm:$0x30] %vm307, %v1701
    %1704 = vset.pattern.permute.xlu0 6
    %1705 = vperm.xlu0 %1704, %v1698
    %v1706 = vpop.permute.xlu0 %1705
    %v1708 = vmul.f32 %v1706, %v1257
    %1709 = vset.pattern.permute.xlu0 7
    %1710 = vperm.xlu0 %1709, %v1698
    %v1711 = vpop.permute.xlu0 %1710
    %v1713 = vmul.f32 %v1711, %v1258
    %v1714 = vadd.f32 %v1708, %v1713
    %1715 = vset.pattern.permute.xlu0 8
    %1716 = vperm.xlu0 %1715, %v1698
    %v1717 = vpop.permute.xlu0 %1716
    %v1719 = vmul.f32 %v1717, %v1259
    %v1720 = vadd.f32 %v1714, %v1719
    %v1722 = vrot.slane %v1720, 6
    %v1724 = vadd.f32 %v1254, %v1722
    %v1725 = vxor.u32 %v1724, 2147483648
    %v1726 = vmul.f32 %v1725, 1.442695
    %v1727 = vpow.pop %v1726
    %v1728 = vadd.f32 %v1727, 1.0
    %v1729 = vrcp.pop %v1728
    %v1730 = vmul.f32 %v1728, %v1729
    %v1731 = vsub.f32 1.0, %v1730
    %v1732 = vmul.f32 %v1729, %v1731
    %v1733 = vadd.f32 %v1729, %v1732
    %vm1734 = vweird.f32 %v1728
    %vm1735 = vweird.f32 %v1729
    %vm1736 = vmor %vm1734, %vm1735
    %v1737 = vsel %vm1736, %v1729, %v1733
    %v1738 = vand.u32 2147483647, %v1728
    %vm1739 = vcmp.eq.f32.partialorder %v1738, 8.507059e+37
    %v1740 = vand.u32 %v1728, 2147483648
    %v1741 = vor.u32 1.1754944e-38, %v1740
    %v1742 = vsel %vm1739, %v1741, %v1737
    %v1743 = vmul.f32 1.0, %v1742
    %v1744 = vtanh.pop %v1724
    %v1746 = vrot.slane %v1692, 6
    %v1748 = vmul.f32 %v1743, %v1746
    %1750 = vrot.lane.b32.xlu0 %v1744, 119
    %v1751 = vpop.permute.xlu0 %1750
    %v1753 = vmul.f32 %v1743, %v1751
    %1755 = vrot.lane.b32.xlu0 %v1753, 3
    %v1756 = vpop.permute.xlu0 %1755
    %v1758 = vadd.f32 %v1748, %v1756
    %v1759 = vtanh.pop %v1758
    %1761 = vrot.lane.b32.xlu0 %v1759, 3
    %v1762 = vpop.permute.xlu0 %1761
    %v1764 = vmul.f32 %v1743, %v1762
    %1766 = vrot.lane.b32.xlu0 %v1764, 122
    %v1767 = vpop.permute.xlu0 %1766
    %1769 = vst.msk [vmem:[#allocation2 + $0x8] sm:$0xc0] %vm374, %v1767
    %v1770 = vld [vmem:[#allocation2] sm:$0xff]
    %v1771 = vld [vmem:[#allocation2 + $0x8] sm:$0xff]
    %s1772 = scalar_lea.vmem %s1, 12
    %v1773 = vld [vmem:[%s1772] sm:$0x7]
    %v1774 = vperm.slane %v1773, 0
    %1776 = vset.pattern.permute.xlu0 0
    %1777 = vperm.xlu0 %1776, %v1770
    %v1778 = vpop.permute.xlu0 %1777
    %1781 = vset.pattern.permute.xlu0 0
    %1782 = vperm.xlu0 %1781, %v1771
    %v1783 = vpop.permute.xlu0 %1782
    %v1785 = vmul.f32 %v1778, %v1774
    %v1786 = vmul.f32 %v1783, %v1774
    %v1787 = vperm.slane %v1773, 1
    %1788 = vset.pattern.permute.xlu0 1
    %1789 = vperm.xlu0 %1788, %v1770
    %v1790 = vpop.permute.xlu0 %1789
    %1792 = vset.pattern.permute.xlu0 1
    %1793 = vperm.xlu0 %1792, %v1771
    %v1794 = vpop.permute.xlu0 %1793
    %v1796 = vmul.f32 %v1790, %v1787
    %v1797 = vmul.f32 %v1794, %v1787
    %v1798 = vadd.f32 %v1785, %v1796
    %v1799 = vadd.f32 %v1786, %v1797
    %v1800 = vperm.slane %v1773, 2
    %1801 = vset.pattern.permute.xlu0 2
    %1802 = vperm.xlu0 %1801, %v1770
    %v1803 = vpop.permute.xlu0 %1802
    %1805 = vset.pattern.permute.xlu0 2
    %1806 = vperm.xlu0 %1805, %v1771
    %v1807 = vpop.permute.xlu0 %1806
    %v1809 = vmul.f32 %v1803, %v1800
    %v1810 = vmul.f32 %v1807, %v1800
    %v1811 = vadd.f32 %v1798, %v1809
    %v1812 = vadd.f32 %v1799, %v1810
    %s1813 = scalar_lea.vmem [#allocation6], 3
    %v1814 = vld [vmem:[%s1813] sm:$0x1]
    %v1816 = vperm.slane %v1814, 0
    %v1818 = vadd.f32 %v1811, %v1816
    %v1819 = vadd.f32 %v1812, %v1816
    %s1820 = scalar_lea.vmem [#allocation3], 12
    %v1821 = vld [vmem:[%s1820] sm:$0x7]
    %v1822 = vperm.slane %v1821, 0
    %v1823 = vperm.slane %v1821, 1
    %v1824 = vperm.slane %v1821, 2
    %v1825 = vmul.f32 %v1822, 0.0
    %v1826 = vmul.f32 %v1823, 0.0
    %v1827 = vadd.f32 %v1825, %v1826
    %v1828 = vmul.f32 %v1824, 0.0
    %v1829 = vadd.f32 %v1827, %v1828
    %v1830 = vadd.f32 %v1818, %v1829
    %v1831 = vxor.u32 %v1830, 2147483648
    %v1832 = vmul.f32 %v1831, 1.442695
    %v1833 = vpow.pop %v1832
    %v1834 = vadd.f32 %v1833, 1.0
    %v1835 = vrcp.pop %v1834
    %v1836 = vmul.f32 %v1834, %v1835
    %v1837 = vsub.f32 1.0, %v1836
    %v1838 = vmul.f32 %v1835, %v1837
    %v1839 = vadd.f32 %v1835, %v1838
    %vm1840 = vweird.f32 %v1834
    %vm1841 = vweird.f32 %v1835
    %vm1842 = vmor %vm1840, %vm1841
    %v1843 = vsel %vm1842, %v1835, %v1839
    %v1844 = vand.u32 2147483647, %v1834
    %vm1845 = vcmp.eq.f32.partialorder %v1844, 8.507059e+37
    %v1846 = vand.u32 %v1834, 2147483648
    %v1847 = vor.u32 1.1754944e-38, %v1846
    %v1848 = vsel %vm1845, %v1847, %v1843
    %v1849 = vmul.f32 1.0, %v1848
    %v1850 = vtanh.pop %v1830
    %v1851 = vmul.f32 %v1849, 0.0
    %1853 = vrot.lane.b32.xlu0 %v1850, 119
    %v1854 = vpop.permute.xlu0 %1853
    %v1856 = vmul.f32 %v1849, %v1854
    %1858 = vrot.lane.b32.xlu0 %v1856, 3
    %v1859 = vpop.permute.xlu0 %1858
    %v1861 = vadd.f32 %v1851, %v1859
    %v1862 = vtanh.pop %v1861
    %1864 = vrot.lane.b32.xlu0 %v1862, 3
    %v1865 = vpop.permute.xlu0 %1864
    %v1867 = vmul.f32 %v1849, %v1865
    %1869 = vrot.lane.b32.xlu0 %v1867, 122
    %v1870 = vpop.permute.xlu0 %1869
    %1872 = vst.msk [vmem:[#allocation2] sm:$0x3] %vm173, %v1870
    %1873 = vset.pattern.permute.xlu0 6
    %1874 = vperm.xlu0 %1873, %v1867
    %v1875 = vpop.permute.xlu0 %1874
    %v1877 = vmul.f32 %v1875, %v1822
    %1878 = vset.pattern.permute.xlu0 7
    %1879 = vperm.xlu0 %1878, %v1867
    %v1880 = vpop.permute.xlu0 %1879
    %v1882 = vmul.f32 %v1880, %v1823
    %v1883 = vadd.f32 %v1877, %v1882
    %1884 = vset.pattern.permute.xlu0 8
    %1885 = vperm.xlu0 %1884, %v1867
    %v1886 = vpop.permute.xlu0 %1885
    %v1888 = vmul.f32 %v1886, %v1824
    %v1889 = vadd.f32 %v1883, %v1888
    %v1891 = vrot.slane %v1889, 6
    %v1893 = vadd.f32 %v1818, %v1891
    %v1894 = vxor.u32 %v1893, 2147483648
    %v1895 = vmul.f32 %v1894, 1.442695
    %v1896 = vpow.pop %v1895
    %v1897 = vadd.f32 %v1896, 1.0
    %v1898 = vrcp.pop %v1897
    %v1899 = vmul.f32 %v1897, %v1898
    %v1900 = vsub.f32 1.0, %v1899
    %v1901 = vmul.f32 %v1898, %v1900
    %v1902 = vadd.f32 %v1898, %v1901
    %vm1903 = vweird.f32 %v1897
    %vm1904 = vweird.f32 %v1898
    %vm1905 = vmor %vm1903, %vm1904
    %v1906 = vsel %vm1905, %v1898, %v1902
    %v1907 = vand.u32 2147483647, %v1897
    %vm1908 = vcmp.eq.f32.partialorder %v1907, 8.507059e+37
    %v1909 = vand.u32 %v1897, 2147483648
    %v1910 = vor.u32 1.1754944e-38, %v1909
    %v1911 = vsel %vm1908, %v1910, %v1906
    %v1912 = vmul.f32 1.0, %v1911
    %v1913 = vtanh.pop %v1893
    %v1915 = vrot.slane %v1861, 6
    %v1917 = vmul.f32 %v1912, %v1915
    %1919 = vrot.lane.b32.xlu0 %v1913, 119
    %v1920 = vpop.permute.xlu0 %1919
    %v1922 = vmul.f32 %v1912, %v1920
    %1924 = vrot.lane.b32.xlu0 %v1922, 3
    %v1925 = vpop.permute.xlu0 %1924
    %v1927 = vadd.f32 %v1917, %v1925
    %v1928 = vtanh.pop %v1927
    %1930 = vrot.lane.b32.xlu0 %v1928, 3
    %v1931 = vpop.permute.xlu0 %1930
    %v1933 = vmul.f32 %v1912, %v1931
    %1935 = vrot.lane.b32.xlu0 %v1933, 122
    %v1936 = vpop.permute.xlu0 %1935
    %1938 = vst.msk [vmem:[#allocation2] sm:$0xc] %vm240, %v1936
    %1939 = vset.pattern.permute.xlu0 6
    %1940 = vperm.xlu0 %1939, %v1933
    %v1941 = vpop.permute.xlu0 %1940
    %v1943 = vmul.f32 %v1941, %v1822
    %1944 = vset.pattern.permute.xlu0 7
    %1945 = vperm.xlu0 %1944, %v1933
    %v1946 = vpop.permute.xlu0 %1945
    %v1948 = vmul.f32 %v1946, %v1823
    %v1949 = vadd.f32 %v1943, %v1948
    %1950 = vset.pattern.permute.xlu0 8
    %1951 = vperm.xlu0 %1950, %v1933
    %v1952 = vpop.permute.xlu0 %1951
    %v1954 = vmul.f32 %v1952, %v1824
    %v1955 = vadd.f32 %v1949, %v1954
    %v1957 = vrot.slane %v1955, 6
    %v1959 = vadd.f32 %v1818, %v1957
    %v1960 = vxor.u32 %v1959, 2147483648
    %v1961 = vmul.f32 %v1960, 1.442695
    %v1962 = vpow.pop %v1961
    %v1963 = vadd.f32 %v1962, 1.0
    %v1964 = vrcp.pop %v1963
    %v1965 = vmul.f32 %v1963, %v1964
    %v1966 = vsub.f32 1.0, %v1965
    %v1967 = vmul.f32 %v1964, %v1966
    %v1968 = vadd.f32 %v1964, %v1967
    %vm1969 = vweird.f32 %v1963
    %vm1970 = vweird.f32 %v1964
    %vm1971 = vmor %vm1969, %vm1970
    %v1972 = vsel %vm1971, %v1964, %v1968
    %v1973 = vand.u32 2147483647, %v1963
    %vm1974 = vcmp.eq.f32.partialorder %v1973, 8.507059e+37
    %v1975 = vand.u32 %v1963, 2147483648
    %v1976 = vor.u32 1.1754944e-38, %v1975
    %v1977 = vsel %vm1974, %v1976, %v1972
    %v1978 = vmul.f32 1.0, %v1977
    %v1979 = vtanh.pop %v1959
    %v1981 = vrot.slane %v1927, 6
    %v1983 = vmul.f32 %v1978, %v1981
    %1985 = vrot.lane.b32.xlu0 %v1979, 119
    %v1986 = vpop.permute.xlu0 %1985
    %v1988 = vmul.f32 %v1978, %v1986
    %1990 = vrot.lane.b32.xlu0 %v1988, 3
    %v1991 = vpop.permute.xlu0 %1990
    %v1993 = vadd.f32 %v1983, %v1991
    %v1994 = vtanh.pop %v1993
    %1996 = vrot.lane.b32.xlu0 %v1994, 3
    %v1997 = vpop.permute.xlu0 %1996
    %v1999 = vmul.f32 %v1978, %v1997
    %2001 = vrot.lane.b32.xlu0 %v1999, 122
    %v2002 = vpop.permute.xlu0 %2001
    %2004 = vst.msk [vmem:[#allocation2] sm:$0x30] %vm307, %v2002
    %2005 = vset.pattern.permute.xlu0 6
    %2006 = vperm.xlu0 %2005, %v1999
    %v2007 = vpop.permute.xlu0 %2006
    %v2009 = vmul.f32 %v2007, %v1822
    %2010 = vset.pattern.permute.xlu0 7
    %2011 = vperm.xlu0 %2010, %v1999
    %v2012 = vpop.permute.xlu0 %2011
    %v2014 = vmul.f32 %v2012, %v1823
    %v2015 = vadd.f32 %v2009, %v2014
    %2016 = vset.pattern.permute.xlu0 8
    %2017 = vperm.xlu0 %2016, %v1999
    %v2018 = vpop.permute.xlu0 %2017
    %v2020 = vmul.f32 %v2018, %v1824
    %v2021 = vadd.f32 %v2015, %v2020
    %v2023 = vrot.slane %v2021, 6
    %v2025 = vadd.f32 %v1818, %v2023
    %v2026 = vxor.u32 %v2025, 2147483648
    %v2027 = vmul.f32 %v2026, 1.442695
    %v2028 = vpow.pop %v2027
    %v2029 = vadd.f32 %v2028, 1.0
    %v2030 = vrcp.pop %v2029
    %v2031 = vmul.f32 %v2029, %v2030
    %v2032 = vsub.f32 1.0, %v2031
    %v2033 = vmul.f32 %v2030, %v2032
    %v2034 = vadd.f32 %v2030, %v2033
    %vm2035 = vweird.f32 %v2029
    %vm2036 = vweird.f32 %v2030
    %vm2037 = vmor %vm2035, %vm2036
    %v2038 = vsel %vm2037, %v2030, %v2034
    %v2039 = vand.u32 2147483647, %v2029
    %vm2040 = vcmp.eq.f32.partialorder %v2039, 8.507059e+37
    %v2041 = vand.u32 %v2029, 2147483648
    %v2042 = vor.u32 1.1754944e-38, %v2041
    %v2043 = vsel %vm2040, %v2042, %v2038
    %v2044 = vmul.f32 1.0, %v2043
    %v2045 = vtanh.pop %v2025
    %v2047 = vrot.slane %v1993, 6
    %v2049 = vmul.f32 %v2044, %v2047
    %2051 = vrot.lane.b32.xlu0 %v2045, 119
    %v2052 = vpop.permute.xlu0 %2051
    %v2054 = vmul.f32 %v2044, %v2052
    %2056 = vrot.lane.b32.xlu0 %v2054, 3
    %v2057 = vpop.permute.xlu0 %2056
    %v2059 = vadd.f32 %v2049, %v2057
    %v2060 = vtanh.pop %v2059
    %2062 = vrot.lane.b32.xlu0 %v2060, 3
    %v2063 = vpop.permute.xlu0 %2062
    %v2065 = vmul.f32 %v2044, %v2063
    %2067 = vrot.lane.b32.xlu0 %v2065, 122
    %v2068 = vpop.permute.xlu0 %2067
    %2070 = vst.msk [vmem:[#allocation2] sm:$0xc0] %vm374, %v2068
    %2071 = vset.pattern.permute.xlu0 6
    %2072 = vperm.xlu0 %2071, %v2065
    %v2073 = vpop.permute.xlu0 %2072
    %v2075 = vmul.f32 %v2073, %v1822
    %2076 = vset.pattern.permute.xlu0 7
    %2077 = vperm.xlu0 %2076, %v2065
    %v2078 = vpop.permute.xlu0 %2077
    %v2080 = vmul.f32 %v2078, %v1823
    %v2081 = vadd.f32 %v2075, %v2080
    %2082 = vset.pattern.permute.xlu0 8
    %2083 = vperm.xlu0 %2082, %v2065
    %v2084 = vpop.permute.xlu0 %2083
    %v2086 = vmul.f32 %v2084, %v1824
    %v2087 = vadd.f32 %v2081, %v2086
    %v2089 = vrot.slane %v2087, 6
    %v2091 = vadd.f32 %v1819, %v2089
    %v2092 = vxor.u32 %v2091, 2147483648
    %v2093 = vmul.f32 %v2092, 1.442695
    %v2094 = vpow.pop %v2093
    %v2095 = vadd.f32 %v2094, 1.0
    %v2096 = vrcp.pop %v2095
    %v2097 = vmul.f32 %v2095, %v2096
    %v2098 = vsub.f32 1.0, %v2097
    %v2099 = vmul.f32 %v2096, %v2098
    %v2100 = vadd.f32 %v2096, %v2099
    %vm2101 = vweird.f32 %v2095
    %vm2102 = vweird.f32 %v2096
    %vm2103 = vmor %vm2101, %vm2102
    %v2104 = vsel %vm2103, %v2096, %v2100
    %v2105 = vand.u32 2147483647, %v2095
    %vm2106 = vcmp.eq.f32.partialorder %v2105, 8.507059e+37
    %v2107 = vand.u32 %v2095, 2147483648
    %v2108 = vor.u32 1.1754944e-38, %v2107
    %v2109 = vsel %vm2106, %v2108, %v2104
    %v2110 = vmul.f32 1.0, %v2109
    %v2111 = vtanh.pop %v2091
    %v2113 = vrot.slane %v2059, 6
    %v2115 = vmul.f32 %v2110, %v2113
    %2117 = vrot.lane.b32.xlu0 %v2111, 119
    %v2118 = vpop.permute.xlu0 %2117
    %v2120 = vmul.f32 %v2110, %v2118
    %2122 = vrot.lane.b32.xlu0 %v2120, 3
    %v2123 = vpop.permute.xlu0 %2122
    %v2125 = vadd.f32 %v2115, %v2123
    %v2126 = vtanh.pop %v2125
    %2128 = vrot.lane.b32.xlu0 %v2126, 3
    %v2129 = vpop.permute.xlu0 %2128
    %v2131 = vmul.f32 %v2110, %v2129
    %2133 = vrot.lane.b32.xlu0 %v2131, 122
    %v2134 = vpop.permute.xlu0 %2133
    %2136 = vst.msk [vmem:[#allocation2 + $0x8] sm:$0x3] %vm173, %v2134
    %2137 = vset.pattern.permute.xlu0 6
    %2138 = vperm.xlu0 %2137, %v2131
    %v2139 = vpop.permute.xlu0 %2138
    %v2141 = vmul.f32 %v2139, %v1822
    %2142 = vset.pattern.permute.xlu0 7
    %2143 = vperm.xlu0 %2142, %v2131
    %v2144 = vpop.permute.xlu0 %2143
    %v2146 = vmul.f32 %v2144, %v1823
    %v2147 = vadd.f32 %v2141, %v2146
    %2148 = vset.pattern.permute.xlu0 8
    %2149 = vperm.xlu0 %2148, %v2131
    %v2150 = vpop.permute.xlu0 %2149
    %v2152 = vmul.f32 %v2150, %v1824
    %v2153 = vadd.f32 %v2147, %v2152
    %v2155 = vrot.slane %v2153, 6
    %v2157 = vadd.f32 %v1819, %v2155
    %v2158 = vxor.u32 %v2157, 2147483648
    %v2159 = vmul.f32 %v2158, 1.442695
    %v2160 = vpow.pop %v2159
    %v2161 = vadd.f32 %v2160, 1.0
    %v2162 = vrcp.pop %v2161
    %v2163 = vmul.f32 %v2161, %v2162
    %v2164 = vsub.f32 1.0, %v2163
    %v2165 = vmul.f32 %v2162, %v2164
    %v2166 = vadd.f32 %v2162, %v2165
    %vm2167 = vweird.f32 %v2161
    %vm2168 = vweird.f32 %v2162
    %vm2169 = vmor %vm2167, %vm2168
    %v2170 = vsel %vm2169, %v2162, %v2166
    %v2171 = vand.u32 2147483647, %v2161
    %vm2172 = vcmp.eq.f32.partialorder %v2171, 8.507059e+37
    %v2173 = vand.u32 %v2161, 2147483648
    %v2174 = vor.u32 1.1754944e-38, %v2173
    %v2175 = vsel %vm2172, %v2174, %v2170
    %v2176 = vmul.f32 1.0, %v2175
    %v2177 = vtanh.pop %v2157
    %v2179 = vrot.slane %v2125, 6
    %v2181 = vmul.f32 %v2176, %v2179
    %2183 = vrot.lane.b32.xlu0 %v2177, 119
    %v2184 = vpop.permute.xlu0 %2183
    %v2186 = vmul.f32 %v2176, %v2184
    %2188 = vrot.lane.b32.xlu0 %v2186, 3
    %v2189 = vpop.permute.xlu0 %2188
    %v2191 = vadd.f32 %v2181, %v2189
    %v2192 = vtanh.pop %v2191
    %2194 = vrot.lane.b32.xlu0 %v2192, 3
    %v2195 = vpop.permute.xlu0 %2194
    %v2197 = vmul.f32 %v2176, %v2195
    %2199 = vrot.lane.b32.xlu0 %v2197, 122
    %v2200 = vpop.permute.xlu0 %2199
    %2202 = vst.msk [vmem:[#allocation2 + $0x8] sm:$0xc] %vm240, %v2200
    %2203 = vset.pattern.permute.xlu0 6
    %2204 = vperm.xlu0 %2203, %v2197
    %v2205 = vpop.permute.xlu0 %2204
    %v2207 = vmul.f32 %v2205, %v1822
    %2208 = vset.pattern.permute.xlu0 7
    %2209 = vperm.xlu0 %2208, %v2197
    %v2210 = vpop.permute.xlu0 %2209
    %v2212 = vmul.f32 %v2210, %v1823
    %v2213 = vadd.f32 %v2207, %v2212
    %2214 = vset.pattern.permute.xlu0 8
    %2215 = vperm.xlu0 %2214, %v2197
    %v2216 = vpop.permute.xlu0 %2215
    %v2218 = vmul.f32 %v2216, %v1824
    %v2219 = vadd.f32 %v2213, %v2218
    %v2221 = vrot.slane %v2219, 6
    %v2223 = vadd.f32 %v1819, %v2221
    %v2224 = vxor.u32 %v2223, 2147483648
    %v2225 = vmul.f32 %v2224, 1.442695
    %v2226 = vpow.pop %v2225
    %v2227 = vadd.f32 %v2226, 1.0
    %v2228 = vrcp.pop %v2227
    %v2229 = vmul.f32 %v2227, %v2228
    %v2230 = vsub.f32 1.0, %v2229
    %v2231 = vmul.f32 %v2228, %v2230
    %v2232 = vadd.f32 %v2228, %v2231
    %vm2233 = vweird.f32 %v2227
    %vm2234 = vweird.f32 %v2228
    %vm2235 = vmor %vm2233, %vm2234
    %v2236 = vsel %vm2235, %v2228, %v2232
    %v2237 = vand.u32 2147483647, %v2227
    %vm2238 = vcmp.eq.f32.partialorder %v2237, 8.507059e+37
    %v2239 = vand.u32 %v2227, 2147483648
    %v2240 = vor.u32 1.1754944e-38, %v2239
    %v2241 = vsel %vm2238, %v2240, %v2236
    %v2242 = vmul.f32 1.0, %v2241
    %v2243 = vtanh.pop %v2223
    %v2245 = vrot.slane %v2191, 6
    %v2247 = vmul.f32 %v2242, %v2245
    %2249 = vrot.lane.b32.xlu0 %v2243, 119
    %v2250 = vpop.permute.xlu0 %2249
    %v2252 = vmul.f32 %v2242, %v2250
    %2254 = vrot.lane.b32.xlu0 %v2252, 3
    %v2255 = vpop.permute.xlu0 %2254
    %v2257 = vadd.f32 %v2247, %v2255
    %v2258 = vtanh.pop %v2257
    %2260 = vrot.lane.b32.xlu0 %v2258, 3
    %v2261 = vpop.permute.xlu0 %2260
    %v2263 = vmul.f32 %v2242, %v2261
    %2265 = vrot.lane.b32.xlu0 %v2263, 122
    %v2266 = vpop.permute.xlu0 %2265
    %2268 = vst.msk [vmem:[#allocation2 + $0x8] sm:$0x30] %vm307, %v2266
    %2269 = vset.pattern.permute.xlu0 6
    %2270 = vperm.xlu0 %2269, %v2263
    %v2271 = vpop.permute.xlu0 %2270
    %v2273 = vmul.f32 %v2271, %v1822
    %2274 = vset.pattern.permute.xlu0 7
    %2275 = vperm.xlu0 %2274, %v2263
    %v2276 = vpop.permute.xlu0 %2275
    %v2278 = vmul.f32 %v2276, %v1823
    %v2279 = vadd.f32 %v2273, %v2278
    %2280 = vset.pattern.permute.xlu0 8
    %2281 = vperm.xlu0 %2280, %v2263
    %v2282 = vpop.permute.xlu0 %2281
    %v2284 = vmul.f32 %v2282, %v1824
    %v2285 = vadd.f32 %v2279, %v2284
    %v2287 = vrot.slane %v2285, 6
    %v2289 = vadd.f32 %v1819, %v2287
    %v2290 = vxor.u32 %v2289, 2147483648
    %v2291 = vmul.f32 %v2290, 1.442695
    %v2292 = vpow.pop %v2291
    %v2293 = vadd.f32 %v2292, 1.0
    %v2294 = vrcp.pop %v2293
    %v2295 = vmul.f32 %v2293, %v2294
    %v2296 = vsub.f32 1.0, %v2295
    %v2297 = vmul.f32 %v2294, %v2296
    %v2298 = vadd.f32 %v2294, %v2297
    %vm2299 = vweird.f32 %v2293
    %vm2300 = vweird.f32 %v2294
    %vm2301 = vmor %vm2299, %vm2300
    %v2302 = vsel %vm2301, %v2294, %v2298
    %v2303 = vand.u32 2147483647, %v2293
    %vm2304 = vcmp.eq.f32.partialorder %v2303, 8.507059e+37
    %v2305 = vand.u32 %v2293, 2147483648
    %v2306 = vor.u32 1.1754944e-38, %v2305
    %v2307 = vsel %vm2304, %v2306, %v2302
    %v2308 = vmul.f32 1.0, %v2307
    %v2309 = vtanh.pop %v2289
    %v2311 = vrot.slane %v2257, 6
    %v2313 = vmul.f32 %v2308, %v2311
    %2315 = vrot.lane.b32.xlu0 %v2309, 119
    %v2316 = vpop.permute.xlu0 %2315
    %v2318 = vmul.f32 %v2308, %v2316
    %2320 = vrot.lane.b32.xlu0 %v2318, 3
    %v2321 = vpop.permute.xlu0 %2320
    %v2323 = vadd.f32 %v2313, %v2321
    %v2324 = vtanh.pop %v2323
    %2326 = vrot.lane.b32.xlu0 %v2324, 3
    %v2327 = vpop.permute.xlu0 %2326
    %v2329 = vmul.f32 %v2308, %v2327
    %2331 = vrot.lane.b32.xlu0 %v2329, 122
    %v2332 = vpop.permute.xlu0 %2331
    %2334 = vst.msk [vmem:[#allocation2 + $0x8] sm:$0xc0] %vm374, %v2332
    %v2335 = vld [vmem:[#allocation2] sm:$0xff]
    %v2336 = vld [vmem:[#allocation2 + $0x8] sm:$0xff]
    %s2337 = scalar_lea.vmem %s1, 16
    %v2338 = vld [vmem:[%s2337] sm:$0x7]
    %v2339 = vperm.slane %v2338, 0
    %2341 = vset.pattern.permute.xlu0 0
    %2342 = vperm.xlu0 %2341, %v2335
    %v2343 = vpop.permute.xlu0 %2342
    %2346 = vset.pattern.permute.xlu0 0
    %2347 = vperm.xlu0 %2346, %v2336
    %v2348 = vpop.permute.xlu0 %2347
    %v2350 = vmul.f32 %v2343, %v2339
    %v2351 = vmul.f32 %v2348, %v2339
    %v2352 = vperm.slane %v2338, 1
    %2353 = vset.pattern.permute.xlu0 1
    %2354 = vperm.xlu0 %2353, %v2335
    %v2355 = vpop.permute.xlu0 %2354
    %2357 = vset.pattern.permute.xlu0 1
    %2358 = vperm.xlu0 %2357, %v2336
    %v2359 = vpop.permute.xlu0 %2358
    %v2361 = vmul.f32 %v2355, %v2352
    %v2362 = vmul.f32 %v2359, %v2352
    %v2363 = vadd.f32 %v2350, %v2361
    %v2364 = vadd.f32 %v2351, %v2362
    %v2365 = vperm.slane %v2338, 2
    %2366 = vset.pattern.permute.xlu0 2
    %2367 = vperm.xlu0 %2366, %v2335
    %v2368 = vpop.permute.xlu0 %2367
    %2370 = vset.pattern.permute.xlu0 2
    %2371 = vperm.xlu0 %2370, %v2336
    %v2372 = vpop.permute.xlu0 %2371
    %v2374 = vmul.f32 %v2368, %v2365
    %v2375 = vmul.f32 %v2372, %v2365
    %v2376 = vadd.f32 %v2363, %v2374
    %v2377 = vadd.f32 %v2364, %v2375
    %s2378 = scalar_lea.vmem [#allocation6], 4
    %v2379 = vld [vmem:[%s2378] sm:$0x1]
    %v2381 = vperm.slane %v2379, 0
    %v2383 = vadd.f32 %v2376, %v2381
    %v2384 = vadd.f32 %v2377, %v2381
    %s2385 = scalar_lea.vmem [#allocation3], 16
    %v2386 = vld [vmem:[%s2385] sm:$0x7]
    %v2387 = vperm.slane %v2386, 0
    %v2388 = vperm.slane %v2386, 1
    %v2389 = vperm.slane %v2386, 2
    %v2390 = vmul.f32 %v2387, 0.0
    %v2391 = vmul.f32 %v2388, 0.0
    %v2392 = vadd.f32 %v2390, %v2391
    %v2393 = vmul.f32 %v2389, 0.0
    %v2394 = vadd.f32 %v2392, %v2393
    %v2395 = vadd.f32 %v2383, %v2394
    %v2396 = vxor.u32 %v2395, 2147483648
    %v2397 = vmul.f32 %v2396, 1.442695
    %v2398 = vpow.pop %v2397
    %v2399 = vadd.f32 %v2398, 1.0
    %v2400 = vrcp.pop %v2399
    %v2401 = vmul.f32 %v2399, %v2400
    %v2402 = vsub.f32 1.0, %v2401
    %v2403 = vmul.f32 %v2400, %v2402
    %v2404 = vadd.f32 %v2400, %v2403
    %vm2405 = vweird.f32 %v2399
    %vm2406 = vweird.f32 %v2400
    %vm2407 = vmor %vm2405, %vm2406
    %v2408 = vsel %vm2407, %v2400, %v2404
    %v2409 = vand.u32 2147483647, %v2399
    %vm2410 = vcmp.eq.f32.partialorder %v2409, 8.507059e+37
    %v2411 = vand.u32 %v2399, 2147483648
    %v2412 = vor.u32 1.1754944e-38, %v2411
    %v2413 = vsel %vm2410, %v2412, %v2408
    %v2414 = vmul.f32 1.0, %v2413
    %v2415 = vtanh.pop %v2395
    %v2416 = vmul.f32 %v2414, 0.0
    %2418 = vrot.lane.b32.xlu0 %v2415, 119
    %v2419 = vpop.permute.xlu0 %2418
    %v2421 = vmul.f32 %v2414, %v2419
    %2423 = vrot.lane.b32.xlu0 %v2421, 3
    %v2424 = vpop.permute.xlu0 %2423
    %v2426 = vadd.f32 %v2416, %v2424
    %v2427 = vtanh.pop %v2426
    %2429 = vrot.lane.b32.xlu0 %v2427, 3
    %v2430 = vpop.permute.xlu0 %2429
    %v2432 = vmul.f32 %v2414, %v2430
    %2434 = vset.pattern.permute.xlu0 6
    %2435 = vperm.xlu0 %2434, %v2432
    %v2436 = vpop.permute.xlu0 %2435
    %v2438 = vmul.f32 %v2436, %v2387
    %2439 = vset.pattern.permute.xlu0 7
    %2440 = vperm.xlu0 %2439, %v2432
    %v2441 = vpop.permute.xlu0 %2440
    %v2443 = vmul.f32 %v2441, %v2388
    %v2444 = vadd.f32 %v2438, %v2443
    %2445 = vset.pattern.permute.xlu0 8
    %2446 = vperm.xlu0 %2445, %v2432
    %v2447 = vpop.permute.xlu0 %2446
    %v2449 = vmul.f32 %v2447, %v2389
    %v2450 = vadd.f32 %v2444, %v2449
    %v2452 = vrot.slane %v2450, 6
    %v2454 = vadd.f32 %v2383, %v2452
    %v2455 = vxor.u32 %v2454, 2147483648
    %v2456 = vmul.f32 %v2455, 1.442695
    %v2457 = vpow.pop %v2456
    %v2458 = vadd.f32 %v2457, 1.0
    %v2459 = vrcp.pop %v2458
    %v2460 = vmul.f32 %v2458, %v2459
    %v2461 = vsub.f32 1.0, %v2460
    %v2462 = vmul.f32 %v2459, %v2461
    %v2463 = vadd.f32 %v2459, %v2462
    %vm2464 = vweird.f32 %v2458
    %vm2465 = vweird.f32 %v2459
    %vm2466 = vmor %vm2464, %vm2465
    %v2467 = vsel %vm2466, %v2459, %v2463
    %v2468 = vand.u32 2147483647, %v2458
    %vm2469 = vcmp.eq.f32.partialorder %v2468, 8.507059e+37
    %v2470 = vand.u32 %v2458, 2147483648
    %v2471 = vor.u32 1.1754944e-38, %v2470
    %v2472 = vsel %vm2469, %v2471, %v2467
    %v2473 = vmul.f32 1.0, %v2472
    %v2474 = vtanh.pop %v2454
    %v2476 = vrot.slane %v2426, 6
    %v2478 = vmul.f32 %v2473, %v2476
    %2480 = vrot.lane.b32.xlu0 %v2474, 119
    %v2481 = vpop.permute.xlu0 %2480
    %v2483 = vmul.f32 %v2473, %v2481
    %2485 = vrot.lane.b32.xlu0 %v2483, 3
    %v2486 = vpop.permute.xlu0 %2485
    %v2488 = vadd.f32 %v2478, %v2486
    %v2489 = vtanh.pop %v2488
    %2491 = vrot.lane.b32.xlu0 %v2489, 3
    %v2492 = vpop.permute.xlu0 %2491
    %v2494 = vmul.f32 %v2473, %v2492
    %2496 = vset.pattern.permute.xlu0 6
    %2497 = vperm.xlu0 %2496, %v2494
    %v2498 = vpop.permute.xlu0 %2497
    %v2500 = vmul.f32 %v2498, %v2387
    %2501 = vset.pattern.permute.xlu0 7
    %2502 = vperm.xlu0 %2501, %v2494
    %v2503 = vpop.permute.xlu0 %2502
    %v2505 = vmul.f32 %v2503, %v2388
    %v2506 = vadd.f32 %v2500, %v2505
    %2507 = vset.pattern.permute.xlu0 8
    %2508 = vperm.xlu0 %2507, %v2494
    %v2509 = vpop.permute.xlu0 %2508
    %v2511 = vmul.f32 %v2509, %v2389
    %v2512 = vadd.f32 %v2506, %v2511
    %v2514 = vrot.slane %v2512, 6
    %v2516 = vadd.f32 %v2383, %v2514
    %v2517 = vxor.u32 %v2516, 2147483648
    %v2518 = vmul.f32 %v2517, 1.442695
    %v2519 = vpow.pop %v2518
    %v2520 = vadd.f32 %v2519, 1.0
    %v2521 = vrcp.pop %v2520
    %v2522 = vmul.f32 %v2520, %v2521
    %v2523 = vsub.f32 1.0, %v2522
    %v2524 = vmul.f32 %v2521, %v2523
    %v2525 = vadd.f32 %v2521, %v2524
    %vm2526 = vweird.f32 %v2520
    %vm2527 = vweird.f32 %v2521
    %vm2528 = vmor %vm2526, %vm2527
    %v2529 = vsel %vm2528, %v2521, %v2525
    %v2530 = vand.u32 2147483647, %v2520
    %vm2531 = vcmp.eq.f32.partialorder %v2530, 8.507059e+37
    %v2532 = vand.u32 %v2520, 2147483648
    %v2533 = vor.u32 1.1754944e-38, %v2532
    %v2534 = vsel %vm2531, %v2533, %v2529
    %v2535 = vmul.f32 1.0, %v2534
    %v2536 = vtanh.pop %v2516
    %v2538 = vrot.slane %v2488, 6
    %v2540 = vmul.f32 %v2535, %v2538
    %2542 = vrot.lane.b32.xlu0 %v2536, 119
    %v2543 = vpop.permute.xlu0 %2542
    %v2545 = vmul.f32 %v2535, %v2543
    %2547 = vrot.lane.b32.xlu0 %v2545, 3
    %v2548 = vpop.permute.xlu0 %2547
    %v2550 = vadd.f32 %v2540, %v2548
    %v2551 = vtanh.pop %v2550
    %2553 = vrot.lane.b32.xlu0 %v2551, 3
    %v2554 = vpop.permute.xlu0 %2553
    %v2556 = vmul.f32 %v2535, %v2554
    %2558 = vset.pattern.permute.xlu0 6
    %2559 = vperm.xlu0 %2558, %v2556
    %v2560 = vpop.permute.xlu0 %2559
    %v2562 = vmul.f32 %v2560, %v2387
    %2563 = vset.pattern.permute.xlu0 7
    %2564 = vperm.xlu0 %2563, %v2556
    %v2565 = vpop.permute.xlu0 %2564
    %v2567 = vmul.f32 %v2565, %v2388
    %v2568 = vadd.f32 %v2562, %v2567
    %2569 = vset.pattern.permute.xlu0 8
    %2570 = vperm.xlu0 %2569, %v2556
    %v2571 = vpop.permute.xlu0 %2570
    %v2573 = vmul.f32 %v2571, %v2389
    %v2574 = vadd.f32 %v2568, %v2573
    %v2576 = vrot.slane %v2574, 6
    %v2578 = vadd.f32 %v2383, %v2576
    %v2579 = vxor.u32 %v2578, 2147483648
    %v2580 = vmul.f32 %v2579, 1.442695
    %v2581 = vpow.pop %v2580
    %v2582 = vadd.f32 %v2581, 1.0
    %v2583 = vrcp.pop %v2582
    %v2584 = vmul.f32 %v2582, %v2583
    %v2585 = vsub.f32 1.0, %v2584
    %v2586 = vmul.f32 %v2583, %v2585
    %v2587 = vadd.f32 %v2583, %v2586
    %vm2588 = vweird.f32 %v2582
    %vm2589 = vweird.f32 %v2583
    %vm2590 = vmor %vm2588, %vm2589
    %v2591 = vsel %vm2590, %v2583, %v2587
    %v2592 = vand.u32 2147483647, %v2582
    %vm2593 = vcmp.eq.f32.partialorder %v2592, 8.507059e+37
    %v2594 = vand.u32 %v2582, 2147483648
    %v2595 = vor.u32 1.1754944e-38, %v2594
    %v2596 = vsel %vm2593, %v2595, %v2591
    %v2597 = vmul.f32 1.0, %v2596
    %v2598 = vtanh.pop %v2578
    %v2600 = vrot.slane %v2550, 6
    %v2602 = vmul.f32 %v2597, %v2600
    %2604 = vrot.lane.b32.xlu0 %v2598, 119
    %v2605 = vpop.permute.xlu0 %2604
    %v2607 = vmul.f32 %v2597, %v2605
    %2609 = vrot.lane.b32.xlu0 %v2607, 3
    %v2610 = vpop.permute.xlu0 %2609
    %v2612 = vadd.f32 %v2602, %v2610
    %v2613 = vtanh.pop %v2612
    %2615 = vrot.lane.b32.xlu0 %v2613, 3
    %v2616 = vpop.permute.xlu0 %2615
    %v2618 = vmul.f32 %v2597, %v2616
    %2620 = vset.pattern.permute.xlu0 6
    %2621 = vperm.xlu0 %2620, %v2618
    %v2622 = vpop.permute.xlu0 %2621
    %v2624 = vmul.f32 %v2622, %v2387
    %2625 = vset.pattern.permute.xlu0 7
    %2626 = vperm.xlu0 %2625, %v2618
    %v2627 = vpop.permute.xlu0 %2626
    %v2629 = vmul.f32 %v2627, %v2388
    %v2630 = vadd.f32 %v2624, %v2629
    %2631 = vset.pattern.permute.xlu0 8
    %2632 = vperm.xlu0 %2631, %v2618
    %v2633 = vpop.permute.xlu0 %2632
    %v2635 = vmul.f32 %v2633, %v2389
    %v2636 = vadd.f32 %v2630, %v2635
    %v2638 = vrot.slane %v2636, 6
    %v2640 = vadd.f32 %v2384, %v2638
    %v2641 = vxor.u32 %v2640, 2147483648
    %v2642 = vmul.f32 %v2641, 1.442695
    %v2643 = vpow.pop %v2642
    %v2644 = vadd.f32 %v2643, 1.0
    %v2645 = vrcp.pop %v2644
    %v2646 = vmul.f32 %v2644, %v2645
    %v2647 = vsub.f32 1.0, %v2646
    %v2648 = vmul.f32 %v2645, %v2647
    %v2649 = vadd.f32 %v2645, %v2648
    %vm2650 = vweird.f32 %v2644
    %vm2651 = vweird.f32 %v2645
    %vm2652 = vmor %vm2650, %vm2651
    %v2653 = vsel %vm2652, %v2645, %v2649
    %v2654 = vand.u32 2147483647, %v2644
    %vm2655 = vcmp.eq.f32.partialorder %v2654, 8.507059e+37
    %v2656 = vand.u32 %v2644, 2147483648
    %v2657 = vor.u32 1.1754944e-38, %v2656
    %v2658 = vsel %vm2655, %v2657, %v2653
    %v2659 = vmul.f32 1.0, %v2658
    %v2660 = vtanh.pop %v2640
    %v2662 = vrot.slane %v2612, 6
    %v2664 = vmul.f32 %v2659, %v2662
    %2666 = vrot.lane.b32.xlu0 %v2660, 119
    %v2667 = vpop.permute.xlu0 %2666
    %v2669 = vmul.f32 %v2659, %v2667
    %2671 = vrot.lane.b32.xlu0 %v2669, 3
    %v2672 = vpop.permute.xlu0 %2671
    %v2674 = vadd.f32 %v2664, %v2672
    %v2675 = vtanh.pop %v2674
    %2677 = vrot.lane.b32.xlu0 %v2675, 3
    %v2678 = vpop.permute.xlu0 %2677
    %v2680 = vmul.f32 %v2659, %v2678
    %2682 = vset.pattern.permute.xlu0 6
    %2683 = vperm.xlu0 %2682, %v2680
    %v2684 = vpop.permute.xlu0 %2683
    %v2686 = vmul.f32 %v2684, %v2387
    %2687 = vset.pattern.permute.xlu0 7
    %2688 = vperm.xlu0 %2687, %v2680
    %v2689 = vpop.permute.xlu0 %2688
    %v2691 = vmul.f32 %v2689, %v2388
    %v2692 = vadd.f32 %v2686, %v2691
    %2693 = vset.pattern.permute.xlu0 8
    %2694 = vperm.xlu0 %2693, %v2680
    %v2695 = vpop.permute.xlu0 %2694
    %v2697 = vmul.f32 %v2695, %v2389
    %v2698 = vadd.f32 %v2692, %v2697
    %v2700 = vrot.slane %v2698, 6
    %v2702 = vadd.f32 %v2384, %v2700
    %v2703 = vxor.u32 %v2702, 2147483648
    %v2704 = vmul.f32 %v2703, 1.442695
    %v2705 = vpow.pop %v2704
    %v2706 = vadd.f32 %v2705, 1.0
    %v2707 = vrcp.pop %v2706
    %v2708 = vmul.f32 %v2706, %v2707
    %v2709 = vsub.f32 1.0, %v2708
    %v2710 = vmul.f32 %v2707, %v2709
    %v2711 = vadd.f32 %v2707, %v2710
    %vm2712 = vweird.f32 %v2706
    %vm2713 = vweird.f32 %v2707
    %vm2714 = vmor %vm2712, %vm2713
    %v2715 = vsel %vm2714, %v2707, %v2711
    %v2716 = vand.u32 2147483647, %v2706
    %vm2717 = vcmp.eq.f32.partialorder %v2716, 8.507059e+37
    %v2718 = vand.u32 %v2706, 2147483648
    %v2719 = vor.u32 1.1754944e-38, %v2718
    %v2720 = vsel %vm2717, %v2719, %v2715
    %v2721 = vmul.f32 1.0, %v2720
    %v2722 = vtanh.pop %v2702
    %v2724 = vrot.slane %v2674, 6
    %v2726 = vmul.f32 %v2721, %v2724
    %2728 = vrot.lane.b32.xlu0 %v2722, 119
    %v2729 = vpop.permute.xlu0 %2728
    %v2731 = vmul.f32 %v2721, %v2729
    %2733 = vrot.lane.b32.xlu0 %v2731, 3
    %v2734 = vpop.permute.xlu0 %2733
    %v2736 = vadd.f32 %v2726, %v2734
    %v2737 = vtanh.pop %v2736
    %2739 = vrot.lane.b32.xlu0 %v2737, 3
    %v2740 = vpop.permute.xlu0 %2739
    %v2742 = vmul.f32 %v2721, %v2740
    %2744 = vset.pattern.permute.xlu0 6
    %2745 = vperm.xlu0 %2744, %v2742
    %v2746 = vpop.permute.xlu0 %2745
    %v2748 = vmul.f32 %v2746, %v2387
    %2749 = vset.pattern.permute.xlu0 7
    %2750 = vperm.xlu0 %2749, %v2742
    %v2751 = vpop.permute.xlu0 %2750
    %v2753 = vmul.f32 %v2751, %v2388
    %v2754 = vadd.f32 %v2748, %v2753
    %2755 = vset.pattern.permute.xlu0 8
    %2756 = vperm.xlu0 %2755, %v2742
    %v2757 = vpop.permute.xlu0 %2756
    %v2759 = vmul.f32 %v2757, %v2389
    %v2760 = vadd.f32 %v2754, %v2759
    %v2762 = vrot.slane %v2760, 6
    %v2764 = vadd.f32 %v2384, %v2762
    %v2765 = vxor.u32 %v2764, 2147483648
    %v2766 = vmul.f32 %v2765, 1.442695
    %v2767 = vpow.pop %v2766
    %v2768 = vadd.f32 %v2767, 1.0
    %v2769 = vrcp.pop %v2768
    %v2770 = vmul.f32 %v2768, %v2769
    %v2771 = vsub.f32 1.0, %v2770
    %v2772 = vmul.f32 %v2769, %v2771
    %v2773 = vadd.f32 %v2769, %v2772
    %vm2774 = vweird.f32 %v2768
    %vm2775 = vweird.f32 %v2769
    %vm2776 = vmor %vm2774, %vm2775
    %v2777 = vsel %vm2776, %v2769, %v2773
    %v2778 = vand.u32 2147483647, %v2768
    %vm2779 = vcmp.eq.f32.partialorder %v2778, 8.507059e+37
    %v2780 = vand.u32 %v2768, 2147483648
    %v2781 = vor.u32 1.1754944e-38, %v2780
    %v2782 = vsel %vm2779, %v2781, %v2777
    %v2783 = vmul.f32 1.0, %v2782
    %v2784 = vtanh.pop %v2764
    %v2786 = vrot.slane %v2736, 6
    %v2788 = vmul.f32 %v2783, %v2786
    %2790 = vrot.lane.b32.xlu0 %v2784, 119
    %v2791 = vpop.permute.xlu0 %2790
    %v2793 = vmul.f32 %v2783, %v2791
    %2795 = vrot.lane.b32.xlu0 %v2793, 3
    %v2796 = vpop.permute.xlu0 %2795
    %v2798 = vadd.f32 %v2788, %v2796
    %v2799 = vtanh.pop %v2798
    %2801 = vrot.lane.b32.xlu0 %v2799, 3
    %v2802 = vpop.permute.xlu0 %2801
    %v2804 = vmul.f32 %v2783, %v2802
    %2806 = vset.pattern.permute.xlu0 6
    %2807 = vperm.xlu0 %2806, %v2804
    %v2808 = vpop.permute.xlu0 %2807
    %v2810 = vmul.f32 %v2808, %v2387
    %2811 = vset.pattern.permute.xlu0 7
    %2812 = vperm.xlu0 %2811, %v2804
    %v2813 = vpop.permute.xlu0 %2812
    %v2815 = vmul.f32 %v2813, %v2388
    %v2816 = vadd.f32 %v2810, %v2815
    %2817 = vset.pattern.permute.xlu0 8
    %2818 = vperm.xlu0 %2817, %v2804
    %v2819 = vpop.permute.xlu0 %2818
    %v2821 = vmul.f32 %v2819, %v2389
    %v2822 = vadd.f32 %v2816, %v2821
    %v2824 = vrot.slane %v2822, 6
    %v2826 = vadd.f32 %v2384, %v2824
    %v2827 = vxor.u32 %v2826, 2147483648
    %v2828 = vmul.f32 %v2827, 1.442695
    %v2829 = vpow.pop %v2828
    %v2830 = vadd.f32 %v2829, 1.0
    %v2831 = vrcp.pop %v2830
    %v2832 = vmul.f32 %v2830, %v2831
    %v2833 = vsub.f32 1.0, %v2832
    %v2834 = vmul.f32 %v2831, %v2833
    %v2835 = vadd.f32 %v2831, %v2834
    %vm2836 = vweird.f32 %v2830
    %vm2837 = vweird.f32 %v2831
    %vm2838 = vmor %vm2836, %vm2837
    %v2839 = vsel %vm2838, %v2831, %v2835
    %v2840 = vand.u32 2147483647, %v2830
    %vm2841 = vcmp.eq.f32.partialorder %v2840, 8.507059e+37
    %v2842 = vand.u32 %v2830, 2147483648
    %v2843 = vor.u32 1.1754944e-38, %v2842
    %v2844 = vsel %vm2841, %v2843, %v2839
    %v2845 = vmul.f32 1.0, %v2844
    %v2846 = vtanh.pop %v2826
    %v2848 = vrot.slane %v2798, 6
    %v2850 = vmul.f32 %v2845, %v2848
    %2852 = vrot.lane.b32.xlu0 %v2846, 119
    %v2853 = vpop.permute.xlu0 %2852
    %v2855 = vmul.f32 %v2845, %v2853
    %2857 = vrot.lane.b32.xlu0 %v2855, 3
    %v2858 = vpop.permute.xlu0 %2857
    %v2860 = vadd.f32 %v2850, %v2858
    %v2861 = vtanh.pop %v2860
    %2863 = vrot.lane.b32.xlu0 %v2861, 3
    %v2864 = vpop.permute.xlu0 %2863
    %v2866 = vmul.f32 %v2845, %v2864
    %v2867 = vld [vmem:[#allocation8] sm:$0x7]
    %v2868 = vperm.slane %v2867, 0
    %2870 = vset.pattern.permute.xlu0 6
    %2871 = vperm.xlu0 %2870, %v2866
    %v2872 = vpop.permute.xlu0 %2871
    %v2874 = vmul.f32 %v2872, %v2868
    %v2875 = vperm.slane %v2867, 1
    %2876 = vset.pattern.permute.xlu0 7
    %2877 = vperm.xlu0 %2876, %v2866
    %v2878 = vpop.permute.xlu0 %2877
    %v2880 = vmul.f32 %v2878, %v2875
    %v2881 = vadd.f32 %v2874, %v2880
    %v2882 = vperm.slane %v2867, 2
    %2883 = vset.pattern.permute.xlu0 8
    %2884 = vperm.xlu0 %2883, %v2866
    %v2885 = vpop.permute.xlu0 %2884
    %v2887 = vmul.f32 %v2885, %v2882
    %v2888 = vadd.f32 %v2881, %v2887
    %v2889 = vld [vmem:[%s5] sm:$0x1]
    %v2891 = vperm.slane %v2889, 0
    %v2893 = vadd.f32 %v2888, %v2891
    %v2894 = vld [vmem:[%s0 + $0xe] sm:$0x3]
    %v2895 = vadd.f32 %v2893, 1.0
    %v2897 = vrot.slane %v2894, 2
    %v2899 = vmul.f32 %v2895, %v2897
    %v2900 = vmax.f32 %v2899, 0.0
    %2901 = vst.msk [vmem:[#allocation9 - $0x6] sm:$0xc0] %vm374, %v2900
    // Predicated region
    $region38: #{tpu_custom_call.1} parent=1 // pred_check
      _
    $region39: #{tpu_custom_call.1} parent=1 // pred_check_branch
      %2903 = sbr.rel (0) target = $region41
    $region40: #{tpu_custom_call.1} parent=1 // pred_region
      %2905 = vsyncadd [#allocation5], 0
      %s2907 = sshll.u32 [#allocation9], 4
      %s2908 = int_to_ptr.vmem [resolvable:$true] %s2907
      %s2909 = sshll.u32 %s6, 4
      %s2910 = int_to_ptr.hbm [resolvable:$true] %s2909
      %2912 = dma.vmem_to_hbm [thread:$0]  %s2908, 32, %s2910, [#allocation5]
    $region41: #{tpu_custom_call.1} parent=1 // pred_fallthru
      _
    // Predicated region
    $region42: #{tpu_custom_call.1} parent=1 // pred_check
      _
    $region43: #{tpu_custom_call.1} parent=1 // pred_check_branch
      %2914 = sbr.rel (0) target = $region45
    $region44: #{tpu_custom_call.1} parent=1 // pred_region
      %2916 = dma.done [#allocation5], 32
    $region45: #{tpu_custom_call.1} parent=1 // pred_fallthru
      _
    %2917 = vsyncpa [#allocation4], 1
    %2918 = vsyncpa [#allocation7], 1
    %2919 = vsyncpa [#allocation5], 1

</llo_original>
